<compile_context>
chip_gen: v5e
topology: v5e:2x2
jax: 0.10.0
libtpu: 0.0.40
codegen_flags: <defaults>
</compile_context>

<pallas_src>
import numpy as np
import jax
import jax.numpy as jnp
from jax import lax
from jax.experimental import pallas as pl
from jax.experimental.pallas import tpu as pltpu

B = 2
C = 16            # channels
H = W = 16        # spatial
P = H * W         # flattened spatial (lane axis inside the kernel) = 256
KS = 3
GN_GROUPS = 8     # GroupNorm8
EPS = 1e-5
SE_RATIO = 0.25
MID = int(C * SE_RATIO)     # 4


# ----------------------------------------------------------------------------
# Glue: group selection, shuffle permutation, grouped->dense weight conversion
# ----------------------------------------------------------------------------
def _pick_groups(in_chs, out_chs):
    def _divisors(n):
        divs = []
        i = 1
        while i * i <= n:
            if n % i == 0:
                divs.append(i)
                if i != n // i:
                    divs.append(n // i)
            i += 1
        return sorted(divs)
    best_g1, best_g2, best_cost = 1, in_chs, float("inf")
    for d in _divisors(in_chs):
        g1, g2 = d, in_chs // d
        cost = in_chs * in_chs / g1 + in_chs * out_chs / g2
        if cost < best_cost:
            best_cost, best_g1, best_g2 = cost, g1, g2
    return best_g1, best_g2


def _shuffle_perm(chs, g1, g2):
    # einops 'b (g1 g2) ... -> b (g2 g1) ...'
    return np.arange(chs).reshape(g1, g2).T.reshape(-1)


def _dense_from_grouped(w, groups):
    """PyTorch grouped conv weight (Cout, Cin/g, kh, kw) -> dense (kh*kw, Cin, Cout)."""
    w = np.asarray(w)
    cout, cin_g, kh, kw = w.shape
    cin = cin_g * groups
    out_per_g = cout // groups
    wd = np.zeros((kh * kw, cin, cout), np.float32)
    for co in range(cout):
        g = co // out_per_g
        for r in range(cin_g):
            ci = g * cin_g + r
            for t in range(kh * kw):
                dy, dx = divmod(t, kw)
                wd[t, ci, co] = w[co, r, dy, dx]
    return wd


def _gelu_tanh(x):
    c = 0.7978845608028654  # sqrt(2/pi)
    return 0.5 * x * (1.0 + jnp.tanh(c * (x + 0.044715 * x * x * x)))


# ----------------------------------------------------------------------------
# Pallas kernel: one full residual block per batch element (grid = (B,))
# ----------------------------------------------------------------------------
def resblock_kernel(x_ref, mask_ref,
                    w1a_ref, w1b_ref, w2a_ref, w2b_ref,
                    gavg_ref, gn1g_ref, gn1b_ref, gn2g_ref, gn2b_ref,
                    wred_ref, bred_ref, wexp_ref, bexp_ref,
                    o_ref):
    f32 = jnp.float32

    def conv3x3(y, w_ref):
        # y: (C, P) channel-major activation in vregs.
        # w_ref: (9, Cout, Cin) per-tap dense weights (shuffle already folded).
        # Centre tap: no shift, no mask.
        acc = jnp.dot(w_ref[4], y, preferred_element_type=f32)
        for t in (0, 1, 2, 3, 5, 6, 7, 8):
            dy, dx = divmod(t, 3)
            s = (dy - 1) * W + (dx - 1)                 # flat spatial shift
            # tap[:, p] = y[:, (p + s) mod P]  (XLU lane rotation, no VMEM traffic)
            tap = pltpu.roll(y, shift=(-s) % P, axis=1)
            # per-tap 0/1 row mask zeroes both conv zero-padding and roll wrap
            tap = tap * mask_ref[pl.ds(t, 1), :]
            acc = acc + jnp.dot(w_ref[t], tap, preferred_element_type=f32)
        return acc

    def group_norm(y, gamma, beta):
        # var = E[y^2] - mean^2: both reductions / both tiny group-stat matmuls
        # are independent (no serial mean -> center -> var chain).
        sum_y = jnp.sum(y, axis=1, keepdims=True)            # (C, 1)
        sum_y2 = jnp.sum(y * y, axis=1, keepdims=True)       # (C, 1)
        mean = jnp.dot(gavg_ref[...], sum_y, preferred_element_type=f32)
        ex2 = jnp.dot(gavg_ref[...], sum_y2, preferred_element_type=f32)
        var = ex2 - mean * mean
        return (y - mean) * (lax.rsqrt(var + EPS) * gamma) + beta

    x0 = x_ref[0].astype(f32)                                # (C, P)

    # FactorizedConvND #1 (channel shuffle folded into w1b) + GN + GELU(tanh)
    y = conv3x3(x0, w1a_ref)
    y = conv3x3(y, w1b_ref)
    y = group_norm(y, gn1g_ref[...], gn1b_ref[...])
    y = _gelu_tanh(y)

    # FactorizedConvND #2 + GN
    y = conv3x3(y, w2a_ref)
    y = conv3x3(y, w2b_ref)
    y = group_norm(y, gn2g_ref[...], gn2b_ref[...])

    # Squeeze-Excite (pairs of 1x1 factorized convs composed offline)
    s = jnp.sum(y, axis=1, keepdims=True) * (1.0 / float(P))   # (C, 1) pooled mean
    r = jnp.dot(wred_ref[...], s, preferred_element_type=f32) + bred_ref[...]
    r = _gelu_tanh(r)
    e = jnp.dot(wexp_ref[...], r, preferred_element_type=f32) + bexp_ref[...]
    e = 1.0 / (1.0 + jnp.exp(-e))                              # sigmoid
    y = y * e

    o_ref[0] = (y + x0).astype(o_ref.dtype)                    # residual add


def _full_spec(shape):
    zeros = (0,) * len(shape)
    return pl.BlockSpec(shape, lambda b, _z=zeros: _z)


def factorized_resblock_pallas(x_ncp, kernel_args):
    in_specs = [pl.BlockSpec((1, C, P), lambda b: (b, 0, 0))]
    in_specs += [_full_spec(a.shape) for a in kernel_args]
    return pl.pallas_call(
        resblock_kernel,
        out_shape=jax.ShapeDtypeStruct((B, C, P), jnp.float32),
        grid=(B,),
        in_specs=in_specs,
        out_specs=pl.BlockSpec((1, C, P), lambda b: (b, 0, 0)),
        compiler_params=pltpu.CompilerParams(
            dimension_semantics=("parallel",)),
    )(x_ncp, *kernel_args)


# ----------------------------------------------------------------------------
# Deterministic parameter construction (module __init__ shapes)
# ----------------------------------------------------------------------------
def make_params(key):
    keys = jax.random.split(key, 16)

    def nrm(k, shape, scale=0.1):
        return scale * jax.random.normal(k, shape, jnp.float32)

    bg1, bg2 = _pick_groups(C, C)        # (4, 4)
    rg1, rg2 = _pick_groups(C, MID)      # (8, 2)
    eg1, eg2 = _pick_groups(MID, C)      # (1, 4)

    p = {}
    # FactorizedConvND(dim=2, C, C, ks=3, bias=False): two grouped convs
    p["w_c1a"] = nrm(keys[0], (C, C // bg1, KS, KS))
    p["w_c1b"] = nrm(keys[1], (C, C // bg2, KS, KS))
    p["w_c2a"] = nrm(keys[2], (C, C // bg1, KS, KS))
    p["w_c2b"] = nrm(keys[3], (C, C // bg2, KS, KS))
    # GroupNorm affine params
    p["gn1_g"] = 1.0 + nrm(keys[4], (C,))
    p["gn1_b"] = nrm(keys[5], (C,))
    p["gn2_g"] = 1.0 + nrm(keys[6], (C,))
    p["gn2_b"] = nrm(keys[7], (C,))
    # SE reduce: FactorizedConvND(2, C, MID, 1, bias=True)
    p["w_r1"] = nrm(keys[8], (C, C // rg1, 1, 1))
    p["b_r1"] = nrm(keys[9], (C,))
    p["w_r2"] = nrm(keys[10], (MID, C // rg2, 1, 1))
    p["b_r2"] = nrm(keys[11], (MID,))
    # SE expand: FactorizedConvND(2, MID, C, 1, bias=True)
    p["w_e1"] = nrm(keys[12], (MID, MID // eg1, 1, 1))
    p["b_e1"] = nrm(keys[13], (MID,))
    p["w_e2"] = nrm(keys[14], (C, MID // eg2, 1, 1))
    p["b_e2"] = nrm(keys[15], (C,))
    p["groups"] = dict(block=(bg1, bg2), reduce=(rg1, rg2), expand=(eg1, eg2))
    return p


def kernel_params(p):
    bg1, bg2 = p["groups"]["block"]
    rg1, rg2 = p["groups"]["reduce"]
    eg1, eg2 = p["groups"]["expand"]

    pinv_b = np.argsort(_shuffle_perm(C, bg1, bg2))

    def conv_w9(w, groups, perm=None):
        wd = _dense_from_grouped(w, groups)            # (9, Cin, Cout)
        if perm is not None:
            wd = wd[:, perm, :]                        # fold the channel shuffle
        # per-tap dense (Cout, Cin) matrices
        return np.ascontiguousarray(np.transpose(wd, (0, 2, 1)))   # (9, Cout, Cin)

    w1a = conv_w9(p["w_c1a"], bg1)
    w1b = conv_w9(p["w_c1b"], bg2, pinv_b)
    w2a = conv_w9(p["w_c2a"], bg1)
    w2b = conv_w9(p["w_c2b"], bg2, pinv_b)

    # SE: compose each pair of 1x1 grouped convs (+shuffle +biases) exactly.
    pinv_r = np.argsort(_shuffle_perm(C, rg1, rg2))
    wr1 = _dense_from_grouped(p["w_r1"], rg1)[0]                   # (C, C)
    wr2 = _dense_from_grouped(p["w_r2"], rg2)[0][pinv_r, :]        # (C, MID)
    wred = np.ascontiguousarray((wr1 @ wr2).T)                     # (MID, C)
    bred = (np.asarray(p["b_r1"], np.float32) @ wr2
            + np.asarray(p["b_r2"], np.float32))[:, None]          # (MID, 1)

    pinv_e = np.argsort(_shuffle_perm(MID, eg1, eg2))
    we1 = _dense_from_grouped(p["w_e1"], eg1)[0]                   # (MID, MID)
    we2 = _dense_from_grouped(p["w_e2"], eg2)[0][pinv_e, :]        # (MID, C)
    wexp = np.ascontiguousarray((we1 @ we2).T)                     # (C, MID)
    bexp = (np.asarray(p["b_e1"], np.float32) @ we2
            + np.asarray(p["b_e2"], np.float32))[:, None]          # (C, 1)

    # within-group averaging matrix for GroupNorm8 statistics (includes 1/n)
    n = float((C // GN_GROUPS) * P)
    gavg = np.zeros((C, C), np.float32)
    for c in range(C):
        g = c // (C // GN_GROUPS)
        gavg[c, g * (C // GN_GROUPS):(g + 1) * (C // GN_GROUPS)] = 1.0 / n

    # per-tap validity mask over the flattened spatial index, ONE row per tap
    # (broadcast across the 16 channel sublanes in-kernel).  Covers both the
    # conv zero padding and the roll wrap-around (they coincide exactly).
    hh, ww = np.meshgrid(np.arange(H), np.arange(W), indexing="ij")
    ph, pw = hh.reshape(-1), ww.reshape(-1)
    mask = np.zeros((16, P), np.float32)                           # sublane-padded (9 used)
    for t in range(9):
        dy, dx = divmod(t, 3)
        ok = ((ph + dy - 1 >= 0) & (ph + dy - 1 < H) &
              (pw + dx - 1 >= 0) & (pw + dx - 1 < W)).astype(np.float32)
        mask[t, :] = ok

    def col(v):
        return jnp.asarray(np.asarray(v, np.float32)[:, None])

    return [
        jnp.asarray(mask),
        jnp.asarray(w1a), jnp.asarray(w1b), jnp.asarray(w2a), jnp.asarray(w2b),
        jnp.asarray(gavg),
        col(p["gn1_g"]), col(p["gn1_b"]), col(p["gn2_g"]), col(p["gn2_b"]),
        jnp.asarray(wred), jnp.asarray(bred), jnp.asarray(wexp), jnp.asarray(bexp),
    ]


# ----------------------------------------------------------------------------
# Pure-JAX reference (mirrors the PyTorch module, NCHW)
# ----------------------------------------------------------------------------
def reference_forward(x_nchw, p):
    def gconv(x, w, groups, bias=None, pad=0):
        y = lax.conv_general_dilated(
            x, w, (1, 1), [(pad, pad), (pad, pad)],
            dimension_numbers=("NCHW", "OIHW", "NCHW"),
            feature_group_count=groups)
        if bias is not None:
            y = y + bias[None, :, None, None]
        return y

    def shuffle(x, g1, g2):
        b, c, h, w = x.shape
        return x.reshape(b, g1, g2, h, w).transpose(0, 2, 1, 3, 4).reshape(b, c, h, w)

    def fconv(x, wA, wB, g1, g2, bA=None, bB=None, pad=0):
        x = gconv(x, wA, g1, bA, pad)
        x = shuffle(x, g1, g2)
        return gconv(x, wB, g2, bB, pad)

    def gn(x, gamma, beta):
        b, c, h, w = x.shape
        xg = x.reshape(b, GN_GROUPS, c // GN_GROUPS, h, w)
        m = xg.mean(axis=(2, 3, 4), keepdims=True)
        v = ((xg - m) ** 2).mean(axis=(2, 3, 4), keepdims=True)
        xg = (xg - m) / jnp.sqrt(v + EPS)
        x = xg.reshape(b, c, h, w)
        return x * gamma[None, :, None, None] + beta[None, :, None, None]

    bg1, bg2 = p["groups"]["block"]
    rg1, rg2 = p["groups"]["reduce"]
    eg1, eg2 = p["groups"]["expand"]

    skip = x_nchw
    out = fconv(x_nchw, p["w_c1a"], p["w_c1b"], bg1, bg2, pad=(KS - 1) // 2)
    out = gn(out, p["gn1_g"], p["gn1_b"])
    out = _gelu_tanh(out)
    out = fconv(out, p["w_c2a"], p["w_c2b"], bg1, bg2, pad=(KS - 1) // 2)
    out = gn(out, p["gn2_g"], p["gn2_b"])
    s = out.mean(axis=(2, 3), keepdims=True)
    s = fconv(s, p["w_r1"], p["w_r2"], rg1, rg2, p["b_r1"], p["b_r2"], pad=0)
    s = _gelu_tanh(s)
    s = fconv(s, p["w_e1"], p["w_e2"], eg1, eg2, p["b_e1"], p["b_e2"], pad=0)
    s = jax.nn.sigmoid(s)
    out = out * s
    return out + skip


if __name__ == "__main__":
    key = jax.random.PRNGKey(0)
    kx, kp = jax.random.split(key)
    params = make_params(kp)
    x_nchw = jax.random.normal(kx, (B, C, H, W), jnp.float32)

    # NCHW -> (B, C, H*W) channel-major (a free reshape; lane-dense blocks)
    x_ncp = x_nchw.reshape(B, C, H * W)
    out = factorized_resblock_pallas(x_ncp, kernel_params(params))
    out = jax.block_until_ready(out)
    out_nchw = out.reshape(B, C, H, W)

    ref = reference_forward(x_nchw, params)
    err = float(jnp.max(jnp.abs(out_nchw - ref)))
    assert err < 1e-3, f"max abs err {err}"
    print("KERNEL_OK")
</pallas_src>

<mosaic_0001>
module attributes {stable_mosaic.version = 11 : i64} {
  func.func @resblock_kernel(%arg0: i32, %arg1: memref<1x16x256xf32, #tpu.memory_space<vmem>>, %arg2: memref<16x256xf32, #tpu.memory_space<vmem>>, %arg3: memref<9x16x16xf32, #tpu.memory_space<vmem>>, %arg4: memref<9x16x16xf32, #tpu.memory_space<vmem>>, %arg5: memref<9x16x16xf32, #tpu.memory_space<vmem>>, %arg6: memref<9x16x16xf32, #tpu.memory_space<vmem>>, %arg7: memref<16x16xf32, #tpu.memory_space<vmem>>, %arg8: memref<16x1xf32, #tpu.memory_space<vmem>>, %arg9: memref<16x1xf32, #tpu.memory_space<vmem>>, %arg10: memref<16x1xf32, #tpu.memory_space<vmem>>, %arg11: memref<16x1xf32, #tpu.memory_space<vmem>>, %arg12: memref<4x16xf32, #tpu.memory_space<vmem>>, %arg13: memref<4x1xf32, #tpu.memory_space<vmem>>, %arg14: memref<16x4xf32, #tpu.memory_space<vmem>>, %arg15: memref<16x1xf32, #tpu.memory_space<vmem>>, %arg16: memref<1x16x256xf32, #tpu.memory_space<vmem>>) attributes {dimension_semantics = [#tpu.dimension_semantics<parallel>], iteration_bounds = array<i64: 2>, scalar_prefetch = 0 : i64, scratch_operands = 0 : i64, tpu.core_type = #tpu.core_type<tc>, window_params = [{transform_indices = @transform_0, window_bounds = array<i64: 1, 16, 256>}, {pipeline_mode = #tpu.pipeline_mode<synchronous>, transform_indices = @transform_1, window_bounds = array<i64: 16, 256>}, {pipeline_mode = #tpu.pipeline_mode<synchronous>, transform_indices = @transform_2, window_bounds = array<i64: 9, 16, 16>}, {pipeline_mode = #tpu.pipeline_mode<synchronous>, transform_indices = @transform_3, window_bounds = array<i64: 9, 16, 16>}, {pipeline_mode = #tpu.pipeline_mode<synchronous>, transform_indices = @transform_4, window_bounds = array<i64: 9, 16, 16>}, {pipeline_mode = #tpu.pipeline_mode<synchronous>, transform_indices = @transform_5, window_bounds = array<i64: 9, 16, 16>}, {pipeline_mode = #tpu.pipeline_mode<synchronous>, transform_indices = @transform_6, window_bounds = array<i64: 16, 16>}, {pipeline_mode = #tpu.pipeline_mode<synchronous>, transform_indices = @transform_7, window_bounds = array<i64: 16, 1>}, {pipeline_mode = #tpu.pipeline_mode<synchronous>, transform_indices = @transform_8, window_bounds = array<i64: 16, 1>}, {pipeline_mode = #tpu.pipeline_mode<synchronous>, transform_indices = @transform_9, window_bounds = array<i64: 16, 1>}, {pipeline_mode = #tpu.pipeline_mode<synchronous>, transform_indices = @transform_10, window_bounds = array<i64: 16, 1>}, {pipeline_mode = #tpu.pipeline_mode<synchronous>, transform_indices = @transform_11, window_bounds = array<i64: 4, 16>}, {pipeline_mode = #tpu.pipeline_mode<synchronous>, transform_indices = @transform_12, window_bounds = array<i64: 4, 1>}, {pipeline_mode = #tpu.pipeline_mode<synchronous>, transform_indices = @transform_13, window_bounds = array<i64: 16, 4>}, {pipeline_mode = #tpu.pipeline_mode<synchronous>, transform_indices = @transform_14, window_bounds = array<i64: 16, 1>}, {transform_indices = @transform_15, window_bounds = array<i64: 1, 16, 256>}]} {
    %c0 = arith.constant 0 : index
    %c0_0 = arith.constant 0 : index
    %c0_1 = arith.constant 0 : index
    %0 = vector.load %arg1[%c0, %c0_0, %c0_1] : memref<1x16x256xf32, #tpu.memory_space<vmem>>, vector<1x16x256xf32>
    %1 = vector.shape_cast %0 : vector<1x16x256xf32> to vector<16x256xf32>
    %c4 = arith.constant 4 : index
    %c0_2 = arith.constant 0 : index
    %c0_3 = arith.constant 0 : index
    %2 = vector.load %arg3[%c4, %c0_2, %c0_3] : memref<9x16x16xf32, #tpu.memory_space<vmem>>, vector<1x16x16xf32>
    %3 = vector.shape_cast %2 : vector<1x16x16xf32> to vector<16x16xf32>
    %cst = arith.constant dense<0.000000e+00> : vector<16x256xf32>
    %4 = tpu.matmul %3, %1, %cst {dimension_numbers = #tpu.dot_dimension_numbers<[1], [0], [0], [1], [0, 0, 1, 1], [], []>} : vector<16x16xf32>, vector<16x256xf32>, vector<16x256xf32> -> vector<16x256xf32>
    %c17_i32 = arith.constant 17 : i32
    %5 = tpu.dynamic_rotate %1 by %c17_i32 dim 1 : vector<16x256xf32>, i32 -> vector<16x256xf32>
    %c0_4 = arith.constant 0 : index
    %c0_5 = arith.constant 0 : index
    %6 = vector.load %arg2[%c0_4, %c0_5] : memref<16x256xf32, #tpu.memory_space<vmem>>, vector<1x256xf32>
    %7 = vector.broadcast %6 : vector<1x256xf32> to vector<16x256xf32>
    %8 = arith.mulf %5, %7 : vector<16x256xf32>
    %c0_6 = arith.constant 0 : index
    %c0_7 = arith.constant 0 : index
    %c0_8 = arith.constant 0 : index
    %9 = vector.load %arg3[%c0_6, %c0_7, %c0_8] : memref<9x16x16xf32, #tpu.memory_space<vmem>>, vector<1x16x16xf32>
    %10 = vector.shape_cast %9 : vector<1x16x16xf32> to vector<16x16xf32>
    %cst_9 = arith.constant dense<0.000000e+00> : vector<16x256xf32>
    %11 = tpu.matmul %10, %8, %cst_9 {dimension_numbers = #tpu.dot_dimension_numbers<[1], [0], [0], [1], [0, 0, 1, 1], [], []>} : vector<16x16xf32>, vector<16x256xf32>, vector<16x256xf32> -> vector<16x256xf32>
    %12 = arith.addf %4, %11 : vector<16x256xf32>
    %c16_i32 = arith.constant 16 : i32
    %13 = tpu.dynamic_rotate %1 by %c16_i32 dim 1 : vector<16x256xf32>, i32 -> vector<16x256xf32>
    %c1 = arith.constant 1 : index
    %c0_10 = arith.constant 0 : index
    %14 = vector.load %arg2[%c1, %c0_10] : memref<16x256xf32, #tpu.memory_space<vmem>>, vector<1x256xf32>
    %15 = vector.broadcast %14 : vector<1x256xf32> to vector<16x256xf32>
    %16 = arith.mulf %13, %15 : vector<16x256xf32>
    %c1_11 = arith.constant 1 : index
    %c0_12 = arith.constant 0 : index
    %c0_13 = arith.constant 0 : index
    %17 = vector.load %arg3[%c1_11, %c0_12, %c0_13] : memref<9x16x16xf32, #tpu.memory_space<vmem>>, vector<1x16x16xf32>
    %18 = vector.shape_cast %17 : vector<1x16x16xf32> to vector<16x16xf32>
    %cst_14 = arith.constant dense<0.000000e+00> : vector<16x256xf32>
    %19 = tpu.matmul %18, %16, %cst_14 {dimension_numbers = #tpu.dot_dimension_numbers<[1], [0], [0], [1], [0, 0, 1, 1], [], []>} : vector<16x16xf32>, vector<16x256xf32>, vector<16x256xf32> -> vector<16x256xf32>
    %20 = arith.addf %12, %19 : vector<16x256xf32>
    %c15_i32 = arith.constant 15 : i32
    %21 = tpu.dynamic_rotate %1 by %c15_i32 dim 1 : vector<16x256xf32>, i32 -> vector<16x256xf32>
    %c2 = arith.constant 2 : index
    %c0_15 = arith.constant 0 : index
    %22 = vector.load %arg2[%c2, %c0_15] : memref<16x256xf32, #tpu.memory_space<vmem>>, vector<1x256xf32>
    %23 = vector.broadcast %22 : vector<1x256xf32> to vector<16x256xf32>
    %24 = arith.mulf %21, %23 : vector<16x256xf32>
    %c2_16 = arith.constant 2 : index
    %c0_17 = arith.constant 0 : index
    %c0_18 = arith.constant 0 : index
    %25 = vector.load %arg3[%c2_16, %c0_17, %c0_18] : memref<9x16x16xf32, #tpu.memory_space<vmem>>, vector<1x16x16xf32>
    %26 = vector.shape_cast %25 : vector<1x16x16xf32> to vector<16x16xf32>
    %cst_19 = arith.constant dense<0.000000e+00> : vector<16x256xf32>
    %27 = tpu.matmul %26, %24, %cst_19 {dimension_numbers = #tpu.dot_dimension_numbers<[1], [0], [0], [1], [0, 0, 1, 1], [], []>} : vector<16x16xf32>, vector<16x256xf32>, vector<16x256xf32> -> vector<16x256xf32>
    %28 = arith.addf %20, %27 : vector<16x256xf32>
    %c1_i32 = arith.constant 1 : i32
    %29 = tpu.dynamic_rotate %1 by %c1_i32 dim 1 : vector<16x256xf32>, i32 -> vector<16x256xf32>
    %c3 = arith.constant 3 : index
    %c0_20 = arith.constant 0 : index
    %30 = vector.load %arg2[%c3, %c0_20] : memref<16x256xf32, #tpu.memory_space<vmem>>, vector<1x256xf32>
    %31 = vector.broadcast %30 : vector<1x256xf32> to vector<16x256xf32>
    %32 = arith.mulf %29, %31 : vector<16x256xf32>
    %c3_21 = arith.constant 3 : index
    %c0_22 = arith.constant 0 : index
    %c0_23 = arith.constant 0 : index
    %33 = vector.load %arg3[%c3_21, %c0_22, %c0_23] : memref<9x16x16xf32, #tpu.memory_space<vmem>>, vector<1x16x16xf32>
    %34 = vector.shape_cast %33 : vector<1x16x16xf32> to vector<16x16xf32>
    %cst_24 = arith.constant dense<0.000000e+00> : vector<16x256xf32>
    %35 = tpu.matmul %34, %32, %cst_24 {dimension_numbers = #tpu.dot_dimension_numbers<[1], [0], [0], [1], [0, 0, 1, 1], [], []>} : vector<16x16xf32>, vector<16x256xf32>, vector<16x256xf32> -> vector<16x256xf32>
    %36 = arith.addf %28, %35 : vector<16x256xf32>
    %c255_i32 = arith.constant 255 : i32
    %37 = tpu.dynamic_rotate %1 by %c255_i32 dim 1 : vector<16x256xf32>, i32 -> vector<16x256xf32>
    %c5 = arith.constant 5 : index
    %c0_25 = arith.constant 0 : index
    %38 = vector.load %arg2[%c5, %c0_25] : memref<16x256xf32, #tpu.memory_space<vmem>>, vector<1x256xf32>
    %39 = vector.broadcast %38 : vector<1x256xf32> to vector<16x256xf32>
    %40 = arith.mulf %37, %39 : vector<16x256xf32>
    %c5_26 = arith.constant 5 : index
    %c0_27 = arith.constant 0 : index
    %c0_28 = arith.constant 0 : index
    %41 = vector.load %arg3[%c5_26, %c0_27, %c0_28] : memref<9x16x16xf32, #tpu.memory_space<vmem>>, vector<1x16x16xf32>
    %42 = vector.shape_cast %41 : vector<1x16x16xf32> to vector<16x16xf32>
    %cst_29 = arith.constant dense<0.000000e+00> : vector<16x256xf32>
    %43 = tpu.matmul %42, %40, %cst_29 {dimension_numbers = #tpu.dot_dimension_numbers<[1], [0], [0], [1], [0, 0, 1, 1], [], []>} : vector<16x16xf32>, vector<16x256xf32>, vector<16x256xf32> -> vector<16x256xf32>
    %44 = arith.addf %36, %43 : vector<16x256xf32>
    %c241_i32 = arith.constant 241 : i32
    %45 = tpu.dynamic_rotate %1 by %c241_i32 dim 1 : vector<16x256xf32>, i32 -> vector<16x256xf32>
    %c6 = arith.constant 6 : index
    %c0_30 = arith.constant 0 : index
    %46 = vector.load %arg2[%c6, %c0_30] : memref<16x256xf32, #tpu.memory_space<vmem>>, vector<1x256xf32>
    %47 = vector.broadcast %46 : vector<1x256xf32> to vector<16x256xf32>
    %48 = arith.mulf %45, %47 : vector<16x256xf32>
    %c6_31 = arith.constant 6 : index
    %c0_32 = arith.constant 0 : index
    %c0_33 = arith.constant 0 : index
    %49 = vector.load %arg3[%c6_31, %c0_32, %c0_33] : memref<9x16x16xf32, #tpu.memory_space<vmem>>, vector<1x16x16xf32>
    %50 = vector.shape_cast %49 : vector<1x16x16xf32> to vector<16x16xf32>
    %cst_34 = arith.constant dense<0.000000e+00> : vector<16x256xf32>
    %51 = tpu.matmul %50, %48, %cst_34 {dimension_numbers = #tpu.dot_dimension_numbers<[1], [0], [0], [1], [0, 0, 1, 1], [], []>} : vector<16x16xf32>, vector<16x256xf32>, vector<16x256xf32> -> vector<16x256xf32>
    %52 = arith.addf %44, %51 : vector<16x256xf32>
    %c240_i32 = arith.constant 240 : i32
    %53 = tpu.dynamic_rotate %1 by %c240_i32 dim 1 : vector<16x256xf32>, i32 -> vector<16x256xf32>
    %c7 = arith.constant 7 : index
    %c0_35 = arith.constant 0 : index
    %54 = vector.load %arg2[%c7, %c0_35] : memref<16x256xf32, #tpu.memory_space<vmem>>, vector<1x256xf32>
    %55 = vector.broadcast %54 : vector<1x256xf32> to vector<16x256xf32>
    %56 = arith.mulf %53, %55 : vector<16x256xf32>
    %c7_36 = arith.constant 7 : index
    %c0_37 = arith.constant 0 : index
    %c0_38 = arith.constant 0 : index
    %57 = vector.load %arg3[%c7_36, %c0_37, %c0_38] : memref<9x16x16xf32, #tpu.memory_space<vmem>>, vector<1x16x16xf32>
    %58 = vector.shape_cast %57 : vector<1x16x16xf32> to vector<16x16xf32>
    %cst_39 = arith.constant dense<0.000000e+00> : vector<16x256xf32>
    %59 = tpu.matmul %58, %56, %cst_39 {dimension_numbers = #tpu.dot_dimension_numbers<[1], [0], [0], [1], [0, 0, 1, 1], [], []>} : vector<16x16xf32>, vector<16x256xf32>, vector<16x256xf32> -> vector<16x256xf32>
    %60 = arith.addf %52, %59 : vector<16x256xf32>
    %c239_i32 = arith.constant 239 : i32
    %61 = tpu.dynamic_rotate %1 by %c239_i32 dim 1 : vector<16x256xf32>, i32 -> vector<16x256xf32>
    %c8 = arith.constant 8 : index
    %c0_40 = arith.constant 0 : index
    %62 = vector.load %arg2[%c8, %c0_40] : memref<16x256xf32, #tpu.memory_space<vmem>>, vector<1x256xf32>
    %63 = vector.broadcast %62 : vector<1x256xf32> to vector<16x256xf32>
    %64 = arith.mulf %61, %63 : vector<16x256xf32>
    %c8_41 = arith.constant 8 : index
    %c0_42 = arith.constant 0 : index
    %c0_43 = arith.constant 0 : index
    %65 = vector.load %arg3[%c8_41, %c0_42, %c0_43] : memref<9x16x16xf32, #tpu.memory_space<vmem>>, vector<1x16x16xf32>
    %66 = vector.shape_cast %65 : vector<1x16x16xf32> to vector<16x16xf32>
    %cst_44 = arith.constant dense<0.000000e+00> : vector<16x256xf32>
    %67 = tpu.matmul %66, %64, %cst_44 {dimension_numbers = #tpu.dot_dimension_numbers<[1], [0], [0], [1], [0, 0, 1, 1], [], []>} : vector<16x16xf32>, vector<16x256xf32>, vector<16x256xf32> -> vector<16x256xf32>
    %68 = arith.addf %60, %67 : vector<16x256xf32>
    %c4_45 = arith.constant 4 : index
    %c0_46 = arith.constant 0 : index
    %c0_47 = arith.constant 0 : index
    %69 = vector.load %arg4[%c4_45, %c0_46, %c0_47] : memref<9x16x16xf32, #tpu.memory_space<vmem>>, vector<1x16x16xf32>
    %70 = vector.shape_cast %69 : vector<1x16x16xf32> to vector<16x16xf32>
    %cst_48 = arith.constant dense<0.000000e+00> : vector<16x256xf32>
    %71 = tpu.matmul %70, %68, %cst_48 {dimension_numbers = #tpu.dot_dimension_numbers<[1], [0], [0], [1], [0, 0, 1, 1], [], []>} : vector<16x16xf32>, vector<16x256xf32>, vector<16x256xf32> -> vector<16x256xf32>
    %c17_i32_49 = arith.constant 17 : i32
    %72 = tpu.dynamic_rotate %68 by %c17_i32_49 dim 1 : vector<16x256xf32>, i32 -> vector<16x256xf32>
    %c0_50 = arith.constant 0 : index
    %c0_51 = arith.constant 0 : index
    %73 = vector.load %arg2[%c0_50, %c0_51] : memref<16x256xf32, #tpu.memory_space<vmem>>, vector<1x256xf32>
    %74 = vector.broadcast %73 : vector<1x256xf32> to vector<16x256xf32>
    %75 = arith.mulf %72, %74 : vector<16x256xf32>
    %c0_52 = arith.constant 0 : index
    %c0_53 = arith.constant 0 : index
    %c0_54 = arith.constant 0 : index
    %76 = vector.load %arg4[%c0_52, %c0_53, %c0_54] : memref<9x16x16xf32, #tpu.memory_space<vmem>>, vector<1x16x16xf32>
    %77 = vector.shape_cast %76 : vector<1x16x16xf32> to vector<16x16xf32>
    %cst_55 = arith.constant dense<0.000000e+00> : vector<16x256xf32>
    %78 = tpu.matmul %77, %75, %cst_55 {dimension_numbers = #tpu.dot_dimension_numbers<[1], [0], [0], [1], [0, 0, 1, 1], [], []>} : vector<16x16xf32>, vector<16x256xf32>, vector<16x256xf32> -> vector<16x256xf32>
    %79 = arith.addf %71, %78 : vector<16x256xf32>
    %c16_i32_56 = arith.constant 16 : i32
    %80 = tpu.dynamic_rotate %68 by %c16_i32_56 dim 1 : vector<16x256xf32>, i32 -> vector<16x256xf32>
    %c1_57 = arith.constant 1 : index
    %c0_58 = arith.constant 0 : index
    %81 = vector.load %arg2[%c1_57, %c0_58] : memref<16x256xf32, #tpu.memory_space<vmem>>, vector<1x256xf32>
    %82 = vector.broadcast %81 : vector<1x256xf32> to vector<16x256xf32>
    %83 = arith.mulf %80, %82 : vector<16x256xf32>
    %c1_59 = arith.constant 1 : index
    %c0_60 = arith.constant 0 : index
    %c0_61 = arith.constant 0 : index
    %84 = vector.load %arg4[%c1_59, %c0_60, %c0_61] : memref<9x16x16xf32, #tpu.memory_space<vmem>>, vector<1x16x16xf32>
    %85 = vector.shape_cast %84 : vector<1x16x16xf32> to vector<16x16xf32>
    %cst_62 = arith.constant dense<0.000000e+00> : vector<16x256xf32>
    %86 = tpu.matmul %85, %83, %cst_62 {dimension_numbers = #tpu.dot_dimension_numbers<[1], [0], [0], [1], [0, 0, 1, 1], [], []>} : vector<16x16xf32>, vector<16x256xf32>, vector<16x256xf32> -> vector<16x256xf32>
    %87 = arith.addf %79, %86 : vector<16x256xf32>
    %c15_i32_63 = arith.constant 15 : i32
    %88 = tpu.dynamic_rotate %68 by %c15_i32_63 dim 1 : vector<16x256xf32>, i32 -> vector<16x256xf32>
    %c2_64 = arith.constant 2 : index
    %c0_65 = arith.constant 0 : index
    %89 = vector.load %arg2[%c2_64, %c0_65] : memref<16x256xf32, #tpu.memory_space<vmem>>, vector<1x256xf32>
    %90 = vector.broadcast %89 : vector<1x256xf32> to vector<16x256xf32>
    %91 = arith.mulf %88, %90 : vector<16x256xf32>
    %c2_66 = arith.constant 2 : index
    %c0_67 = arith.constant 0 : index
    %c0_68 = arith.constant 0 : index
    %92 = vector.load %arg4[%c2_66, %c0_67, %c0_68] : memref<9x16x16xf32, #tpu.memory_space<vmem>>, vector<1x16x16xf32>
    %93 = vector.shape_cast %92 : vector<1x16x16xf32> to vector<16x16xf32>
    %cst_69 = arith.constant dense<0.000000e+00> : vector<16x256xf32>
    %94 = tpu.matmul %93, %91, %cst_69 {dimension_numbers = #tpu.dot_dimension_numbers<[1], [0], [0], [1], [0, 0, 1, 1], [], []>} : vector<16x16xf32>, vector<16x256xf32>, vector<16x256xf32> -> vector<16x256xf32>
    %95 = arith.addf %87, %94 : vector<16x256xf32>
    %c1_i32_70 = arith.constant 1 : i32
    %96 = tpu.dynamic_rotate %68 by %c1_i32_70 dim 1 : vector<16x256xf32>, i32 -> vector<16x256xf32>
    %c3_71 = arith.constant 3 : index
    %c0_72 = arith.constant 0 : index
    %97 = vector.load %arg2[%c3_71, %c0_72] : memref<16x256xf32, #tpu.memory_space<vmem>>, vector<1x256xf32>
    %98 = vector.broadcast %97 : vector<1x256xf32> to vector<16x256xf32>
    %99 = arith.mulf %96, %98 : vector<16x256xf32>
    %c3_73 = arith.constant 3 : index
    %c0_74 = arith.constant 0 : index
    %c0_75 = arith.constant 0 : index
    %100 = vector.load %arg4[%c3_73, %c0_74, %c0_75] : memref<9x16x16xf32, #tpu.memory_space<vmem>>, vector<1x16x16xf32>
    %101 = vector.shape_cast %100 : vector<1x16x16xf32> to vector<16x16xf32>
    %cst_76 = arith.constant dense<0.000000e+00> : vector<16x256xf32>
    %102 = tpu.matmul %101, %99, %cst_76 {dimension_numbers = #tpu.dot_dimension_numbers<[1], [0], [0], [1], [0, 0, 1, 1], [], []>} : vector<16x16xf32>, vector<16x256xf32>, vector<16x256xf32> -> vector<16x256xf32>
    %103 = arith.addf %95, %102 : vector<16x256xf32>
    %c255_i32_77 = arith.constant 255 : i32
    %104 = tpu.dynamic_rotate %68 by %c255_i32_77 dim 1 : vector<16x256xf32>, i32 -> vector<16x256xf32>
    %c5_78 = arith.constant 5 : index
    %c0_79 = arith.constant 0 : index
    %105 = vector.load %arg2[%c5_78, %c0_79] : memref<16x256xf32, #tpu.memory_space<vmem>>, vector<1x256xf32>
    %106 = vector.broadcast %105 : vector<1x256xf32> to vector<16x256xf32>
    %107 = arith.mulf %104, %106 : vector<16x256xf32>
    %c5_80 = arith.constant 5 : index
    %c0_81 = arith.constant 0 : index
    %c0_82 = arith.constant 0 : index
    %108 = vector.load %arg4[%c5_80, %c0_81, %c0_82] : memref<9x16x16xf32, #tpu.memory_space<vmem>>, vector<1x16x16xf32>
    %109 = vector.shape_cast %108 : vector<1x16x16xf32> to vector<16x16xf32>
    %cst_83 = arith.constant dense<0.000000e+00> : vector<16x256xf32>
    %110 = tpu.matmul %109, %107, %cst_83 {dimension_numbers = #tpu.dot_dimension_numbers<[1], [0], [0], [1], [0, 0, 1, 1], [], []>} : vector<16x16xf32>, vector<16x256xf32>, vector<16x256xf32> -> vector<16x256xf32>
    %111 = arith.addf %103, %110 : vector<16x256xf32>
    %c241_i32_84 = arith.constant 241 : i32
    %112 = tpu.dynamic_rotate %68 by %c241_i32_84 dim 1 : vector<16x256xf32>, i32 -> vector<16x256xf32>
    %c6_85 = arith.constant 6 : index
    %c0_86 = arith.constant 0 : index
    %113 = vector.load %arg2[%c6_85, %c0_86] : memref<16x256xf32, #tpu.memory_space<vmem>>, vector<1x256xf32>
    %114 = vector.broadcast %113 : vector<1x256xf32> to vector<16x256xf32>
    %115 = arith.mulf %112, %114 : vector<16x256xf32>
    %c6_87 = arith.constant 6 : index
    %c0_88 = arith.constant 0 : index
    %c0_89 = arith.constant 0 : index
    %116 = vector.load %arg4[%c6_87, %c0_88, %c0_89] : memref<9x16x16xf32, #tpu.memory_space<vmem>>, vector<1x16x16xf32>
    %117 = vector.shape_cast %116 : vector<1x16x16xf32> to vector<16x16xf32>
    %cst_90 = arith.constant dense<0.000000e+00> : vector<16x256xf32>
    %118 = tpu.matmul %117, %115, %cst_90 {dimension_numbers = #tpu.dot_dimension_numbers<[1], [0], [0], [1], [0, 0, 1, 1], [], []>} : vector<16x16xf32>, vector<16x256xf32>, vector<16x256xf32> -> vector<16x256xf32>
    %119 = arith.addf %111, %118 : vector<16x256xf32>
    %c240_i32_91 = arith.constant 240 : i32
    %120 = tpu.dynamic_rotate %68 by %c240_i32_91 dim 1 : vector<16x256xf32>, i32 -> vector<16x256xf32>
    %c7_92 = arith.constant 7 : index
    %c0_93 = arith.constant 0 : index
    %121 = vector.load %arg2[%c7_92, %c0_93] : memref<16x256xf32, #tpu.memory_space<vmem>>, vector<1x256xf32>
    %122 = vector.broadcast %121 : vector<1x256xf32> to vector<16x256xf32>
    %123 = arith.mulf %120, %122 : vector<16x256xf32>
    %c7_94 = arith.constant 7 : index
    %c0_95 = arith.constant 0 : index
    %c0_96 = arith.constant 0 : index
    %124 = vector.load %arg4[%c7_94, %c0_95, %c0_96] : memref<9x16x16xf32, #tpu.memory_space<vmem>>, vector<1x16x16xf32>
    %125 = vector.shape_cast %124 : vector<1x16x16xf32> to vector<16x16xf32>
    %cst_97 = arith.constant dense<0.000000e+00> : vector<16x256xf32>
    %126 = tpu.matmul %125, %123, %cst_97 {dimension_numbers = #tpu.dot_dimension_numbers<[1], [0], [0], [1], [0, 0, 1, 1], [], []>} : vector<16x16xf32>, vector<16x256xf32>, vector<16x256xf32> -> vector<16x256xf32>
    %127 = arith.addf %119, %126 : vector<16x256xf32>
    %c239_i32_98 = arith.constant 239 : i32
    %128 = tpu.dynamic_rotate %68 by %c239_i32_98 dim 1 : vector<16x256xf32>, i32 -> vector<16x256xf32>
    %c8_99 = arith.constant 8 : index
    %c0_100 = arith.constant 0 : index
    %129 = vector.load %arg2[%c8_99, %c0_100] : memref<16x256xf32, #tpu.memory_space<vmem>>, vector<1x256xf32>
    %130 = vector.broadcast %129 : vector<1x256xf32> to vector<16x256xf32>
    %131 = arith.mulf %128, %130 : vector<16x256xf32>
    %c8_101 = arith.constant 8 : index
    %c0_102 = arith.constant 0 : index
    %c0_103 = arith.constant 0 : index
    %132 = vector.load %arg4[%c8_101, %c0_102, %c0_103] : memref<9x16x16xf32, #tpu.memory_space<vmem>>, vector<1x16x16xf32>
    %133 = vector.shape_cast %132 : vector<1x16x16xf32> to vector<16x16xf32>
    %cst_104 = arith.constant dense<0.000000e+00> : vector<16x256xf32>
    %134 = tpu.matmul %133, %131, %cst_104 {dimension_numbers = #tpu.dot_dimension_numbers<[1], [0], [0], [1], [0, 0, 1, 1], [], []>} : vector<16x16xf32>, vector<16x256xf32>, vector<16x256xf32> -> vector<16x256xf32>
    %135 = arith.addf %127, %134 : vector<16x256xf32>
    %c0_105 = arith.constant 0 : index
    %c0_106 = arith.constant 0 : index
    %136 = vector.load %arg8[%c0_105, %c0_106] : memref<16x1xf32, #tpu.memory_space<vmem>>, vector<16x1xf32>
    %c0_107 = arith.constant 0 : index
    %c0_108 = arith.constant 0 : index
    %137 = vector.load %arg9[%c0_107, %c0_108] : memref<16x1xf32, #tpu.memory_space<vmem>>, vector<16x1xf32>
    %cst_109 = arith.constant dense<0.000000e+00> : vector<16xf32>
    %138 = vector.multi_reduction <add>, %135, %cst_109 [1] : vector<16x256xf32> to vector<16xf32>
    %139 = vector.shape_cast %138 : vector<16xf32> to vector<16x1xf32>
    %140 = arith.mulf %135, %135 : vector<16x256xf32>
    %cst_110 = arith.constant dense<0.000000e+00> : vector<16xf32>
    %141 = vector.multi_reduction <add>, %140, %cst_110 [1] : vector<16x256xf32> to vector<16xf32>
    %142 = vector.shape_cast %141 : vector<16xf32> to vector<16x1xf32>
    %c0_111 = arith.constant 0 : index
    %c0_112 = arith.constant 0 : index
    %143 = vector.load %arg7[%c0_111, %c0_112] : memref<16x16xf32, #tpu.memory_space<vmem>>, vector<16x16xf32>
    %cst_113 = arith.constant dense<0.000000e+00> : vector<16x1xf32>
    %144 = tpu.matmul %143, %139, %cst_113 {dimension_numbers = #tpu.dot_dimension_numbers<[1], [0], [0], [1], [0, 0, 1, 1], [], []>} : vector<16x16xf32>, vector<16x1xf32>, vector<16x1xf32> -> vector<16x1xf32>
    %c0_114 = arith.constant 0 : index
    %c0_115 = arith.constant 0 : index
    %145 = vector.load %arg7[%c0_114, %c0_115] : memref<16x16xf32, #tpu.memory_space<vmem>>, vector<16x16xf32>
    %cst_116 = arith.constant dense<0.000000e+00> : vector<16x1xf32>
    %146 = tpu.matmul %145, %142, %cst_116 {dimension_numbers = #tpu.dot_dimension_numbers<[1], [0], [0], [1], [0, 0, 1, 1], [], []>} : vector<16x16xf32>, vector<16x1xf32>, vector<16x1xf32> -> vector<16x1xf32>
    %147 = arith.mulf %144, %144 : vector<16x1xf32>
    %148 = arith.subf %146, %147 : vector<16x1xf32>
    %149 = vector.broadcast %144 : vector<16x1xf32> to vector<16x256xf32>
    %150 = arith.subf %135, %149 : vector<16x256xf32>
    %cst_117 = arith.constant 9.99999974E-6 : f32
    %151 = vector.broadcast %cst_117 : f32 to vector<16x1xf32>
    %152 = arith.addf %148, %151 : vector<16x1xf32>
    %153 = math.rsqrt %152 : vector<16x1xf32>
    %154 = arith.mulf %153, %136 : vector<16x1xf32>
    %155 = vector.broadcast %154 : vector<16x1xf32> to vector<16x256xf32>
    %156 = arith.mulf %150, %155 : vector<16x256xf32>
    %157 = vector.broadcast %137 : vector<16x1xf32> to vector<16x256xf32>
    %158 = arith.addf %156, %157 : vector<16x256xf32>
    %cst_118 = arith.constant 5.000000e-01 : f32
    %159 = vector.broadcast %cst_118 : f32 to vector<16x256xf32>
    %160 = arith.mulf %159, %158 : vector<16x256xf32>
    %cst_119 = arith.constant 4.471500e-02 : f32
    %161 = vector.broadcast %cst_119 : f32 to vector<16x256xf32>
    %162 = arith.mulf %161, %158 : vector<16x256xf32>
    %163 = arith.mulf %162, %158 : vector<16x256xf32>
    %164 = arith.mulf %163, %158 : vector<16x256xf32>
    %165 = arith.addf %158, %164 : vector<16x256xf32>
    %cst_120 = arith.constant 0.797884583 : f32
    %166 = vector.broadcast %cst_120 : f32 to vector<16x256xf32>
    %167 = arith.mulf %166, %165 : vector<16x256xf32>
    %168 = math.tanh %167 : vector<16x256xf32>
    %cst_121 = arith.constant 1.000000e+00 : f32
    %169 = vector.broadcast %cst_121 : f32 to vector<16x256xf32>
    %170 = arith.addf %169, %168 : vector<16x256xf32>
    %171 = arith.mulf %160, %170 : vector<16x256xf32>
    %c4_122 = arith.constant 4 : index
    %c0_123 = arith.constant 0 : index
    %c0_124 = arith.constant 0 : index
    %172 = vector.load %arg5[%c4_122, %c0_123, %c0_124] : memref<9x16x16xf32, #tpu.memory_space<vmem>>, vector<1x16x16xf32>
    %173 = vector.shape_cast %172 : vector<1x16x16xf32> to vector<16x16xf32>
    %cst_125 = arith.constant dense<0.000000e+00> : vector<16x256xf32>
    %174 = tpu.matmul %173, %171, %cst_125 {dimension_numbers = #tpu.dot_dimension_numbers<[1], [0], [0], [1], [0, 0, 1, 1], [], []>} : vector<16x16xf32>, vector<16x256xf32>, vector<16x256xf32> -> vector<16x256xf32>
    %c17_i32_126 = arith.constant 17 : i32
    %175 = tpu.dynamic_rotate %171 by %c17_i32_126 dim 1 : vector<16x256xf32>, i32 -> vector<16x256xf32>
    %c0_127 = arith.constant 0 : index
    %c0_128 = arith.constant 0 : index
    %176 = vector.load %arg2[%c0_127, %c0_128] : memref<16x256xf32, #tpu.memory_space<vmem>>, vector<1x256xf32>
    %177 = vector.broadcast %176 : vector<1x256xf32> to vector<16x256xf32>
    %178 = arith.mulf %175, %177 : vector<16x256xf32>
    %c0_129 = arith.constant 0 : index
    %c0_130 = arith.constant 0 : index
    %c0_131 = arith.constant 0 : index
    %179 = vector.load %arg5[%c0_129, %c0_130, %c0_131] : memref<9x16x16xf32, #tpu.memory_space<vmem>>, vector<1x16x16xf32>
    %180 = vector.shape_cast %179 : vector<1x16x16xf32> to vector<16x16xf32>
    %cst_132 = arith.constant dense<0.000000e+00> : vector<16x256xf32>
    %181 = tpu.matmul %180, %178, %cst_132 {dimension_numbers = #tpu.dot_dimension_numbers<[1], [0], [0], [1], [0, 0, 1, 1], [], []>} : vector<16x16xf32>, vector<16x256xf32>, vector<16x256xf32> -> vector<16x256xf32>
    %182 = arith.addf %174, %181 : vector<16x256xf32>
    %c16_i32_133 = arith.constant 16 : i32
    %183 = tpu.dynamic_rotate %171 by %c16_i32_133 dim 1 : vector<16x256xf32>, i32 -> vector<16x256xf32>
    %c1_134 = arith.constant 1 : index
    %c0_135 = arith.constant 0 : index
    %184 = vector.load %arg2[%c1_134, %c0_135] : memref<16x256xf32, #tpu.memory_space<vmem>>, vector<1x256xf32>
    %185 = vector.broadcast %184 : vector<1x256xf32> to vector<16x256xf32>
    %186 = arith.mulf %183, %185 : vector<16x256xf32>
    %c1_136 = arith.constant 1 : index
    %c0_137 = arith.constant 0 : index
    %c0_138 = arith.constant 0 : index
    %187 = vector.load %arg5[%c1_136, %c0_137, %c0_138] : memref<9x16x16xf32, #tpu.memory_space<vmem>>, vector<1x16x16xf32>
    %188 = vector.shape_cast %187 : vector<1x16x16xf32> to vector<16x16xf32>
    %cst_139 = arith.constant dense<0.000000e+00> : vector<16x256xf32>
    %189 = tpu.matmul %188, %186, %cst_139 {dimension_numbers = #tpu.dot_dimension_numbers<[1], [0], [0], [1], [0, 0, 1, 1], [], []>} : vector<16x16xf32>, vector<16x256xf32>, vector<16x256xf32> -> vector<16x256xf32>
    %190 = arith.addf %182, %189 : vector<16x256xf32>
    %c15_i32_140 = arith.constant 15 : i32
    %191 = tpu.dynamic_rotate %171 by %c15_i32_140 dim 1 : vector<16x256xf32>, i32 -> vector<16x256xf32>
    %c2_141 = arith.constant 2 : index
    %c0_142 = arith.constant 0 : index
    %192 = vector.load %arg2[%c2_141, %c0_142] : memref<16x256xf32, #tpu.memory_space<vmem>>, vector<1x256xf32>
    %193 = vector.broadcast %192 : vector<1x256xf32> to vector<16x256xf32>
    %194 = arith.mulf %191, %193 : vector<16x256xf32>
    %c2_143 = arith.constant 2 : index
    %c0_144 = arith.constant 0 : index
    %c0_145 = arith.constant 0 : index
    %195 = vector.load %arg5[%c2_143, %c0_144, %c0_145] : memref<9x16x16xf32, #tpu.memory_space<vmem>>, vector<1x16x16xf32>
    %196 = vector.shape_cast %195 : vector<1x16x16xf32> to vector<16x16xf32>
    %cst_146 = arith.constant dense<0.000000e+00> : vector<16x256xf32>
    %197 = tpu.matmul %196, %194, %cst_146 {dimension_numbers = #tpu.dot_dimension_numbers<[1], [0], [0], [1], [0, 0, 1, 1], [], []>} : vector<16x16xf32>, vector<16x256xf32>, vector<16x256xf32> -> vector<16x256xf32>
    %198 = arith.addf %190, %197 : vector<16x256xf32>
    %c1_i32_147 = arith.constant 1 : i32
    %199 = tpu.dynamic_rotate %171 by %c1_i32_147 dim 1 : vector<16x256xf32>, i32 -> vector<16x256xf32>
    %c3_148 = arith.constant 3 : index
    %c0_149 = arith.constant 0 : index
    %200 = vector.load %arg2[%c3_148, %c0_149] : memref<16x256xf32, #tpu.memory_space<vmem>>, vector<1x256xf32>
    %201 = vector.broadcast %200 : vector<1x256xf32> to vector<16x256xf32>
    %202 = arith.mulf %199, %201 : vector<16x256xf32>
    %c3_150 = arith.constant 3 : index
    %c0_151 = arith.constant 0 : index
    %c0_152 = arith.constant 0 : index
    %203 = vector.load %arg5[%c3_150, %c0_151, %c0_152] : memref<9x16x16xf32, #tpu.memory_space<vmem>>, vector<1x16x16xf32>
    %204 = vector.shape_cast %203 : vector<1x16x16xf32> to vector<16x16xf32>
    %cst_153 = arith.constant dense<0.000000e+00> : vector<16x256xf32>
    %205 = tpu.matmul %204, %202, %cst_153 {dimension_numbers = #tpu.dot_dimension_numbers<[1], [0], [0], [1], [0, 0, 1, 1], [], []>} : vector<16x16xf32>, vector<16x256xf32>, vector<16x256xf32> -> vector<16x256xf32>
    %206 = arith.addf %198, %205 : vector<16x256xf32>
    %c255_i32_154 = arith.constant 255 : i32
    %207 = tpu.dynamic_rotate %171 by %c255_i32_154 dim 1 : vector<16x256xf32>, i32 -> vector<16x256xf32>
    %c5_155 = arith.constant 5 : index
    %c0_156 = arith.constant 0 : index
    %208 = vector.load %arg2[%c5_155, %c0_156] : memref<16x256xf32, #tpu.memory_space<vmem>>, vector<1x256xf32>
    %209 = vector.broadcast %208 : vector<1x256xf32> to vector<16x256xf32>
    %210 = arith.mulf %207, %209 : vector<16x256xf32>
    %c5_157 = arith.constant 5 : index
    %c0_158 = arith.constant 0 : index
    %c0_159 = arith.constant 0 : index
    %211 = vector.load %arg5[%c5_157, %c0_158, %c0_159] : memref<9x16x16xf32, #tpu.memory_space<vmem>>, vector<1x16x16xf32>
    %212 = vector.shape_cast %211 : vector<1x16x16xf32> to vector<16x16xf32>
    %cst_160 = arith.constant dense<0.000000e+00> : vector<16x256xf32>
    %213 = tpu.matmul %212, %210, %cst_160 {dimension_numbers = #tpu.dot_dimension_numbers<[1], [0], [0], [1], [0, 0, 1, 1], [], []>} : vector<16x16xf32>, vector<16x256xf32>, vector<16x256xf32> -> vector<16x256xf32>
    %214 = arith.addf %206, %213 : vector<16x256xf32>
    %c241_i32_161 = arith.constant 241 : i32
    %215 = tpu.dynamic_rotate %171 by %c241_i32_161 dim 1 : vector<16x256xf32>, i32 -> vector<16x256xf32>
    %c6_162 = arith.constant 6 : index
    %c0_163 = arith.constant 0 : index
    %216 = vector.load %arg2[%c6_162, %c0_163] : memref<16x256xf32, #tpu.memory_space<vmem>>, vector<1x256xf32>
    %217 = vector.broadcast %216 : vector<1x256xf32> to vector<16x256xf32>
    %218 = arith.mulf %215, %217 : vector<16x256xf32>
    %c6_164 = arith.constant 6 : index
    %c0_165 = arith.constant 0 : index
    %c0_166 = arith.constant 0 : index
    %219 = vector.load %arg5[%c6_164, %c0_165, %c0_166] : memref<9x16x16xf32, #tpu.memory_space<vmem>>, vector<1x16x16xf32>
    %220 = vector.shape_cast %219 : vector<1x16x16xf32> to vector<16x16xf32>
    %cst_167 = arith.constant dense<0.000000e+00> : vector<16x256xf32>
    %221 = tpu.matmul %220, %218, %cst_167 {dimension_numbers = #tpu.dot_dimension_numbers<[1], [0], [0], [1], [0, 0, 1, 1], [], []>} : vector<16x16xf32>, vector<16x256xf32>, vector<16x256xf32> -> vector<16x256xf32>
    %222 = arith.addf %214, %221 : vector<16x256xf32>
    %c240_i32_168 = arith.constant 240 : i32
    %223 = tpu.dynamic_rotate %171 by %c240_i32_168 dim 1 : vector<16x256xf32>, i32 -> vector<16x256xf32>
    %c7_169 = arith.constant 7 : index
    %c0_170 = arith.constant 0 : index
    %224 = vector.load %arg2[%c7_169, %c0_170] : memref<16x256xf32, #tpu.memory_space<vmem>>, vector<1x256xf32>
    %225 = vector.broadcast %224 : vector<1x256xf32> to vector<16x256xf32>
    %226 = arith.mulf %223, %225 : vector<16x256xf32>
    %c7_171 = arith.constant 7 : index
    %c0_172 = arith.constant 0 : index
    %c0_173 = arith.constant 0 : index
    %227 = vector.load %arg5[%c7_171, %c0_172, %c0_173] : memref<9x16x16xf32, #tpu.memory_space<vmem>>, vector<1x16x16xf32>
    %228 = vector.shape_cast %227 : vector<1x16x16xf32> to vector<16x16xf32>
    %cst_174 = arith.constant dense<0.000000e+00> : vector<16x256xf32>
    %229 = tpu.matmul %228, %226, %cst_174 {dimension_numbers = #tpu.dot_dimension_numbers<[1], [0], [0], [1], [0, 0, 1, 1], [], []>} : vector<16x16xf32>, vector<16x256xf32>, vector<16x256xf32> -> vector<16x256xf32>
    %230 = arith.addf %222, %229 : vector<16x256xf32>
    %c239_i32_175 = arith.constant 239 : i32
    %231 = tpu.dynamic_rotate %171 by %c239_i32_175 dim 1 : vector<16x256xf32>, i32 -> vector<16x256xf32>
    %c8_176 = arith.constant 8 : index
    %c0_177 = arith.constant 0 : index
    %232 = vector.load %arg2[%c8_176, %c0_177] : memref<16x256xf32, #tpu.memory_space<vmem>>, vector<1x256xf32>
    %233 = vector.broadcast %232 : vector<1x256xf32> to vector<16x256xf32>
    %234 = arith.mulf %231, %233 : vector<16x256xf32>
    %c8_178 = arith.constant 8 : index
    %c0_179 = arith.constant 0 : index
    %c0_180 = arith.constant 0 : index
    %235 = vector.load %arg5[%c8_178, %c0_179, %c0_180] : memref<9x16x16xf32, #tpu.memory_space<vmem>>, vector<1x16x16xf32>
    %236 = vector.shape_cast %235 : vector<1x16x16xf32> to vector<16x16xf32>
    %cst_181 = arith.constant dense<0.000000e+00> : vector<16x256xf32>
    %237 = tpu.matmul %236, %234, %cst_181 {dimension_numbers = #tpu.dot_dimension_numbers<[1], [0], [0], [1], [0, 0, 1, 1], [], []>} : vector<16x16xf32>, vector<16x256xf32>, vector<16x256xf32> -> vector<16x256xf32>
    %238 = arith.addf %230, %237 : vector<16x256xf32>
    %c4_182 = arith.constant 4 : index
    %c0_183 = arith.constant 0 : index
    %c0_184 = arith.constant 0 : index
    %239 = vector.load %arg6[%c4_182, %c0_183, %c0_184] : memref<9x16x16xf32, #tpu.memory_space<vmem>>, vector<1x16x16xf32>
    %240 = vector.shape_cast %239 : vector<1x16x16xf32> to vector<16x16xf32>
    %cst_185 = arith.constant dense<0.000000e+00> : vector<16x256xf32>
    %241 = tpu.matmul %240, %238, %cst_185 {dimension_numbers = #tpu.dot_dimension_numbers<[1], [0], [0], [1], [0, 0, 1, 1], [], []>} : vector<16x16xf32>, vector<16x256xf32>, vector<16x256xf32> -> vector<16x256xf32>
    %c17_i32_186 = arith.constant 17 : i32
    %242 = tpu.dynamic_rotate %238 by %c17_i32_186 dim 1 : vector<16x256xf32>, i32 -> vector<16x256xf32>
    %c0_187 = arith.constant 0 : index
    %c0_188 = arith.constant 0 : index
    %243 = vector.load %arg2[%c0_187, %c0_188] : memref<16x256xf32, #tpu.memory_space<vmem>>, vector<1x256xf32>
    %244 = vector.broadcast %243 : vector<1x256xf32> to vector<16x256xf32>
    %245 = arith.mulf %242, %244 : vector<16x256xf32>
    %c0_189 = arith.constant 0 : index
    %c0_190 = arith.constant 0 : index
    %c0_191 = arith.constant 0 : index
    %246 = vector.load %arg6[%c0_189, %c0_190, %c0_191] : memref<9x16x16xf32, #tpu.memory_space<vmem>>, vector<1x16x16xf32>
    %247 = vector.shape_cast %246 : vector<1x16x16xf32> to vector<16x16xf32>
    %cst_192 = arith.constant dense<0.000000e+00> : vector<16x256xf32>
    %248 = tpu.matmul %247, %245, %cst_192 {dimension_numbers = #tpu.dot_dimension_numbers<[1], [0], [0], [1], [0, 0, 1, 1], [], []>} : vector<16x16xf32>, vector<16x256xf32>, vector<16x256xf32> -> vector<16x256xf32>
    %249 = arith.addf %241, %248 : vector<16x256xf32>
    %c16_i32_193 = arith.constant 16 : i32
    %250 = tpu.dynamic_rotate %238 by %c16_i32_193 dim 1 : vector<16x256xf32>, i32 -> vector<16x256xf32>
    %c1_194 = arith.constant 1 : index
    %c0_195 = arith.constant 0 : index
    %251 = vector.load %arg2[%c1_194, %c0_195] : memref<16x256xf32, #tpu.memory_space<vmem>>, vector<1x256xf32>
    %252 = vector.broadcast %251 : vector<1x256xf32> to vector<16x256xf32>
    %253 = arith.mulf %250, %252 : vector<16x256xf32>
    %c1_196 = arith.constant 1 : index
    %c0_197 = arith.constant 0 : index
    %c0_198 = arith.constant 0 : index
    %254 = vector.load %arg6[%c1_196, %c0_197, %c0_198] : memref<9x16x16xf32, #tpu.memory_space<vmem>>, vector<1x16x16xf32>
    %255 = vector.shape_cast %254 : vector<1x16x16xf32> to vector<16x16xf32>
    %cst_199 = arith.constant dense<0.000000e+00> : vector<16x256xf32>
    %256 = tpu.matmul %255, %253, %cst_199 {dimension_numbers = #tpu.dot_dimension_numbers<[1], [0], [0], [1], [0, 0, 1, 1], [], []>} : vector<16x16xf32>, vector<16x256xf32>, vector<16x256xf32> -> vector<16x256xf32>
    %257 = arith.addf %249, %256 : vector<16x256xf32>
    %c15_i32_200 = arith.constant 15 : i32
    %258 = tpu.dynamic_rotate %238 by %c15_i32_200 dim 1 : vector<16x256xf32>, i32 -> vector<16x256xf32>
    %c2_201 = arith.constant 2 : index
    %c0_202 = arith.constant 0 : index
    %259 = vector.load %arg2[%c2_201, %c0_202] : memref<16x256xf32, #tpu.memory_space<vmem>>, vector<1x256xf32>
    %260 = vector.broadcast %259 : vector<1x256xf32> to vector<16x256xf32>
    %261 = arith.mulf %258, %260 : vector<16x256xf32>
    %c2_203 = arith.constant 2 : index
    %c0_204 = arith.constant 0 : index
    %c0_205 = arith.constant 0 : index
    %262 = vector.load %arg6[%c2_203, %c0_204, %c0_205] : memref<9x16x16xf32, #tpu.memory_space<vmem>>, vector<1x16x16xf32>
    %263 = vector.shape_cast %262 : vector<1x16x16xf32> to vector<16x16xf32>
    %cst_206 = arith.constant dense<0.000000e+00> : vector<16x256xf32>
    %264 = tpu.matmul %263, %261, %cst_206 {dimension_numbers = #tpu.dot_dimension_numbers<[1], [0], [0], [1], [0, 0, 1, 1], [], []>} : vector<16x16xf32>, vector<16x256xf32>, vector<16x256xf32> -> vector<16x256xf32>
    %265 = arith.addf %257, %264 : vector<16x256xf32>
    %c1_i32_207 = arith.constant 1 : i32
    %266 = tpu.dynamic_rotate %238 by %c1_i32_207 dim 1 : vector<16x256xf32>, i32 -> vector<16x256xf32>
    %c3_208 = arith.constant 3 : index
    %c0_209 = arith.constant 0 : index
    %267 = vector.load %arg2[%c3_208, %c0_209] : memref<16x256xf32, #tpu.memory_space<vmem>>, vector<1x256xf32>
    %268 = vector.broadcast %267 : vector<1x256xf32> to vector<16x256xf32>
    %269 = arith.mulf %266, %268 : vector<16x256xf32>
    %c3_210 = arith.constant 3 : index
    %c0_211 = arith.constant 0 : index
    %c0_212 = arith.constant 0 : index
    %270 = vector.load %arg6[%c3_210, %c0_211, %c0_212] : memref<9x16x16xf32, #tpu.memory_space<vmem>>, vector<1x16x16xf32>
    %271 = vector.shape_cast %270 : vector<1x16x16xf32> to vector<16x16xf32>
    %cst_213 = arith.constant dense<0.000000e+00> : vector<16x256xf32>
    %272 = tpu.matmul %271, %269, %cst_213 {dimension_numbers = #tpu.dot_dimension_numbers<[1], [0], [0], [1], [0, 0, 1, 1], [], []>} : vector<16x16xf32>, vector<16x256xf32>, vector<16x256xf32> -> vector<16x256xf32>
    %273 = arith.addf %265, %272 : vector<16x256xf32>
    %c255_i32_214 = arith.constant 255 : i32
    %274 = tpu.dynamic_rotate %238 by %c255_i32_214 dim 1 : vector<16x256xf32>, i32 -> vector<16x256xf32>
    %c5_215 = arith.constant 5 : index
    %c0_216 = arith.constant 0 : index
    %275 = vector.load %arg2[%c5_215, %c0_216] : memref<16x256xf32, #tpu.memory_space<vmem>>, vector<1x256xf32>
    %276 = vector.broadcast %275 : vector<1x256xf32> to vector<16x256xf32>
    %277 = arith.mulf %274, %276 : vector<16x256xf32>
    %c5_217 = arith.constant 5 : index
    %c0_218 = arith.constant 0 : index
    %c0_219 = arith.constant 0 : index
    %278 = vector.load %arg6[%c5_217, %c0_218, %c0_219] : memref<9x16x16xf32, #tpu.memory_space<vmem>>, vector<1x16x16xf32>
    %279 = vector.shape_cast %278 : vector<1x16x16xf32> to vector<16x16xf32>
    %cst_220 = arith.constant dense<0.000000e+00> : vector<16x256xf32>
    %280 = tpu.matmul %279, %277, %cst_220 {dimension_numbers = #tpu.dot_dimension_numbers<[1], [0], [0], [1], [0, 0, 1, 1], [], []>} : vector<16x16xf32>, vector<16x256xf32>, vector<16x256xf32> -> vector<16x256xf32>
    %281 = arith.addf %273, %280 : vector<16x256xf32>
    %c241_i32_221 = arith.constant 241 : i32
    %282 = tpu.dynamic_rotate %238 by %c241_i32_221 dim 1 : vector<16x256xf32>, i32 -> vector<16x256xf32>
    %c6_222 = arith.constant 6 : index
    %c0_223 = arith.constant 0 : index
    %283 = vector.load %arg2[%c6_222, %c0_223] : memref<16x256xf32, #tpu.memory_space<vmem>>, vector<1x256xf32>
    %284 = vector.broadcast %283 : vector<1x256xf32> to vector<16x256xf32>
    %285 = arith.mulf %282, %284 : vector<16x256xf32>
    %c6_224 = arith.constant 6 : index
    %c0_225 = arith.constant 0 : index
    %c0_226 = arith.constant 0 : index
    %286 = vector.load %arg6[%c6_224, %c0_225, %c0_226] : memref<9x16x16xf32, #tpu.memory_space<vmem>>, vector<1x16x16xf32>
    %287 = vector.shape_cast %286 : vector<1x16x16xf32> to vector<16x16xf32>
    %cst_227 = arith.constant dense<0.000000e+00> : vector<16x256xf32>
    %288 = tpu.matmul %287, %285, %cst_227 {dimension_numbers = #tpu.dot_dimension_numbers<[1], [0], [0], [1], [0, 0, 1, 1], [], []>} : vector<16x16xf32>, vector<16x256xf32>, vector<16x256xf32> -> vector<16x256xf32>
    %289 = arith.addf %281, %288 : vector<16x256xf32>
    %c240_i32_228 = arith.constant 240 : i32
    %290 = tpu.dynamic_rotate %238 by %c240_i32_228 dim 1 : vector<16x256xf32>, i32 -> vector<16x256xf32>
    %c7_229 = arith.constant 7 : index
    %c0_230 = arith.constant 0 : index
    %291 = vector.load %arg2[%c7_229, %c0_230] : memref<16x256xf32, #tpu.memory_space<vmem>>, vector<1x256xf32>
    %292 = vector.broadcast %291 : vector<1x256xf32> to vector<16x256xf32>
    %293 = arith.mulf %290, %292 : vector<16x256xf32>
    %c7_231 = arith.constant 7 : index
    %c0_232 = arith.constant 0 : index
    %c0_233 = arith.constant 0 : index
    %294 = vector.load %arg6[%c7_231, %c0_232, %c0_233] : memref<9x16x16xf32, #tpu.memory_space<vmem>>, vector<1x16x16xf32>
    %295 = vector.shape_cast %294 : vector<1x16x16xf32> to vector<16x16xf32>
    %cst_234 = arith.constant dense<0.000000e+00> : vector<16x256xf32>
    %296 = tpu.matmul %295, %293, %cst_234 {dimension_numbers = #tpu.dot_dimension_numbers<[1], [0], [0], [1], [0, 0, 1, 1], [], []>} : vector<16x16xf32>, vector<16x256xf32>, vector<16x256xf32> -> vector<16x256xf32>
    %297 = arith.addf %289, %296 : vector<16x256xf32>
    %c239_i32_235 = arith.constant 239 : i32
    %298 = tpu.dynamic_rotate %238 by %c239_i32_235 dim 1 : vector<16x256xf32>, i32 -> vector<16x256xf32>
    %c8_236 = arith.constant 8 : index
    %c0_237 = arith.constant 0 : index
    %299 = vector.load %arg2[%c8_236, %c0_237] : memref<16x256xf32, #tpu.memory_space<vmem>>, vector<1x256xf32>
    %300 = vector.broadcast %299 : vector<1x256xf32> to vector<16x256xf32>
    %301 = arith.mulf %298, %300 : vector<16x256xf32>
    %c8_238 = arith.constant 8 : index
    %c0_239 = arith.constant 0 : index
    %c0_240 = arith.constant 0 : index
    %302 = vector.load %arg6[%c8_238, %c0_239, %c0_240] : memref<9x16x16xf32, #tpu.memory_space<vmem>>, vector<1x16x16xf32>
    %303 = vector.shape_cast %302 : vector<1x16x16xf32> to vector<16x16xf32>
    %cst_241 = arith.constant dense<0.000000e+00> : vector<16x256xf32>
    %304 = tpu.matmul %303, %301, %cst_241 {dimension_numbers = #tpu.dot_dimension_numbers<[1], [0], [0], [1], [0, 0, 1, 1], [], []>} : vector<16x16xf32>, vector<16x256xf32>, vector<16x256xf32> -> vector<16x256xf32>
    %305 = arith.addf %297, %304 : vector<16x256xf32>
    %c0_242 = arith.constant 0 : index
    %c0_243 = arith.constant 0 : index
    %306 = vector.load %arg10[%c0_242, %c0_243] : memref<16x1xf32, #tpu.memory_space<vmem>>, vector<16x1xf32>
    %c0_244 = arith.constant 0 : index
    %c0_245 = arith.constant 0 : index
    %307 = vector.load %arg11[%c0_244, %c0_245] : memref<16x1xf32, #tpu.memory_space<vmem>>, vector<16x1xf32>
    %cst_246 = arith.constant dense<0.000000e+00> : vector<16xf32>
    %308 = vector.multi_reduction <add>, %305, %cst_246 [1] : vector<16x256xf32> to vector<16xf32>
    %309 = vector.shape_cast %308 : vector<16xf32> to vector<16x1xf32>
    %310 = arith.mulf %305, %305 : vector<16x256xf32>
    %cst_247 = arith.constant dense<0.000000e+00> : vector<16xf32>
    %311 = vector.multi_reduction <add>, %310, %cst_247 [1] : vector<16x256xf32> to vector<16xf32>
    %312 = vector.shape_cast %311 : vector<16xf32> to vector<16x1xf32>
    %c0_248 = arith.constant 0 : index
    %c0_249 = arith.constant 0 : index
    %313 = vector.load %arg7[%c0_248, %c0_249] : memref<16x16xf32, #tpu.memory_space<vmem>>, vector<16x16xf32>
    %cst_250 = arith.constant dense<0.000000e+00> : vector<16x1xf32>
    %314 = tpu.matmul %313, %309, %cst_250 {dimension_numbers = #tpu.dot_dimension_numbers<[1], [0], [0], [1], [0, 0, 1, 1], [], []>} : vector<16x16xf32>, vector<16x1xf32>, vector<16x1xf32> -> vector<16x1xf32>
    %c0_251 = arith.constant 0 : index
    %c0_252 = arith.constant 0 : index
    %315 = vector.load %arg7[%c0_251, %c0_252] : memref<16x16xf32, #tpu.memory_space<vmem>>, vector<16x16xf32>
    %cst_253 = arith.constant dense<0.000000e+00> : vector<16x1xf32>
    %316 = tpu.matmul %315, %312, %cst_253 {dimension_numbers = #tpu.dot_dimension_numbers<[1], [0], [0], [1], [0, 0, 1, 1], [], []>} : vector<16x16xf32>, vector<16x1xf32>, vector<16x1xf32> -> vector<16x1xf32>
    %317 = arith.mulf %314, %314 : vector<16x1xf32>
    %318 = arith.subf %316, %317 : vector<16x1xf32>
    %319 = vector.broadcast %314 : vector<16x1xf32> to vector<16x256xf32>
    %320 = arith.subf %305, %319 : vector<16x256xf32>
    %cst_254 = arith.constant 9.99999974E-6 : f32
    %321 = vector.broadcast %cst_254 : f32 to vector<16x1xf32>
    %322 = arith.addf %318, %321 : vector<16x1xf32>
    %323 = math.rsqrt %322 : vector<16x1xf32>
    %324 = arith.mulf %323, %306 : vector<16x1xf32>
    %325 = vector.broadcast %324 : vector<16x1xf32> to vector<16x256xf32>
    %326 = arith.mulf %320, %325 : vector<16x256xf32>
    %327 = vector.broadcast %307 : vector<16x1xf32> to vector<16x256xf32>
    %328 = arith.addf %326, %327 : vector<16x256xf32>
    %cst_255 = arith.constant dense<0.000000e+00> : vector<16xf32>
    %329 = vector.multi_reduction <add>, %328, %cst_255 [1] : vector<16x256xf32> to vector<16xf32>
    %330 = vector.shape_cast %329 : vector<16xf32> to vector<16x1xf32>
    %cst_256 = arith.constant 3.906250e-03 : f32
    %331 = vector.broadcast %cst_256 : f32 to vector<16x1xf32>
    %332 = arith.mulf %330, %331 : vector<16x1xf32>
    %c0_257 = arith.constant 0 : index
    %c0_258 = arith.constant 0 : index
    %333 = vector.load %arg12[%c0_257, %c0_258] : memref<4x16xf32, #tpu.memory_space<vmem>>, vector<4x16xf32>
    %cst_259 = arith.constant dense<0.000000e+00> : vector<4x1xf32>
    %334 = tpu.matmul %333, %332, %cst_259 {dimension_numbers = #tpu.dot_dimension_numbers<[1], [0], [0], [1], [0, 0, 1, 1], [], []>} : vector<4x16xf32>, vector<16x1xf32>, vector<4x1xf32> -> vector<4x1xf32>
    %c0_260 = arith.constant 0 : index
    %c0_261 = arith.constant 0 : index
    %335 = vector.load %arg13[%c0_260, %c0_261] : memref<4x1xf32, #tpu.memory_space<vmem>>, vector<4x1xf32>
    %336 = arith.addf %334, %335 : vector<4x1xf32>
    %cst_262 = arith.constant 5.000000e-01 : f32
    %337 = vector.broadcast %cst_262 : f32 to vector<4x1xf32>
    %338 = arith.mulf %337, %336 : vector<4x1xf32>
    %cst_263 = arith.constant 4.471500e-02 : f32
    %339 = vector.broadcast %cst_263 : f32 to vector<4x1xf32>
    %340 = arith.mulf %339, %336 : vector<4x1xf32>
    %341 = arith.mulf %340, %336 : vector<4x1xf32>
    %342 = arith.mulf %341, %336 : vector<4x1xf32>
    %343 = arith.addf %336, %342 : vector<4x1xf32>
    %cst_264 = arith.constant 0.797884583 : f32
    %344 = vector.broadcast %cst_264 : f32 to vector<4x1xf32>
    %345 = arith.mulf %344, %343 : vector<4x1xf32>
    %346 = math.tanh %345 : vector<4x1xf32>
    %cst_265 = arith.constant 1.000000e+00 : f32
    %347 = vector.broadcast %cst_265 : f32 to vector<4x1xf32>
    %348 = arith.addf %347, %346 : vector<4x1xf32>
    %349 = arith.mulf %338, %348 : vector<4x1xf32>
    %c0_266 = arith.constant 0 : index
    %c0_267 = arith.constant 0 : index
    %350 = vector.load %arg14[%c0_266, %c0_267] : memref<16x4xf32, #tpu.memory_space<vmem>>, vector<16x4xf32>
    %cst_268 = arith.constant dense<0.000000e+00> : vector<16x1xf32>
    %351 = tpu.matmul %350, %349, %cst_268 {dimension_numbers = #tpu.dot_dimension_numbers<[1], [0], [0], [1], [0, 0, 1, 1], [], []>} : vector<16x4xf32>, vector<4x1xf32>, vector<16x1xf32> -> vector<16x1xf32>
    %c0_269 = arith.constant 0 : index
    %c0_270 = arith.constant 0 : index
    %352 = vector.load %arg15[%c0_269, %c0_270] : memref<16x1xf32, #tpu.memory_space<vmem>>, vector<16x1xf32>
    %353 = arith.addf %351, %352 : vector<16x1xf32>
    %cst_271 = arith.constant 0.000000e+00 : f32
    %354 = vector.broadcast %cst_271 : f32 to vector<16x1xf32>
    %355 = arith.subf %354, %353 : vector<16x1xf32>
    %356 = math.exp %355 : vector<16x1xf32>
    %cst_272 = arith.constant 1.000000e+00 : f32
    %357 = vector.broadcast %cst_272 : f32 to vector<16x1xf32>
    %358 = arith.addf %357, %356 : vector<16x1xf32>
    %cst_273 = arith.constant 1.000000e+00 : f32
    %359 = vector.broadcast %cst_273 : f32 to vector<16x1xf32>
    %360 = arith.divf %359, %358 : vector<16x1xf32>
    %361 = vector.broadcast %360 : vector<16x1xf32> to vector<16x256xf32>
    %362 = arith.mulf %328, %361 : vector<16x256xf32>
    %363 = arith.addf %362, %1 : vector<16x256xf32>
    %c0_274 = arith.constant 0 : index
    %c0_275 = arith.constant 0 : index
    %c0_276 = arith.constant 0 : index
    %364 = vector.load %arg16[%c0_274, %c0_275, %c0_276] : memref<1x16x256xf32, #tpu.memory_space<vmem>>, vector<1x16x256xf32>
    %365 = vector.shape_cast %364 : vector<1x16x256xf32> to vector<16x256xf32>
    %366 = vector.shape_cast %363 : vector<16x256xf32> to vector<1x16x256xf32>
    tpu.vector_store %arg16[%c0_274, %c0_275, %c0_276], %366 {strides = array<i32>} : memref<1x16x256xf32, #tpu.memory_space<vmem>>, vector<1x16x256xf32>,
    return
  }
  func.func @transform_0(%arg0: i32) -> (i32, i32, i32) {
    %c0_i32 = arith.constant 0 : i32
    %c0_i32_0 = arith.constant 0 : i32
    %c0_i32_1 = arith.constant 0 : i32
    return %arg0, %c0_i32, %c0_i32_0 : i32, i32, i32
  }
  func.func @transform_1(%arg0: i32) -> (i32, i32) {
    %c0_i32 = arith.constant 0 : i32
    %c0_i32_0 = arith.constant 0 : i32
    %c0_i32_1 = arith.constant 0 : i32
    return %c0_i32, %c0_i32_0 : i32, i32
  }
  func.func @transform_2(%arg0: i32) -> (i32, i32, i32) {
    %c0_i32 = arith.constant 0 : i32
    %c0_i32_0 = arith.constant 0 : i32
    %c0_i32_1 = arith.constant 0 : i32
    %c0_i32_2 = arith.constant 0 : i32
    return %c0_i32, %c0_i32_0, %c0_i32_1 : i32, i32, i32
  }
  func.func @transform_3(%arg0: i32) -> (i32, i32, i32) {
    %c0_i32 = arith.constant 0 : i32
    %c0_i32_0 = arith.constant 0 : i32
    %c0_i32_1 = arith.constant 0 : i32
    %c0_i32_2 = arith.constant 0 : i32
    return %c0_i32, %c0_i32_0, %c0_i32_1 : i32, i32, i32
  }
  func.func @transform_4(%arg0: i32) -> (i32, i32, i32) {
    %c0_i32 = arith.constant 0 : i32
    %c0_i32_0 = arith.constant 0 : i32
    %c0_i32_1 = arith.constant 0 : i32
    %c0_i32_2 = arith.constant 0 : i32
    return %c0_i32, %c0_i32_0, %c0_i32_1 : i32, i32, i32
  }
  func.func @transform_5(%arg0: i32) -> (i32, i32, i32) {
    %c0_i32 = arith.constant 0 : i32
    %c0_i32_0 = arith.constant 0 : i32
    %c0_i32_1 = arith.constant 0 : i32
    %c0_i32_2 = arith.constant 0 : i32
    return %c0_i32, %c0_i32_0, %c0_i32_1 : i32, i32, i32
  }
  func.func @transform_6(%arg0: i32) -> (i32, i32) {
    %c0_i32 = arith.constant 0 : i32
    %c0_i32_0 = arith.constant 0 : i32
    %c0_i32_1 = arith.constant 0 : i32
    return %c0_i32, %c0_i32_0 : i32, i32
  }
  func.func @transform_7(%arg0: i32) -> (i32, i32) {
    %c0_i32 = arith.constant 0 : i32
    %c0_i32_0 = arith.constant 0 : i32
    %c0_i32_1 = arith.constant 0 : i32
    return %c0_i32, %c0_i32_0 : i32, i32
  }
  func.func @transform_8(%arg0: i32) -> (i32, i32) {
    %c0_i32 = arith.constant 0 : i32
    %c0_i32_0 = arith.constant 0 : i32
    %c0_i32_1 = arith.constant 0 : i32
    return %c0_i32, %c0_i32_0 : i32, i32
  }
  func.func @transform_9(%arg0: i32) -> (i32, i32) {
    %c0_i32 = arith.constant 0 : i32
    %c0_i32_0 = arith.constant 0 : i32
    %c0_i32_1 = arith.constant 0 : i32
    return %c0_i32, %c0_i32_0 : i32, i32
  }
  func.func @transform_10(%arg0: i32) -> (i32, i32) {
    %c0_i32 = arith.constant 0 : i32
    %c0_i32_0 = arith.constant 0 : i32
    %c0_i32_1 = arith.constant 0 : i32
    return %c0_i32, %c0_i32_0 : i32, i32
  }
  func.func @transform_11(%arg0: i32) -> (i32, i32) {
    %c0_i32 = arith.constant 0 : i32
    %c0_i32_0 = arith.constant 0 : i32
    %c0_i32_1 = arith.constant 0 : i32
    return %c0_i32, %c0_i32_0 : i32, i32
  }
  func.func @transform_12(%arg0: i32) -> (i32, i32) {
    %c0_i32 = arith.constant 0 : i32
    %c0_i32_0 = arith.constant 0 : i32
    %c0_i32_1 = arith.constant 0 : i32
    return %c0_i32, %c0_i32_0 : i32, i32
  }
  func.func @transform_13(%arg0: i32) -> (i32, i32) {
    %c0_i32 = arith.constant 0 : i32
    %c0_i32_0 = arith.constant 0 : i32
    %c0_i32_1 = arith.constant 0 : i32
    return %c0_i32, %c0_i32_0 : i32, i32
  }
  func.func @transform_14(%arg0: i32) -> (i32, i32) {
    %c0_i32 = arith.constant 0 : i32
    %c0_i32_0 = arith.constant 0 : i32
    %c0_i32_1 = arith.constant 0 : i32
    return %c0_i32, %c0_i32_0 : i32, i32
  }
  func.func @transform_15(%arg0: i32) -> (i32, i32, i32) {
    %c0_i32 = arith.constant 0 : i32
    %c0_i32_0 = arith.constant 0 : i32
    %c0_i32_1 = arith.constant 0 : i32
    return %arg0, %c0_i32, %c0_i32_0 : i32, i32, i32
  }
}

</mosaic_0001>

<llo_original>
// kernel: tpu_custom_call.1
$region0: #{tpu_custom_call.1}
  #allocation0 [shape = 'u32[]', space=smem, size = 0x4, offset = 0x4, fixed_abs, tag = 'smem constant byte address 0x4 - core index']
  #allocation1 [shape = 'u32[72,128]{1,0:T(1,128)}', space=vmem, size = 0x9000, scoped, tag = 'internal scratch']
  %s0 = inlined_call_operand.hbm [shape: f32[2,16,256], index: 0, kind: input, shape index: {}]
  %s1 = inlined_call_operand.vmem [shape: f32[16,256], index: 1, kind: input, shape index: {}]
  %s2 = inlined_call_operand.hbm [shape: f32[9,16,16], index: 2, kind: input, shape index: {}]
  %s3 = inlined_call_operand.hbm [shape: f32[9,16,16], index: 3, kind: input, shape index: {}]
  %s4 = inlined_call_operand.hbm [shape: f32[9,16,16], index: 4, kind: input, shape index: {}]
  %s5 = inlined_call_operand.hbm [shape: f32[9,16,16], index: 5, kind: input, shape index: {}]
  %s6 = inlined_call_operand.vmem [shape: f32[16,16], index: 6, kind: input, shape index: {}]
  %s7 = inlined_call_operand.vmem [shape: f32[16,1], index: 7, kind: input, shape index: {}]
  %s8 = inlined_call_operand.vmem [shape: f32[16,1], index: 8, kind: input, shape index: {}]
  %s9 = inlined_call_operand.vmem [shape: f32[16,1], index: 9, kind: input, shape index: {}]
  %s10 = inlined_call_operand.vmem [shape: f32[16,1], index: 10, kind: input, shape index: {}]
  %s11 = inlined_call_operand.vmem [shape: f32[4,16], index: 11, kind: input, shape index: {}]
  %s12 = inlined_call_operand.vmem [shape: f32[4,1], index: 12, kind: input, shape index: {}]
  %s13 = inlined_call_operand.vmem [shape: f32[16,4], index: 13, kind: input, shape index: {}]
  %s14 = inlined_call_operand.vmem [shape: f32[16,1], index: 14, kind: input, shape index: {}]
  %s15 = inlined_call_operand.hbm [shape: f32[2,16,256], index: 15, kind: output, shape index: {}]
  %s16 = sld [smem:[#allocation0]]
  $region113: #{tpu_custom_call.1} parent=0
    _
  %s18 = ssub.s32 1, %s16
  %s19 = scalar_select 0, %s18, %s16
  $region1: #{tpu_custom_call.1} parent=0
    #allocation2 [shape = 'u8[32768]{0}', space=vmem, size = 0x8000, scoped, tag = 'input window, operand 0']
    #allocation3 [shape = 's32[2]{0}', space=sflag, size = 0x8, scoped, tag = 'scoped memory for tpu_custom_call.1']
    #allocation4 [shape = 's32[2]{0}', space=sflag, size = 0x8, scoped, tag = 'scoped memory for tpu_custom_call.1']
    #allocation5 [shape = 'u8[73728]{0}', space=vmem, size = 0x12000, scoped, tag = 'input window, operand 2, single buffered']
    #allocation6 [shape = 's32[1]{0}', space=sflag, size = 0x4, scoped, tag = 'scoped memory for tpu_custom_call.1']
    #allocation7 [shape = 'u8[73728]{0}', space=vmem, size = 0x12000, scoped, tag = 'input window, operand 3, single buffered']
    #allocation8 [shape = 'u8[73728]{0}', space=vmem, size = 0x12000, scoped, tag = 'input window, operand 4, single buffered']
    #allocation9 [shape = 's32[1]{0}', space=sflag, size = 0x4, scoped, tag = 'scoped memory for tpu_custom_call.1']
    #allocation10 [shape = 'u8[73728]{0}', space=vmem, size = 0x12000, scoped, tag = 'input window, operand 5, single buffered']
    #allocation11 [shape = 'u8[32768]{0}', space=vmem, size = 0x8000, scoped, tag = 'output window, operand 0']
    %20 = vsyncpa [#allocation3], 0
    %s21 = scalar_lea.sflag [#allocation3], 1
    %22 = vsyncpa %s21, 0
    %23 = vsyncpa [#allocation6], 0
    %24 = vsyncpa [#allocation9], 0
    %25 = vsyncpa [#allocation4], 0
    %s26 = scalar_lea.sflag [#allocation4], 1
    %27 = vsyncpa %s26, 0
    loop: start=0, step=1, limit=4
    $region2: #{tpu_custom_call.1} parent=1 // loop_pre_header
      _
    $region3: #{tpu_custom_call.1} parent=1 // loop_header
      %s29 = sphi 0, %s33
      %p30 = scmp.ge.s32.totalorder %s29, 4
      %s39 = sphi 0, %s41
      %s42 = sphi 0, %s39
      %s43 = sphi 0, %s42
      %s59 = sphi 0, %s43
      %s63 = sphi 0, %s63
      %s65 = sphi 0, %s63
      %s66 = sphi 0, %s65
      %s80 = sphi 0, %s66
      %s84 = sphi 0, %s84
      %s86 = sphi 0, %s84
      %s87 = sphi 0, %s86
      %s101 = sphi 0, %s87
      %s105 = sphi 0, %s105
      %s107 = sphi 0, %s105
      %s108 = sphi 0, %s107
      %s122 = sphi 0, %s108
      %s126 = sphi 0, %s126
      %s128 = sphi 0, %s126
      %s129 = sphi 0, %s128
      %s143 = sphi 0, %s129
      %s147 = sphi 0, %s147
      %s149 = sphi 0, %s147
      %s150 = sphi 0, %s149
      %s164 = sphi 0, %s150
      %s168 = sphi 0, %s168
      %s170 = sphi 0, %s168
      %s171 = sphi 0, %s170
      %s185 = sphi 0, %s171
      %s189 = sphi 0, %s189
      %s191 = sphi 0, %s189
      %s192 = sphi 0, %s191
      %s206 = sphi 0, %s192
      %s210 = sphi 0, %s210
      %s212 = sphi 0, %s210
      %s213 = sphi 0, %s212
      %s227 = sphi 0, %s213
      %s231 = sphi 0, %s231
      %s233 = sphi 0, %s231
      %s234 = sphi 0, %s233
      %s248 = sphi 0, %s234
      %s252 = sphi 0, %s252
      %s254 = sphi 0, %s252
      %s255 = sphi 0, %s254
      %s269 = sphi 0, %s255
      %s273 = sphi 0, %s273
      %s275 = sphi 0, %s273
      %s276 = sphi 0, %s275
      %s290 = sphi 0, %s276
      %s294 = sphi 0, %s294
      %s296 = sphi 0, %s294
      %s297 = sphi 0, %s296
      %s311 = sphi 0, %s297
      %s315 = sphi 0, %s315
      %s317 = sphi 0, %s315
      %s318 = sphi 0, %s317
      %s332 = sphi 0, %s318
      %s336 = sphi 0, %s336
      %s338 = sphi 0, %s336
      %s339 = sphi 0, %s338
      %s353 = sphi 0, %s339
      %s359 = sphi 0, %s361
      %s362 = sphi 0, %s359
      %s363 = sphi 0, %s362
      %s379 = sphi 0, %s363
    $region4: #{tpu_custom_call.1} parent=1 // loop_header_branch
      %32 = sbr.rel (%p30) target = $region8
    $region5: #{tpu_custom_call.1} parent=1 // loop_body
      %s34 = ssub.s32 %s29, 1
      %s35 = ssub.s32 %s29, 2
      %s36 = sadd.s32 %s29, 1
      %s37 = ssub.s32 %s29, %s36
      %p38 = scmp.eq.s32.totalorder %s37, 0
      %s40 = sadd.s32 %s39, 1
      %s41 = scalar_select %p38, %s39, %s40
      %p44 = pneg %p38
      %p45 = scmp.eq.s32.totalorder %s29, 1
      %p46 = por %p44, %p45
      %p47 = scmp.ne.s32.totalorder %s39, %s42
      %p48 = scmp.eq.s32.totalorder %s29, 0
      %p49 = por %p47, %p48
      %p50 = scmp.ne.s32.totalorder %s39, %s42
      %p51 = scmp.eq.s32.totalorder %s34, 1
      %p52 = por %p50, %p51
      %p53 = scmp.ne.s32.totalorder %s42, %s43
      %p54 = scmp.eq.s32.totalorder %s34, 0
      %p55 = por %p53, %p54
      %p56 = scmp.ne.s32.totalorder %s42, %s43
      %p57 = scmp.eq.s32.totalorder %s35, 1
      %p58 = por %p56, %p57
      %p60 = scmp.ne.s32.totalorder %s43, %s59
      %p61 = scmp.eq.s32.totalorder %s35, 0
      %p62 = por %p60, %p61
      %s64 = sadd.s32 %s63, 1
      %p67 = scmp.eq.s32.totalorder %s29, 1
      %p68 = scmp.ne.s32.totalorder %s63, %s65
      %p69 = scmp.eq.s32.totalorder %s29, 0
      %p70 = por %p68, %p69
      %p71 = scmp.ne.s32.totalorder %s63, %s65
      %p72 = scmp.eq.s32.totalorder %s34, 1
      %p73 = por %p71, %p72
      %p74 = scmp.ne.s32.totalorder %s65, %s66
      %p75 = scmp.eq.s32.totalorder %s34, 0
      %p76 = por %p74, %p75
      %p77 = scmp.ne.s32.totalorder %s65, %s66
      %p78 = scmp.eq.s32.totalorder %s35, 1
      %p79 = por %p77, %p78
      %p81 = scmp.ne.s32.totalorder %s66, %s80
      %p82 = scmp.eq.s32.totalorder %s35, 0
      %p83 = por %p81, %p82
      %s85 = sadd.s32 %s84, 1
      %p88 = scmp.eq.s32.totalorder %s29, 1
      %p89 = scmp.ne.s32.totalorder %s84, %s86
      %p90 = scmp.eq.s32.totalorder %s29, 0
      %p91 = por %p89, %p90
      %p92 = scmp.ne.s32.totalorder %s84, %s86
      %p93 = scmp.eq.s32.totalorder %s34, 1
      %p94 = por %p92, %p93
      %p95 = scmp.ne.s32.totalorder %s86, %s87
      %p96 = scmp.eq.s32.totalorder %s34, 0
      %p97 = por %p95, %p96
      %p98 = scmp.ne.s32.totalorder %s86, %s87
      %p99 = scmp.eq.s32.totalorder %s35, 1
      %p100 = por %p98, %p99
      %p102 = scmp.ne.s32.totalorder %s87, %s101
      %p103 = scmp.eq.s32.totalorder %s35, 0
      %p104 = por %p102, %p103
      %s106 = sadd.s32 %s105, 1
      %p109 = scmp.eq.s32.totalorder %s29, 1
      %p110 = scmp.ne.s32.totalorder %s105, %s107
      %p111 = scmp.eq.s32.totalorder %s29, 0
      %p112 = por %p110, %p111
      %p113 = scmp.ne.s32.totalorder %s105, %s107
      %p114 = scmp.eq.s32.totalorder %s34, 1
      %p115 = por %p113, %p114
      %p116 = scmp.ne.s32.totalorder %s107, %s108
      %p117 = scmp.eq.s32.totalorder %s34, 0
      %p118 = por %p116, %p117
      %p119 = scmp.ne.s32.totalorder %s107, %s108
      %p120 = scmp.eq.s32.totalorder %s35, 1
      %p121 = por %p119, %p120
      %p123 = scmp.ne.s32.totalorder %s108, %s122
      %p124 = scmp.eq.s32.totalorder %s35, 0
      %p125 = por %p123, %p124
      %s127 = sadd.s32 %s126, 1
      %p130 = scmp.eq.s32.totalorder %s29, 1
      %p131 = scmp.ne.s32.totalorder %s126, %s128
      %p132 = scmp.eq.s32.totalorder %s29, 0
      %p133 = por %p131, %p132
      %p134 = scmp.ne.s32.totalorder %s126, %s128
      %p135 = scmp.eq.s32.totalorder %s34, 1
      %p136 = por %p134, %p135
      %p137 = scmp.ne.s32.totalorder %s128, %s129
      %p138 = scmp.eq.s32.totalorder %s34, 0
      %p139 = por %p137, %p138
      %p140 = scmp.ne.s32.totalorder %s128, %s129
      %p141 = scmp.eq.s32.totalorder %s35, 1
      %p142 = por %p140, %p141
      %p144 = scmp.ne.s32.totalorder %s129, %s143
      %p145 = scmp.eq.s32.totalorder %s35, 0
      %p146 = por %p144, %p145
      %s148 = sadd.s32 %s147, 1
      %p151 = scmp.eq.s32.totalorder %s29, 1
      %p152 = scmp.ne.s32.totalorder %s147, %s149
      %p153 = scmp.eq.s32.totalorder %s29, 0
      %p154 = por %p152, %p153
      %p155 = scmp.ne.s32.totalorder %s147, %s149
      %p156 = scmp.eq.s32.totalorder %s34, 1
      %p157 = por %p155, %p156
      %p158 = scmp.ne.s32.totalorder %s149, %s150
      %p159 = scmp.eq.s32.totalorder %s34, 0
      %p160 = por %p158, %p159
      %p161 = scmp.ne.s32.totalorder %s149, %s150
      %p162 = scmp.eq.s32.totalorder %s35, 1
      %p163 = por %p161, %p162
      %p165 = scmp.ne.s32.totalorder %s150, %s164
      %p166 = scmp.eq.s32.totalorder %s35, 0
      %p167 = por %p165, %p166
      %s169 = sadd.s32 %s168, 1
      %p172 = scmp.eq.s32.totalorder %s29, 1
      %p173 = scmp.ne.s32.totalorder %s168, %s170
      %p174 = scmp.eq.s32.totalorder %s29, 0
      %p175 = por %p173, %p174
      %p176 = scmp.ne.s32.totalorder %s168, %s170
      %p177 = scmp.eq.s32.totalorder %s34, 1
      %p178 = por %p176, %p177
      %p179 = scmp.ne.s32.totalorder %s170, %s171
      %p180 = scmp.eq.s32.totalorder %s34, 0
      %p181 = por %p179, %p180
      %p182 = scmp.ne.s32.totalorder %s170, %s171
      %p183 = scmp.eq.s32.totalorder %s35, 1
      %p184 = por %p182, %p183
      %p186 = scmp.ne.s32.totalorder %s171, %s185
      %p187 = scmp.eq.s32.totalorder %s35, 0
      %p188 = por %p186, %p187
      %s190 = sadd.s32 %s189, 1
      %p193 = scmp.eq.s32.totalorder %s29, 1
      %p194 = scmp.ne.s32.totalorder %s189, %s191
      %p195 = scmp.eq.s32.totalorder %s29, 0
      %p196 = por %p194, %p195
      %p197 = scmp.ne.s32.totalorder %s189, %s191
      %p198 = scmp.eq.s32.totalorder %s34, 1
      %p199 = por %p197, %p198
      %p200 = scmp.ne.s32.totalorder %s191, %s192
      %p201 = scmp.eq.s32.totalorder %s34, 0
      %p202 = por %p200, %p201
      %p203 = scmp.ne.s32.totalorder %s191, %s192
      %p204 = scmp.eq.s32.totalorder %s35, 1
      %p205 = por %p203, %p204
      %p207 = scmp.ne.s32.totalorder %s192, %s206
      %p208 = scmp.eq.s32.totalorder %s35, 0
      %p209 = por %p207, %p208
      %s211 = sadd.s32 %s210, 1
      %p214 = scmp.eq.s32.totalorder %s29, 1
      %p215 = scmp.ne.s32.totalorder %s210, %s212
      %p216 = scmp.eq.s32.totalorder %s29, 0
      %p217 = por %p215, %p216
      %p218 = scmp.ne.s32.totalorder %s210, %s212
      %p219 = scmp.eq.s32.totalorder %s34, 1
      %p220 = por %p218, %p219
      %p221 = scmp.ne.s32.totalorder %s212, %s213
      %p222 = scmp.eq.s32.totalorder %s34, 0
      %p223 = por %p221, %p222
      %p224 = scmp.ne.s32.totalorder %s212, %s213
      %p225 = scmp.eq.s32.totalorder %s35, 1
      %p226 = por %p224, %p225
      %p228 = scmp.ne.s32.totalorder %s213, %s227
      %p229 = scmp.eq.s32.totalorder %s35, 0
      %p230 = por %p228, %p229
      %s232 = sadd.s32 %s231, 1
      %p235 = scmp.eq.s32.totalorder %s29, 1
      %p236 = scmp.ne.s32.totalorder %s231, %s233
      %p237 = scmp.eq.s32.totalorder %s29, 0
      %p238 = por %p236, %p237
      %p239 = scmp.ne.s32.totalorder %s231, %s233
      %p240 = scmp.eq.s32.totalorder %s34, 1
      %p241 = por %p239, %p240
      %p242 = scmp.ne.s32.totalorder %s233, %s234
      %p243 = scmp.eq.s32.totalorder %s34, 0
      %p244 = por %p242, %p243
      %p245 = scmp.ne.s32.totalorder %s233, %s234
      %p246 = scmp.eq.s32.totalorder %s35, 1
      %p247 = por %p245, %p246
      %p249 = scmp.ne.s32.totalorder %s234, %s248
      %p250 = scmp.eq.s32.totalorder %s35, 0
      %p251 = por %p249, %p250
      %s253 = sadd.s32 %s252, 1
      %p256 = scmp.eq.s32.totalorder %s29, 1
      %p257 = scmp.ne.s32.totalorder %s252, %s254
      %p258 = scmp.eq.s32.totalorder %s29, 0
      %p259 = por %p257, %p258
      %p260 = scmp.ne.s32.totalorder %s252, %s254
      %p261 = scmp.eq.s32.totalorder %s34, 1
      %p262 = por %p260, %p261
      %p263 = scmp.ne.s32.totalorder %s254, %s255
      %p264 = scmp.eq.s32.totalorder %s34, 0
      %p265 = por %p263, %p264
      %p266 = scmp.ne.s32.totalorder %s254, %s255
      %p267 = scmp.eq.s32.totalorder %s35, 1
      %p268 = por %p266, %p267
      %p270 = scmp.ne.s32.totalorder %s255, %s269
      %p271 = scmp.eq.s32.totalorder %s35, 0
      %p272 = por %p270, %p271
      %s274 = sadd.s32 %s273, 1
      %p277 = scmp.eq.s32.totalorder %s29, 1
      %p278 = scmp.ne.s32.totalorder %s273, %s275
      %p279 = scmp.eq.s32.totalorder %s29, 0
      %p280 = por %p278, %p279
      %p281 = scmp.ne.s32.totalorder %s273, %s275
      %p282 = scmp.eq.s32.totalorder %s34, 1
      %p283 = por %p281, %p282
      %p284 = scmp.ne.s32.totalorder %s275, %s276
      %p285 = scmp.eq.s32.totalorder %s34, 0
      %p286 = por %p284, %p285
      %p287 = scmp.ne.s32.totalorder %s275, %s276
      %p288 = scmp.eq.s32.totalorder %s35, 1
      %p289 = por %p287, %p288
      %p291 = scmp.ne.s32.totalorder %s276, %s290
      %p292 = scmp.eq.s32.totalorder %s35, 0
      %p293 = por %p291, %p292
      %s295 = sadd.s32 %s294, 1
      %p298 = scmp.eq.s32.totalorder %s29, 1
      %p299 = scmp.ne.s32.totalorder %s294, %s296
      %p300 = scmp.eq.s32.totalorder %s29, 0
      %p301 = por %p299, %p300
      %p302 = scmp.ne.s32.totalorder %s294, %s296
      %p303 = scmp.eq.s32.totalorder %s34, 1
      %p304 = por %p302, %p303
      %p305 = scmp.ne.s32.totalorder %s296, %s297
      %p306 = scmp.eq.s32.totalorder %s34, 0
      %p307 = por %p305, %p306
      %p308 = scmp.ne.s32.totalorder %s296, %s297
      %p309 = scmp.eq.s32.totalorder %s35, 1
      %p310 = por %p308, %p309
      %p312 = scmp.ne.s32.totalorder %s297, %s311
      %p313 = scmp.eq.s32.totalorder %s35, 0
      %p314 = por %p312, %p313
      %s316 = sadd.s32 %s315, 1
      %p319 = scmp.eq.s32.totalorder %s29, 1
      %p320 = scmp.ne.s32.totalorder %s315, %s317
      %p321 = scmp.eq.s32.totalorder %s29, 0
      %p322 = por %p320, %p321
      %p323 = scmp.ne.s32.totalorder %s315, %s317
      %p324 = scmp.eq.s32.totalorder %s34, 1
      %p325 = por %p323, %p324
      %p326 = scmp.ne.s32.totalorder %s317, %s318
      %p327 = scmp.eq.s32.totalorder %s34, 0
      %p328 = por %p326, %p327
      %p329 = scmp.ne.s32.totalorder %s317, %s318
      %p330 = scmp.eq.s32.totalorder %s35, 1
      %p331 = por %p329, %p330
      %p333 = scmp.ne.s32.totalorder %s318, %s332
      %p334 = scmp.eq.s32.totalorder %s35, 0
      %p335 = por %p333, %p334
      %s337 = sadd.s32 %s336, 1
      %p340 = scmp.eq.s32.totalorder %s29, 1
      %p341 = scmp.ne.s32.totalorder %s336, %s338
      %p342 = scmp.eq.s32.totalorder %s29, 0
      %p343 = por %p341, %p342
      %p344 = scmp.ne.s32.totalorder %s336, %s338
      %p345 = scmp.eq.s32.totalorder %s34, 1
      %p346 = por %p344, %p345
      %p347 = scmp.ne.s32.totalorder %s338, %s339
      %p348 = scmp.eq.s32.totalorder %s34, 0
      %p349 = por %p347, %p348
      %p350 = scmp.ne.s32.totalorder %s338, %s339
      %p351 = scmp.eq.s32.totalorder %s35, 1
      %p352 = por %p350, %p351
      %p354 = scmp.ne.s32.totalorder %s339, %s353
      %p355 = scmp.eq.s32.totalorder %s35, 0
      %p356 = por %p354, %p355
      %s357 = ssub.s32 %s29, %s36
      %p358 = scmp.eq.s32.totalorder %s357, 0
      %s360 = sadd.s32 %s359, 1
      %s361 = scalar_select %p358, %s359, %s360
      %p364 = pneg %p358
      %p365 = scmp.eq.s32.totalorder %s29, 1
      %p366 = por %p364, %p365
      %p367 = scmp.ne.s32.totalorder %s359, %s362
      %p368 = scmp.eq.s32.totalorder %s29, 0
      %p369 = por %p367, %p368
      %p370 = scmp.ne.s32.totalorder %s359, %s362
      %p371 = scmp.eq.s32.totalorder %s34, 1
      %p372 = por %p370, %p371
      %p373 = scmp.ne.s32.totalorder %s362, %s363
      %p374 = scmp.eq.s32.totalorder %s34, 0
      %p375 = por %p373, %p374
      %p376 = scmp.ne.s32.totalorder %s362, %s363
      %p377 = scmp.eq.s32.totalorder %s35, 1
      %p378 = por %p376, %p377
      %p380 = scmp.ne.s32.totalorder %s363, %s379
      %p381 = scmp.eq.s32.totalorder %s35, 0
      %p382 = por %p380, %p381
      %p383 = scmp.le.s32.totalorder 1, %s29
      %p384 = scmp.lt.s32.totalorder %s29, 3
      %p385 = pnand %p383, %p384
      %p386 = pneg %p385
      // Predicated region
      $region9: #{tpu_custom_call.1} parent=5 // pred_check
        _
      $region10: #{tpu_custom_call.1} parent=5 // pred_check_branch
        %388 = sbr.rel (%p385) target = $region12
      $region11: #{tpu_custom_call.1} parent=5 // pred_region
        %s389 = ssub.s32 %s29, 1
        // Predicated region
        $region13: #{tpu_custom_call.1} parent=11 // pred_check
          %p390 = pneg %p76
        $region14: #{tpu_custom_call.1} parent=11 // pred_check_branch
          %392 = sbr.rel (%p390) target = $region16
        $region15: #{tpu_custom_call.1} parent=11 // pred_region
          _
        $region16: #{tpu_custom_call.1} parent=11 // pred_fallthru
          _
        // Predicated region
        $region17: #{tpu_custom_call.1} parent=11 // pred_check
          %p393 = pneg %p97
        $region18: #{tpu_custom_call.1} parent=11 // pred_check_branch
          %395 = sbr.rel (%p393) target = $region20
        $region19: #{tpu_custom_call.1} parent=11 // pred_region
          %397 = vsyncadd [#allocation6], 0
          %s398 = sshll.u32 %s2, 4
          %s399 = int_to_ptr.hbm [resolvable:$true] %s398
          %s400 = sshll.u32 [#allocation5], 4
          %s401 = int_to_ptr.vmem [resolvable:$true] %s400
          %406 = dma.hbm_to_vmem [thread:$0]  %s399, 2304, %s401, [#allocation6], 128, 128, 8
        $region20: #{tpu_custom_call.1} parent=11 // pred_fallthru
          _
        // Predicated region
        $region21: #{tpu_custom_call.1} parent=11 // pred_check
          %p407 = pneg %p118
        $region22: #{tpu_custom_call.1} parent=11 // pred_check_branch
          %409 = sbr.rel (%p407) target = $region24
        $region23: #{tpu_custom_call.1} parent=11 // pred_region
          %411 = vsyncadd [#allocation6], 0
          %s412 = sshll.u32 %s3, 4
          %s413 = int_to_ptr.hbm [resolvable:$true] %s412
          %s414 = sshll.u32 [#allocation7], 4
          %s415 = int_to_ptr.vmem [resolvable:$true] %s414
          %420 = dma.hbm_to_vmem [thread:$0]  %s413, 2304, %s415, [#allocation6], 128, 128, 8
        $region24: #{tpu_custom_call.1} parent=11 // pred_fallthru
          _
        // Predicated region
        $region25: #{tpu_custom_call.1} parent=11 // pred_check
          %p421 = pneg %p139
        $region26: #{tpu_custom_call.1} parent=11 // pred_check_branch
          %423 = sbr.rel (%p421) target = $region28
        $region27: #{tpu_custom_call.1} parent=11 // pred_region
          %425 = vsyncadd [#allocation9], 0
          %s426 = sshll.u32 %s4, 4
          %s427 = int_to_ptr.hbm [resolvable:$true] %s426
          %s428 = sshll.u32 [#allocation8], 4
          %s429 = int_to_ptr.vmem [resolvable:$true] %s428
          %434 = dma.hbm_to_vmem [thread:$0]  %s427, 2304, %s429, [#allocation9], 128, 128, 8
        $region28: #{tpu_custom_call.1} parent=11 // pred_fallthru
          _
        // Predicated region
        $region29: #{tpu_custom_call.1} parent=11 // pred_check
          %p435 = pneg %p160
        $region30: #{tpu_custom_call.1} parent=11 // pred_check_branch
          %437 = sbr.rel (%p435) target = $region32
        $region31: #{tpu_custom_call.1} parent=11 // pred_region
          %439 = vsyncadd [#allocation9], 0
          %s440 = sshll.u32 %s5, 4
          %s441 = int_to_ptr.hbm [resolvable:$true] %s440
          %s442 = sshll.u32 [#allocation10], 4
          %s443 = int_to_ptr.vmem [resolvable:$true] %s442
          %448 = dma.hbm_to_vmem [thread:$0]  %s441, 2304, %s443, [#allocation9], 128, 128, 8
        $region32: #{tpu_custom_call.1} parent=11 // pred_fallthru
          _
        // Predicated region
        $region33: #{tpu_custom_call.1} parent=11 // pred_check
          %p449 = pneg %p181
        $region34: #{tpu_custom_call.1} parent=11 // pred_check_branch
          %451 = sbr.rel (%p449) target = $region36
        $region35: #{tpu_custom_call.1} parent=11 // pred_region
          _
        $region36: #{tpu_custom_call.1} parent=11 // pred_fallthru
          _
        // Predicated region
        $region37: #{tpu_custom_call.1} parent=11 // pred_check
          %p452 = pneg %p202
        $region38: #{tpu_custom_call.1} parent=11 // pred_check_branch
          %454 = sbr.rel (%p452) target = $region40
        $region39: #{tpu_custom_call.1} parent=11 // pred_region
          _
        $region40: #{tpu_custom_call.1} parent=11 // pred_fallthru
          _
        // Predicated region
        $region41: #{tpu_custom_call.1} parent=11 // pred_check
          %p455 = pneg %p223
        $region42: #{tpu_custom_call.1} parent=11 // pred_check_branch
          %457 = sbr.rel (%p455) target = $region44
        $region43: #{tpu_custom_call.1} parent=11 // pred_region
          _
        $region44: #{tpu_custom_call.1} parent=11 // pred_fallthru
          _
        // Predicated region
        $region45: #{tpu_custom_call.1} parent=11 // pred_check
          %p458 = pneg %p244
        $region46: #{tpu_custom_call.1} parent=11 // pred_check_branch
          %460 = sbr.rel (%p458) target = $region48
        $region47: #{tpu_custom_call.1} parent=11 // pred_region
          _
        $region48: #{tpu_custom_call.1} parent=11 // pred_fallthru
          _
        // Predicated region
        $region49: #{tpu_custom_call.1} parent=11 // pred_check
          %p461 = pneg %p265
        $region50: #{tpu_custom_call.1} parent=11 // pred_check_branch
          %463 = sbr.rel (%p461) target = $region52
        $region51: #{tpu_custom_call.1} parent=11 // pred_region
          _
        $region52: #{tpu_custom_call.1} parent=11 // pred_fallthru
          _
        // Predicated region
        $region53: #{tpu_custom_call.1} parent=11 // pred_check
          %p464 = pneg %p286
        $region54: #{tpu_custom_call.1} parent=11 // pred_check_branch
          %466 = sbr.rel (%p464) target = $region56
        $region55: #{tpu_custom_call.1} parent=11 // pred_region
          _
        $region56: #{tpu_custom_call.1} parent=11 // pred_fallthru
          _
        // Predicated region
        $region57: #{tpu_custom_call.1} parent=11 // pred_check
          %p467 = pneg %p307
        $region58: #{tpu_custom_call.1} parent=11 // pred_check_branch
          %469 = sbr.rel (%p467) target = $region60
        $region59: #{tpu_custom_call.1} parent=11 // pred_region
          _
        $region60: #{tpu_custom_call.1} parent=11 // pred_fallthru
          _
        // Predicated region
        $region61: #{tpu_custom_call.1} parent=11 // pred_check
          %p470 = pneg %p328
        $region62: #{tpu_custom_call.1} parent=11 // pred_check_branch
          %472 = sbr.rel (%p470) target = $region64
        $region63: #{tpu_custom_call.1} parent=11 // pred_region
          _
        $region64: #{tpu_custom_call.1} parent=11 // pred_fallthru
          _
        // Predicated region
        $region65: #{tpu_custom_call.1} parent=11 // pred_check
          %p473 = pneg %p349
        $region66: #{tpu_custom_call.1} parent=11 // pred_check_branch
          %475 = sbr.rel (%p473) target = $region68
        $region67: #{tpu_custom_call.1} parent=11 // pred_region
          _
        $region68: #{tpu_custom_call.1} parent=11 // pred_fallthru
          _
      $region12: #{tpu_custom_call.1} parent=5 // pred_fallthru
        _
      %p476 = scmp.lt.s32.totalorder %s29, 2
      // Predicated region
      $region69: #{tpu_custom_call.1} parent=5 // pred_check
        %p477 = pneg %p476
      $region70: #{tpu_custom_call.1} parent=5 // pred_check_branch
        %479 = sbr.rel (%p477) target = $region72
      $region71: #{tpu_custom_call.1} parent=5 // pred_region
        // Predicated region
        $region73: #{tpu_custom_call.1} parent=71 // pred_check
          %p480 = pneg %p49
        $region74: #{tpu_custom_call.1} parent=71 // pred_check_branch
          %482 = sbr.rel (%p480) target = $region76
        $region75: #{tpu_custom_call.1} parent=71 // pred_region
          %s483 = sand.u32 %s39, 1
          %s484 = scalar_lea.sflag [#allocation3], %s483
          %s485 = sand.u32 %s39, 1
          %s486 = smul.addr %s485, 32
          %s487 = scalar_lea.vmem [#allocation2], %s486
          %489 = vsyncadd %s484, 0
          %s490 = smul.addr %s29, 4
          %s491 = smul.addr %s490, 8
          %s492 = scalar_lea.hbm %s0, %s491
          %s493 = sshll.u32 %s492, 4
          %s494 = int_to_ptr.hbm [resolvable:$true] %s493
          %s495 = sshll.u32 %s487, 4
          %s496 = int_to_ptr.vmem [resolvable:$true] %s495
          %501 = dma.hbm_to_vmem [thread:$0]  %s494, 512, %s496, %s484, 256, 256, 16
        $region76: #{tpu_custom_call.1} parent=71 // pred_fallthru
          _
      $region72: #{tpu_custom_call.1} parent=5 // pred_fallthru
        _
      %p502 = scmp.le.s32.totalorder 1, %s29
      %p503 = scmp.lt.s32.totalorder %s29, 3
      %p504 = pnand %p502, %p503
      %p505 = pneg %p504
      // Predicated region
      $region77: #{tpu_custom_call.1} parent=5 // pred_check
        _
      $region78: #{tpu_custom_call.1} parent=5 // pred_check_branch
        %507 = sbr.rel (%p504) target = $region80
      $region79: #{tpu_custom_call.1} parent=5 // pred_region
        %s508 = ssub.s32 %s29, 1
        %s509 = sand.u32 %s42, 1
        %s510 = scalar_lea.sflag [#allocation3], %s509
        %s511 = sand.u32 %s42, 1
        %s512 = smul.addr %s511, 32
        %s513 = scalar_lea.vmem [#allocation2], %s512
        // Predicated region
        $region81: #{tpu_custom_call.1} parent=79 // pred_check
          %p514 = pneg %p55
        $region82: #{tpu_custom_call.1} parent=79 // pred_check_branch
          %516 = sbr.rel (%p514) target = $region84
        $region83: #{tpu_custom_call.1} parent=79 // pred_region
          %518 = dma.done %s510, 512
        $region84: #{tpu_custom_call.1} parent=79 // pred_fallthru
          _
        // Predicated region
        $region85: #{tpu_custom_call.1} parent=79 // pred_check
          %p519 = pneg %p97
        $region86: #{tpu_custom_call.1} parent=79 // pred_check_branch
          %521 = sbr.rel (%p519) target = $region88
        $region87: #{tpu_custom_call.1} parent=79 // pred_region
          %523 = dma.done [#allocation6], 2304
        $region88: #{tpu_custom_call.1} parent=79 // pred_fallthru
          _
        // Predicated region
        $region89: #{tpu_custom_call.1} parent=79 // pred_check
          %p524 = pneg %p118
        $region90: #{tpu_custom_call.1} parent=79 // pred_check_branch
          %526 = sbr.rel (%p524) target = $region92
        $region91: #{tpu_custom_call.1} parent=79 // pred_region
          %528 = dma.done [#allocation6], 2304
        $region92: #{tpu_custom_call.1} parent=79 // pred_fallthru
          _
        // Predicated region
        $region93: #{tpu_custom_call.1} parent=79 // pred_check
          %p529 = pneg %p139
        $region94: #{tpu_custom_call.1} parent=79 // pred_check_branch
          %531 = sbr.rel (%p529) target = $region96
        $region95: #{tpu_custom_call.1} parent=79 // pred_region
          %533 = dma.done [#allocation9], 2304
        $region96: #{tpu_custom_call.1} parent=79 // pred_fallthru
          _
        // Predicated region
        $region97: #{tpu_custom_call.1} parent=79 // pred_check
          %p534 = pneg %p160
        $region98: #{tpu_custom_call.1} parent=79 // pred_check_branch
          %536 = sbr.rel (%p534) target = $region100
        $region99: #{tpu_custom_call.1} parent=79 // pred_region
          %538 = dma.done [#allocation9], 2304
        $region100: #{tpu_custom_call.1} parent=79 // pred_fallthru
          _
        %s539 = sand.u32 %s42, 1
        %s540 = scalar_lea.sflag [#allocation3], %s539
        %s541 = sand.u32 %s42, 1
        %s542 = smul.addr %s541, 32
        %s543 = scalar_lea.vmem [#allocation2], %s542
        %p544 = pneg %p55
        %p545 = pneg %p52
        %p546 = pneg %p76
        %p547 = pneg %p73
        %p548 = pneg %p97
        %p549 = pneg %p94
        %p550 = pneg %p118
        %p551 = pneg %p115
        %p552 = pneg %p139
        %p553 = pneg %p136
        %p554 = pneg %p160
        %p555 = pneg %p157
        %p556 = pneg %p181
        %p557 = pneg %p178
        %p558 = pneg %p202
        %p559 = pneg %p199
        %p560 = pneg %p223
        %p561 = pneg %p220
        %p562 = pneg %p244
        %p563 = pneg %p241
        %p564 = pneg %p265
        %p565 = pneg %p262
        %p566 = pneg %p286
        %p567 = pneg %p283
        %p568 = pneg %p307
        %p569 = pneg %p304
        %p570 = pneg %p328
        %p571 = pneg %p325
        %p572 = pneg %p349
        %p573 = pneg %p346
        %p574 = pneg %p375
        %p575 = pneg %p372
        %s576 = sand.u32 %s362, 1
        %s577 = scalar_lea.sflag [#allocation4], %s576
        %s578 = sand.u32 %s362, 1
        %s579 = smul.addr %s578, 32
        %s580 = scalar_lea.vmem [#allocation11], %s579
        %v581 = vld [vmem:[%s513] sm:$0xff]
        %v582 = vld [vmem:[%s513 + $0x8] sm:$0xff]
        %v583 = vld [vmem:[%s513 + $0x10] sm:$0xff]
        %v584 = vld [vmem:[%s513 + $0x18] sm:$0xff]
        %s585 = scalar_lea.vmem [#allocation5], 64
        %v586 = vld [vmem:[%s585] sm:$0xff]
        %v587 = vld [vmem:[%s585 + $0x8] sm:$0xff]
        %588 = vrot.lane.b32.xlu0 %v581, 17
        %v589 = vpop.permute.xlu0 %588
        %590 = vrot.lane.b32.xlu0 %v583, 17
        %v591 = vpop.permute.xlu0 %590
        %592 = vrot.lane.b32.xlu0 %v582, 17
        %v593 = vpop.permute.xlu0 %592
        %594 = vrot.lane.b32.xlu0 %v584, 17
        %v595 = vpop.permute.xlu0 %594
        %v596 = vlaneseq
        %v597 = vand.u32 %v596, 127
        %vm598 = vcmp.lt.s32.totalorder %v597, 17
        %v599 = vsel %vm598, %v589, %v593
        %v600 = vsel %vm598, %v591, %v595
        %v601 = vsel %vm598, %v593, %v589
        %v602 = vsel %vm598, %v595, %v591
        %v603 = vld [vmem:[%s1] ss:$8 sm:$0x3]
        %v605 = vperm.slane %v603, 0
        %v606 = vperm.slane %v603, 1
        %v609 = vmul.f32 %v601, %v605
        %v610 = vmul.f32 %v599, %v606
        %v611 = vmul.f32 %v602, %v605
        %v612 = vmul.f32 %v600, %v606
        %v613 = vld [vmem:[#allocation5] sm:$0xff]
        %v614 = vld [vmem:[#allocation5 + $0x8] sm:$0xff]
        %vm615 = vcmask 130048
        %v617 = vsel %vm615, %v613, 0
        %v620 = vsel %vm615, %v614, 0
        %622 = vmatpush.msra.mxu0 0.0
        %623 = vmatpush.msra.mxu0 0.0
        %624 = vmatpush.msra.mxu0 0.0
        %625 = vmatpush.msra.mxu0 0.0
        %626 = vmatpush.msra.mxu0 0.0
        %627 = vmatpush.msra.mxu0 0.0
        %628 = vmatpush.msra.mxu0 0.0
        %629 = vmatpush.msra.mxu0 0.0
        %630 = vmatpush.msra.mxu0 0.0
        %631 = vmatpush.msra.mxu0 0.0
        %632 = vmatpush.msra.mxu0 0.0
        %633 = vmatpush.msra.mxu0 0.0
        %634 = vmatpush.msra.mxu0 0.0
        %635 = vmatpush.msra.mxu0 0.0
        %636 = vmatpush.msra.mxu0 %v611
        %637 = vmatpush.msra.mxu0 %v609
        %638 = vmatmul.f32.gmra.mxu0 %v617
        %v639 = vpop.f32.mrf.mxu0
        %v640 = vadd.f32 0.0, %v639
        %641 = vmatmul.f32.gmra.mxu0 %v620
        %v642 = vpop.f32.mrf.mxu0
        %v643 = vadd.f32 0.0, %v642
        %644 = vdwg.mxu0
        %645 = vmatpush.msra.mxu0 0.0
        %646 = vmatpush.msra.mxu0 0.0
        %647 = vmatpush.msra.mxu0 0.0
        %648 = vmatpush.msra.mxu0 0.0
        %649 = vmatpush.msra.mxu0 0.0
        %650 = vmatpush.msra.mxu0 0.0
        %651 = vmatpush.msra.mxu0 0.0
        %652 = vmatpush.msra.mxu0 0.0
        %653 = vmatpush.msra.mxu0 0.0
        %654 = vmatpush.msra.mxu0 0.0
        %655 = vmatpush.msra.mxu0 0.0
        %656 = vmatpush.msra.mxu0 0.0
        %657 = vmatpush.msra.mxu0 0.0
        %658 = vmatpush.msra.mxu0 0.0
        %659 = vmatpush.msra.mxu0 %v612
        %660 = vmatpush.msra.mxu0 %v610
        %661 = vmatmul.f32.gmra.mxu0 %v617
        %v662 = vpop.f32.mrf.mxu0
        %v663 = vadd.f32 0.0, %v662
        %664 = vmatmul.f32.gmra.mxu0 %v620
        %v665 = vpop.f32.mrf.mxu0
        %v666 = vadd.f32 0.0, %v665
        %667 = vdwg.mxu0
        %v669 = vsel %vm615, %v586, 0
        %v672 = vsel %vm615, %v587, 0
        %674 = vmatpush.msra.mxu0 0.0
        %675 = vmatpush.msra.mxu0 0.0
        %676 = vmatpush.msra.mxu0 0.0
        %677 = vmatpush.msra.mxu0 0.0
        %678 = vmatpush.msra.mxu0 0.0
        %679 = vmatpush.msra.mxu0 0.0
        %680 = vmatpush.msra.mxu0 0.0
        %681 = vmatpush.msra.mxu0 0.0
        %682 = vmatpush.msra.mxu0 0.0
        %683 = vmatpush.msra.mxu0 0.0
        %684 = vmatpush.msra.mxu0 0.0
        %685 = vmatpush.msra.mxu0 0.0
        %686 = vmatpush.msra.mxu0 0.0
        %687 = vmatpush.msra.mxu0 0.0
        %688 = vmatpush.msra.mxu0 %v583
        %689 = vmatpush.msra.mxu0 %v581
        %690 = vmatmul.f32.gmra.mxu0 %v669
        %v691 = vpop.f32.mrf.mxu0
        %v692 = vadd.f32 %v640, %v691
        %693 = vmatmul.f32.gmra.mxu0 %v672
        %v694 = vpop.f32.mrf.mxu0
        %v695 = vadd.f32 %v643, %v694
        %696 = vdwg.mxu0
        %697 = vmatpush.msra.mxu0 0.0
        %698 = vmatpush.msra.mxu0 0.0
        %699 = vmatpush.msra.mxu0 0.0
        %700 = vmatpush.msra.mxu0 0.0
        %701 = vmatpush.msra.mxu0 0.0
        %702 = vmatpush.msra.mxu0 0.0
        %703 = vmatpush.msra.mxu0 0.0
        %704 = vmatpush.msra.mxu0 0.0
        %705 = vmatpush.msra.mxu0 0.0
        %706 = vmatpush.msra.mxu0 0.0
        %707 = vmatpush.msra.mxu0 0.0
        %708 = vmatpush.msra.mxu0 0.0
        %709 = vmatpush.msra.mxu0 0.0
        %710 = vmatpush.msra.mxu0 0.0
        %711 = vmatpush.msra.mxu0 %v584
        %712 = vmatpush.msra.mxu0 %v582
        %713 = vmatmul.f32.gmra.mxu0 %v669
        %v714 = vpop.f32.mrf.mxu0
        %v715 = vadd.f32 %v663, %v714
        %716 = vmatmul.f32.gmra.mxu0 %v672
        %v717 = vpop.f32.mrf.mxu0
        %v718 = vadd.f32 %v666, %v717
        %719 = vdwg.mxu0
        %720 = vrot.lane.b32.xlu0 %v581, 16
        %v721 = vpop.permute.xlu0 %720
        %722 = vrot.lane.b32.xlu0 %v583, 16
        %v723 = vpop.permute.xlu0 %722
        %724 = vrot.lane.b32.xlu0 %v582, 16
        %v725 = vpop.permute.xlu0 %724
        %726 = vrot.lane.b32.xlu0 %v584, 16
        %v727 = vpop.permute.xlu0 %726
        %vm728 = vcmp.lt.s32.totalorder %v597, 16
        %v729 = vsel %vm728, %v721, %v725
        %v730 = vsel %vm728, %v723, %v727
        %v731 = vsel %vm728, %v725, %v721
        %v732 = vsel %vm728, %v727, %v723
        %s733 = scalar_lea.vmem %s1, 1
        %v734 = vld [vmem:[%s733] ss:$8 sm:$0x3]
        %v736 = vperm.slane %v734, 0
        %v737 = vperm.slane %v734, 1
        %v740 = vmul.f32 %v731, %v736
        %v741 = vmul.f32 %v729, %v737
        %v742 = vmul.f32 %v732, %v736
        %v743 = vmul.f32 %v730, %v737
        %s744 = scalar_lea.vmem [#allocation5], 16
        %v745 = vld [vmem:[%s744] sm:$0xff]
        %v746 = vld [vmem:[%s744 + $0x8] sm:$0xff]
        %v748 = vsel %vm615, %v745, 0
        %v751 = vsel %vm615, %v746, 0
        %753 = vmatpush.msra.mxu0 0.0
        %754 = vmatpush.msra.mxu0 0.0
        %755 = vmatpush.msra.mxu0 0.0
        %756 = vmatpush.msra.mxu0 0.0
        %757 = vmatpush.msra.mxu0 0.0
        %758 = vmatpush.msra.mxu0 0.0
        %759 = vmatpush.msra.mxu0 0.0
        %760 = vmatpush.msra.mxu0 0.0
        %761 = vmatpush.msra.mxu0 0.0
        %762 = vmatpush.msra.mxu0 0.0
        %763 = vmatpush.msra.mxu0 0.0
        %764 = vmatpush.msra.mxu0 0.0
        %765 = vmatpush.msra.mxu0 0.0
        %766 = vmatpush.msra.mxu0 0.0
        %767 = vmatpush.msra.mxu0 %v742
        %768 = vmatpush.msra.mxu0 %v740
        %769 = vmatmul.f32.gmra.mxu0 %v748
        %v770 = vpop.f32.mrf.mxu0
        %v771 = vadd.f32 0.0, %v770
        %772 = vmatmul.f32.gmra.mxu0 %v751
        %v773 = vpop.f32.mrf.mxu0
        %v774 = vadd.f32 0.0, %v773
        %775 = vdwg.mxu0
        %776 = vmatpush.msra.mxu0 0.0
        %777 = vmatpush.msra.mxu0 0.0
        %778 = vmatpush.msra.mxu0 0.0
        %779 = vmatpush.msra.mxu0 0.0
        %780 = vmatpush.msra.mxu0 0.0
        %781 = vmatpush.msra.mxu0 0.0
        %782 = vmatpush.msra.mxu0 0.0
        %783 = vmatpush.msra.mxu0 0.0
        %784 = vmatpush.msra.mxu0 0.0
        %785 = vmatpush.msra.mxu0 0.0
        %786 = vmatpush.msra.mxu0 0.0
        %787 = vmatpush.msra.mxu0 0.0
        %788 = vmatpush.msra.mxu0 0.0
        %789 = vmatpush.msra.mxu0 0.0
        %790 = vmatpush.msra.mxu0 %v743
        %791 = vmatpush.msra.mxu0 %v741
        %792 = vmatmul.f32.gmra.mxu0 %v748
        %v793 = vpop.f32.mrf.mxu0
        %v794 = vadd.f32 0.0, %v793
        %795 = vmatmul.f32.gmra.mxu0 %v751
        %v796 = vpop.f32.mrf.mxu0
        %v797 = vadd.f32 0.0, %v796
        %798 = vdwg.mxu0
        %v799 = vadd.f32 %v692, %v771
        %v800 = vadd.f32 %v715, %v794
        %v801 = vadd.f32 %v695, %v774
        %v802 = vadd.f32 %v718, %v797
        %803 = vrot.lane.b32.xlu0 %v581, 15
        %v804 = vpop.permute.xlu0 %803
        %805 = vrot.lane.b32.xlu0 %v583, 15
        %v806 = vpop.permute.xlu0 %805
        %807 = vrot.lane.b32.xlu0 %v582, 15
        %v808 = vpop.permute.xlu0 %807
        %809 = vrot.lane.b32.xlu0 %v584, 15
        %v810 = vpop.permute.xlu0 %809
        %vm811 = vcmp.lt.s32.totalorder %v597, 15
        %v812 = vsel %vm811, %v804, %v808
        %v813 = vsel %vm811, %v806, %v810
        %v814 = vsel %vm811, %v808, %v804
        %v815 = vsel %vm811, %v810, %v806
        %s816 = scalar_lea.vmem %s1, 2
        %v817 = vld [vmem:[%s816] ss:$8 sm:$0x3]
        %v819 = vperm.slane %v817, 0
        %v820 = vperm.slane %v817, 1
        %v823 = vmul.f32 %v814, %v819
        %v824 = vmul.f32 %v812, %v820
        %v825 = vmul.f32 %v815, %v819
        %v826 = vmul.f32 %v813, %v820
        %s827 = scalar_lea.vmem [#allocation5], 32
        %v828 = vld [vmem:[%s827] sm:$0xff]
        %v829 = vld [vmem:[%s827 + $0x8] sm:$0xff]
        %v831 = vsel %vm615, %v828, 0
        %v834 = vsel %vm615, %v829, 0
        %836 = vmatpush.msra.mxu0 0.0
        %837 = vmatpush.msra.mxu0 0.0
        %838 = vmatpush.msra.mxu0 0.0
        %839 = vmatpush.msra.mxu0 0.0
        %840 = vmatpush.msra.mxu0 0.0
        %841 = vmatpush.msra.mxu0 0.0
        %842 = vmatpush.msra.mxu0 0.0
        %843 = vmatpush.msra.mxu0 0.0
        %844 = vmatpush.msra.mxu0 0.0
        %845 = vmatpush.msra.mxu0 0.0
        %846 = vmatpush.msra.mxu0 0.0
        %847 = vmatpush.msra.mxu0 0.0
        %848 = vmatpush.msra.mxu0 0.0
        %849 = vmatpush.msra.mxu0 0.0
        %850 = vmatpush.msra.mxu0 %v825
        %851 = vmatpush.msra.mxu0 %v823
        %852 = vmatmul.f32.gmra.mxu0 %v831
        %v853 = vpop.f32.mrf.mxu0
        %v854 = vadd.f32 0.0, %v853
        %855 = vmatmul.f32.gmra.mxu0 %v834
        %v856 = vpop.f32.mrf.mxu0
        %v857 = vadd.f32 0.0, %v856
        %858 = vdwg.mxu0
        %859 = vmatpush.msra.mxu0 0.0
        %860 = vmatpush.msra.mxu0 0.0
        %861 = vmatpush.msra.mxu0 0.0
        %862 = vmatpush.msra.mxu0 0.0
        %863 = vmatpush.msra.mxu0 0.0
        %864 = vmatpush.msra.mxu0 0.0
        %865 = vmatpush.msra.mxu0 0.0
        %866 = vmatpush.msra.mxu0 0.0
        %867 = vmatpush.msra.mxu0 0.0
        %868 = vmatpush.msra.mxu0 0.0
        %869 = vmatpush.msra.mxu0 0.0
        %870 = vmatpush.msra.mxu0 0.0
        %871 = vmatpush.msra.mxu0 0.0
        %872 = vmatpush.msra.mxu0 0.0
        %873 = vmatpush.msra.mxu0 %v826
        %874 = vmatpush.msra.mxu0 %v824
        %875 = vmatmul.f32.gmra.mxu0 %v831
        %v876 = vpop.f32.mrf.mxu0
        %v877 = vadd.f32 0.0, %v876
        %878 = vmatmul.f32.gmra.mxu0 %v834
        %v879 = vpop.f32.mrf.mxu0
        %v880 = vadd.f32 0.0, %v879
        %881 = vdwg.mxu0
        %v882 = vadd.f32 %v799, %v854
        %v883 = vadd.f32 %v800, %v877
        %v884 = vadd.f32 %v801, %v857
        %v885 = vadd.f32 %v802, %v880
        %886 = vrot.lane.b32.xlu0 %v581, 1
        %v887 = vpop.permute.xlu0 %886
        %888 = vrot.lane.b32.xlu0 %v583, 1
        %v889 = vpop.permute.xlu0 %888
        %890 = vrot.lane.b32.xlu0 %v582, 1
        %v891 = vpop.permute.xlu0 %890
        %892 = vrot.lane.b32.xlu0 %v584, 1
        %v893 = vpop.permute.xlu0 %892
        %vm894 = vcmp.lt.s32.totalorder %v597, 1
        %v895 = vsel %vm894, %v887, %v891
        %v896 = vsel %vm894, %v889, %v893
        %v897 = vsel %vm894, %v891, %v887
        %v898 = vsel %vm894, %v893, %v889
        %s899 = scalar_lea.vmem %s1, 3
        %v900 = vld [vmem:[%s899] ss:$8 sm:$0x3]
        %v902 = vperm.slane %v900, 0
        %v903 = vperm.slane %v900, 1
        %v906 = vmul.f32 %v897, %v902
        %v907 = vmul.f32 %v895, %v903
        %v908 = vmul.f32 %v898, %v902
        %v909 = vmul.f32 %v896, %v903
        %s910 = scalar_lea.vmem [#allocation5], 48
        %v911 = vld [vmem:[%s910] sm:$0xff]
        %v912 = vld [vmem:[%s910 + $0x8] sm:$0xff]
        %v914 = vsel %vm615, %v911, 0
        %v917 = vsel %vm615, %v912, 0
        %919 = vmatpush.msra.mxu0 0.0
        %920 = vmatpush.msra.mxu0 0.0
        %921 = vmatpush.msra.mxu0 0.0
        %922 = vmatpush.msra.mxu0 0.0
        %923 = vmatpush.msra.mxu0 0.0
        %924 = vmatpush.msra.mxu0 0.0
        %925 = vmatpush.msra.mxu0 0.0
        %926 = vmatpush.msra.mxu0 0.0
        %927 = vmatpush.msra.mxu0 0.0
        %928 = vmatpush.msra.mxu0 0.0
        %929 = vmatpush.msra.mxu0 0.0
        %930 = vmatpush.msra.mxu0 0.0
        %931 = vmatpush.msra.mxu0 0.0
        %932 = vmatpush.msra.mxu0 0.0
        %933 = vmatpush.msra.mxu0 %v908
        %934 = vmatpush.msra.mxu0 %v906
        %935 = vmatmul.f32.gmra.mxu0 %v914
        %v936 = vpop.f32.mrf.mxu0
        %v937 = vadd.f32 0.0, %v936
        %938 = vmatmul.f32.gmra.mxu0 %v917
        %v939 = vpop.f32.mrf.mxu0
        %v940 = vadd.f32 0.0, %v939
        %941 = vdwg.mxu0
        %942 = vmatpush.msra.mxu0 0.0
        %943 = vmatpush.msra.mxu0 0.0
        %944 = vmatpush.msra.mxu0 0.0
        %945 = vmatpush.msra.mxu0 0.0
        %946 = vmatpush.msra.mxu0 0.0
        %947 = vmatpush.msra.mxu0 0.0
        %948 = vmatpush.msra.mxu0 0.0
        %949 = vmatpush.msra.mxu0 0.0
        %950 = vmatpush.msra.mxu0 0.0
        %951 = vmatpush.msra.mxu0 0.0
        %952 = vmatpush.msra.mxu0 0.0
        %953 = vmatpush.msra.mxu0 0.0
        %954 = vmatpush.msra.mxu0 0.0
        %955 = vmatpush.msra.mxu0 0.0
        %956 = vmatpush.msra.mxu0 %v909
        %957 = vmatpush.msra.mxu0 %v907
        %958 = vmatmul.f32.gmra.mxu0 %v914
        %v959 = vpop.f32.mrf.mxu0
        %v960 = vadd.f32 0.0, %v959
        %961 = vmatmul.f32.gmra.mxu0 %v917
        %v962 = vpop.f32.mrf.mxu0
        %v963 = vadd.f32 0.0, %v962
        %964 = vdwg.mxu0
        %v965 = vadd.f32 %v882, %v937
        %v966 = vadd.f32 %v883, %v960
        %v967 = vadd.f32 %v884, %v940
        %v968 = vadd.f32 %v885, %v963
        %969 = vrot.lane.b32.xlu0 %v581, 127
        %v970 = vpop.permute.xlu0 %969
        %971 = vrot.lane.b32.xlu0 %v583, 127
        %v972 = vpop.permute.xlu0 %971
        %973 = vrot.lane.b32.xlu0 %v582, 127
        %v974 = vpop.permute.xlu0 %973
        %975 = vrot.lane.b32.xlu0 %v584, 127
        %v976 = vpop.permute.xlu0 %975
        %vm977 = vcmp.lt.s32.totalorder %v597, 127
        %v978 = vsel %vm977, %v970, %v974
        %v979 = vsel %vm977, %v972, %v976
        %v980 = vsel %vm977, %v974, %v970
        %v981 = vsel %vm977, %v976, %v972
        %s982 = scalar_lea.vmem %s1, 5
        %v983 = vld [vmem:[%s982] ss:$8 sm:$0x3]
        %v985 = vperm.slane %v983, 0
        %v986 = vperm.slane %v983, 1
        %v989 = vmul.f32 %v978, %v985
        %v990 = vmul.f32 %v980, %v986
        %v991 = vmul.f32 %v979, %v985
        %v992 = vmul.f32 %v981, %v986
        %s993 = scalar_lea.vmem [#allocation5], 80
        %v994 = vld [vmem:[%s993] sm:$0xff]
        %v995 = vld [vmem:[%s993 + $0x8] sm:$0xff]
        %v997 = vsel %vm615, %v994, 0
        %v1000 = vsel %vm615, %v995, 0
        %1002 = vmatpush.msra.mxu0 0.0
        %1003 = vmatpush.msra.mxu0 0.0
        %1004 = vmatpush.msra.mxu0 0.0
        %1005 = vmatpush.msra.mxu0 0.0
        %1006 = vmatpush.msra.mxu0 0.0
        %1007 = vmatpush.msra.mxu0 0.0
        %1008 = vmatpush.msra.mxu0 0.0
        %1009 = vmatpush.msra.mxu0 0.0
        %1010 = vmatpush.msra.mxu0 0.0
        %1011 = vmatpush.msra.mxu0 0.0
        %1012 = vmatpush.msra.mxu0 0.0
        %1013 = vmatpush.msra.mxu0 0.0
        %1014 = vmatpush.msra.mxu0 0.0
        %1015 = vmatpush.msra.mxu0 0.0
        %1016 = vmatpush.msra.mxu0 %v991
        %1017 = vmatpush.msra.mxu0 %v989
        %1018 = vmatmul.f32.gmra.mxu0 %v997
        %v1019 = vpop.f32.mrf.mxu0
        %v1020 = vadd.f32 0.0, %v1019
        %1021 = vmatmul.f32.gmra.mxu0 %v1000
        %v1022 = vpop.f32.mrf.mxu0
        %v1023 = vadd.f32 0.0, %v1022
        %1024 = vdwg.mxu0
        %1025 = vmatpush.msra.mxu0 0.0
        %1026 = vmatpush.msra.mxu0 0.0
        %1027 = vmatpush.msra.mxu0 0.0
        %1028 = vmatpush.msra.mxu0 0.0
        %1029 = vmatpush.msra.mxu0 0.0
        %1030 = vmatpush.msra.mxu0 0.0
        %1031 = vmatpush.msra.mxu0 0.0
        %1032 = vmatpush.msra.mxu0 0.0
        %1033 = vmatpush.msra.mxu0 0.0
        %1034 = vmatpush.msra.mxu0 0.0
        %1035 = vmatpush.msra.mxu0 0.0
        %1036 = vmatpush.msra.mxu0 0.0
        %1037 = vmatpush.msra.mxu0 0.0
        %1038 = vmatpush.msra.mxu0 0.0
        %1039 = vmatpush.msra.mxu0 %v992
        %1040 = vmatpush.msra.mxu0 %v990
        %1041 = vmatmul.f32.gmra.mxu0 %v997
        %v1042 = vpop.f32.mrf.mxu0
        %v1043 = vadd.f32 0.0, %v1042
        %1044 = vmatmul.f32.gmra.mxu0 %v1000
        %v1045 = vpop.f32.mrf.mxu0
        %v1046 = vadd.f32 0.0, %v1045
        %1047 = vdwg.mxu0
        %v1048 = vadd.f32 %v965, %v1020
        %v1049 = vadd.f32 %v966, %v1043
        %v1050 = vadd.f32 %v967, %v1023
        %v1051 = vadd.f32 %v968, %v1046
        %1052 = vrot.lane.b32.xlu0 %v581, 113
        %v1053 = vpop.permute.xlu0 %1052
        %1054 = vrot.lane.b32.xlu0 %v583, 113
        %v1055 = vpop.permute.xlu0 %1054
        %1056 = vrot.lane.b32.xlu0 %v582, 113
        %v1057 = vpop.permute.xlu0 %1056
        %1058 = vrot.lane.b32.xlu0 %v584, 113
        %v1059 = vpop.permute.xlu0 %1058
        %vm1060 = vcmp.lt.s32.totalorder %v597, 113
        %v1061 = vsel %vm1060, %v1053, %v1057
        %v1062 = vsel %vm1060, %v1055, %v1059
        %v1063 = vsel %vm1060, %v1057, %v1053
        %v1064 = vsel %vm1060, %v1059, %v1055
        %s1065 = scalar_lea.vmem %s1, 6
        %v1066 = vld [vmem:[%s1065] ss:$8 sm:$0x3]
        %v1068 = vperm.slane %v1066, 0
        %v1069 = vperm.slane %v1066, 1
        %v1072 = vmul.f32 %v1061, %v1068
        %v1073 = vmul.f32 %v1063, %v1069
        %v1074 = vmul.f32 %v1062, %v1068
        %v1075 = vmul.f32 %v1064, %v1069
        %s1076 = scalar_lea.vmem [#allocation5], 96
        %v1077 = vld [vmem:[%s1076] sm:$0xff]
        %v1078 = vld [vmem:[%s1076 + $0x8] sm:$0xff]
        %v1080 = vsel %vm615, %v1077, 0
        %v1083 = vsel %vm615, %v1078, 0
        %1085 = vmatpush.msra.mxu0 0.0
        %1086 = vmatpush.msra.mxu0 0.0
        %1087 = vmatpush.msra.mxu0 0.0
        %1088 = vmatpush.msra.mxu0 0.0
        %1089 = vmatpush.msra.mxu0 0.0
        %1090 = vmatpush.msra.mxu0 0.0
        %1091 = vmatpush.msra.mxu0 0.0
        %1092 = vmatpush.msra.mxu0 0.0
        %1093 = vmatpush.msra.mxu0 0.0
        %1094 = vmatpush.msra.mxu0 0.0
        %1095 = vmatpush.msra.mxu0 0.0
        %1096 = vmatpush.msra.mxu0 0.0
        %1097 = vmatpush.msra.mxu0 0.0
        %1098 = vmatpush.msra.mxu0 0.0
        %1099 = vmatpush.msra.mxu0 %v1074
        %1100 = vmatpush.msra.mxu0 %v1072
        %1101 = vmatmul.f32.gmra.mxu0 %v1080
        %v1102 = vpop.f32.mrf.mxu0
        %v1103 = vadd.f32 0.0, %v1102
        %1104 = vmatmul.f32.gmra.mxu0 %v1083
        %v1105 = vpop.f32.mrf.mxu0
        %v1106 = vadd.f32 0.0, %v1105
        %1107 = vdwg.mxu0
        %1108 = vmatpush.msra.mxu0 0.0
        %1109 = vmatpush.msra.mxu0 0.0
        %1110 = vmatpush.msra.mxu0 0.0
        %1111 = vmatpush.msra.mxu0 0.0
        %1112 = vmatpush.msra.mxu0 0.0
        %1113 = vmatpush.msra.mxu0 0.0
        %1114 = vmatpush.msra.mxu0 0.0
        %1115 = vmatpush.msra.mxu0 0.0
        %1116 = vmatpush.msra.mxu0 0.0
        %1117 = vmatpush.msra.mxu0 0.0
        %1118 = vmatpush.msra.mxu0 0.0
        %1119 = vmatpush.msra.mxu0 0.0
        %1120 = vmatpush.msra.mxu0 0.0
        %1121 = vmatpush.msra.mxu0 0.0
        %1122 = vmatpush.msra.mxu0 %v1075
        %1123 = vmatpush.msra.mxu0 %v1073
        %1124 = vmatmul.f32.gmra.mxu0 %v1080
        %v1125 = vpop.f32.mrf.mxu0
        %v1126 = vadd.f32 0.0, %v1125
        %1127 = vmatmul.f32.gmra.mxu0 %v1083
        %v1128 = vpop.f32.mrf.mxu0
        %v1129 = vadd.f32 0.0, %v1128
        %1130 = vdwg.mxu0
        %v1131 = vadd.f32 %v1048, %v1103
        %v1132 = vadd.f32 %v1049, %v1126
        %v1133 = vadd.f32 %v1050, %v1106
        %v1134 = vadd.f32 %v1051, %v1129
        %1135 = vrot.lane.b32.xlu0 %v581, 112
        %v1136 = vpop.permute.xlu0 %1135
        %1137 = vrot.lane.b32.xlu0 %v583, 112
        %v1138 = vpop.permute.xlu0 %1137
        %1139 = vrot.lane.b32.xlu0 %v582, 112
        %v1140 = vpop.permute.xlu0 %1139
        %1141 = vrot.lane.b32.xlu0 %v584, 112
        %v1142 = vpop.permute.xlu0 %1141
        %vm1143 = vcmp.lt.s32.totalorder %v597, 112
        %v1144 = vsel %vm1143, %v1136, %v1140
        %v1145 = vsel %vm1143, %v1138, %v1142
        %v1146 = vsel %vm1143, %v1140, %v1136
        %v1147 = vsel %vm1143, %v1142, %v1138
        %s1148 = scalar_lea.vmem %s1, 7
        %v1149 = vld [vmem:[%s1148] ss:$8 sm:$0x3]
        %v1151 = vperm.slane %v1149, 0
        %v1152 = vperm.slane %v1149, 1
        %v1155 = vmul.f32 %v1144, %v1151
        %v1156 = vmul.f32 %v1146, %v1152
        %v1157 = vmul.f32 %v1145, %v1151
        %v1158 = vmul.f32 %v1147, %v1152
        %s1159 = scalar_lea.vmem [#allocation5], 112
        %v1160 = vld [vmem:[%s1159] sm:$0xff]
        %v1161 = vld [vmem:[%s1159 + $0x8] sm:$0xff]
        %v1163 = vsel %vm615, %v1160, 0
        %v1166 = vsel %vm615, %v1161, 0
        %1168 = vmatpush.msra.mxu0 0.0
        %1169 = vmatpush.msra.mxu0 0.0
        %1170 = vmatpush.msra.mxu0 0.0
        %1171 = vmatpush.msra.mxu0 0.0
        %1172 = vmatpush.msra.mxu0 0.0
        %1173 = vmatpush.msra.mxu0 0.0
        %1174 = vmatpush.msra.mxu0 0.0
        %1175 = vmatpush.msra.mxu0 0.0
        %1176 = vmatpush.msra.mxu0 0.0
        %1177 = vmatpush.msra.mxu0 0.0
        %1178 = vmatpush.msra.mxu0 0.0
        %1179 = vmatpush.msra.mxu0 0.0
        %1180 = vmatpush.msra.mxu0 0.0
        %1181 = vmatpush.msra.mxu0 0.0
        %1182 = vmatpush.msra.mxu0 %v1157
        %1183 = vmatpush.msra.mxu0 %v1155
        %1184 = vmatmul.f32.gmra.mxu0 %v1163
        %v1185 = vpop.f32.mrf.mxu0
        %v1186 = vadd.f32 0.0, %v1185
        %1187 = vmatmul.f32.gmra.mxu0 %v1166
        %v1188 = vpop.f32.mrf.mxu0
        %v1189 = vadd.f32 0.0, %v1188
        %1190 = vdwg.mxu0
        %1191 = vmatpush.msra.mxu0 0.0
        %1192 = vmatpush.msra.mxu0 0.0
        %1193 = vmatpush.msra.mxu0 0.0
        %1194 = vmatpush.msra.mxu0 0.0
        %1195 = vmatpush.msra.mxu0 0.0
        %1196 = vmatpush.msra.mxu0 0.0
        %1197 = vmatpush.msra.mxu0 0.0
        %1198 = vmatpush.msra.mxu0 0.0
        %1199 = vmatpush.msra.mxu0 0.0
        %1200 = vmatpush.msra.mxu0 0.0
        %1201 = vmatpush.msra.mxu0 0.0
        %1202 = vmatpush.msra.mxu0 0.0
        %1203 = vmatpush.msra.mxu0 0.0
        %1204 = vmatpush.msra.mxu0 0.0
        %1205 = vmatpush.msra.mxu0 %v1158
        %1206 = vmatpush.msra.mxu0 %v1156
        %1207 = vmatmul.f32.gmra.mxu0 %v1163
        %v1208 = vpop.f32.mrf.mxu0
        %v1209 = vadd.f32 0.0, %v1208
        %1210 = vmatmul.f32.gmra.mxu0 %v1166
        %v1211 = vpop.f32.mrf.mxu0
        %v1212 = vadd.f32 0.0, %v1211
        %1213 = vdwg.mxu0
        %v1214 = vadd.f32 %v1131, %v1186
        %v1215 = vadd.f32 %v1132, %v1209
        %v1216 = vadd.f32 %v1133, %v1189
        %v1217 = vadd.f32 %v1134, %v1212
        %1218 = vrot.lane.b32.xlu0 %v581, 111
        %v1219 = vpop.permute.xlu0 %1218
        %1220 = vrot.lane.b32.xlu0 %v583, 111
        %v1221 = vpop.permute.xlu0 %1220
        %1222 = vrot.lane.b32.xlu0 %v582, 111
        %v1223 = vpop.permute.xlu0 %1222
        %1224 = vrot.lane.b32.xlu0 %v584, 111
        %v1225 = vpop.permute.xlu0 %1224
        %vm1226 = vcmp.lt.s32.totalorder %v597, 111
        %v1227 = vsel %vm1226, %v1219, %v1223
        %v1228 = vsel %vm1226, %v1221, %v1225
        %v1229 = vsel %vm1226, %v1223, %v1219
        %v1230 = vsel %vm1226, %v1225, %v1221
        %s1231 = scalar_lea.vmem %s1, 16
        %v1232 = vld [vmem:[%s1231] ss:$8 sm:$0x3]
        %v1234 = vperm.slane %v1232, 0
        %v1235 = vperm.slane %v1232, 1
        %v1238 = vmul.f32 %v1227, %v1234
        %v1239 = vmul.f32 %v1229, %v1235
        %v1240 = vmul.f32 %v1228, %v1234
        %v1241 = vmul.f32 %v1230, %v1235
        %s1242 = scalar_lea.vmem [#allocation5], 128
        %v1243 = vld [vmem:[%s1242] sm:$0xff]
        %v1244 = vld [vmem:[%s1242 + $0x8] sm:$0xff]
        %v1246 = vsel %vm615, %v1243, 0
        %v1249 = vsel %vm615, %v1244, 0
        %1251 = vmatpush.msra.mxu0 0.0
        %1252 = vmatpush.msra.mxu0 0.0
        %1253 = vmatpush.msra.mxu0 0.0
        %1254 = vmatpush.msra.mxu0 0.0
        %1255 = vmatpush.msra.mxu0 0.0
        %1256 = vmatpush.msra.mxu0 0.0
        %1257 = vmatpush.msra.mxu0 0.0
        %1258 = vmatpush.msra.mxu0 0.0
        %1259 = vmatpush.msra.mxu0 0.0
        %1260 = vmatpush.msra.mxu0 0.0
        %1261 = vmatpush.msra.mxu0 0.0
        %1262 = vmatpush.msra.mxu0 0.0
        %1263 = vmatpush.msra.mxu0 0.0
        %1264 = vmatpush.msra.mxu0 0.0
        %1265 = vmatpush.msra.mxu0 %v1240
        %1266 = vmatpush.msra.mxu0 %v1238
        %1267 = vmatmul.f32.gmra.mxu0 %v1246
        %v1268 = vpop.f32.mrf.mxu0
        %v1269 = vadd.f32 0.0, %v1268
        %1270 = vmatmul.f32.gmra.mxu0 %v1249
        %v1271 = vpop.f32.mrf.mxu0
        %v1272 = vadd.f32 0.0, %v1271
        %1273 = vdwg.mxu0
        %1274 = vmatpush.msra.mxu0 0.0
        %1275 = vmatpush.msra.mxu0 0.0
        %1276 = vmatpush.msra.mxu0 0.0
        %1277 = vmatpush.msra.mxu0 0.0
        %1278 = vmatpush.msra.mxu0 0.0
        %1279 = vmatpush.msra.mxu0 0.0
        %1280 = vmatpush.msra.mxu0 0.0
        %1281 = vmatpush.msra.mxu0 0.0
        %1282 = vmatpush.msra.mxu0 0.0
        %1283 = vmatpush.msra.mxu0 0.0
        %1284 = vmatpush.msra.mxu0 0.0
        %1285 = vmatpush.msra.mxu0 0.0
        %1286 = vmatpush.msra.mxu0 0.0
        %1287 = vmatpush.msra.mxu0 0.0
        %1288 = vmatpush.msra.mxu0 %v1241
        %1289 = vmatpush.msra.mxu0 %v1239
        %1290 = vmatmul.f32.gmra.mxu0 %v1246
        %v1291 = vpop.f32.mrf.mxu0
        %v1292 = vadd.f32 0.0, %v1291
        %1293 = vmatmul.f32.gmra.mxu0 %v1249
        %v1294 = vpop.f32.mrf.mxu0
        %v1295 = vadd.f32 0.0, %v1294
        %1296 = vdwg.mxu0
        %v1297 = vadd.f32 %v1214, %v1269
        %v1298 = vadd.f32 %v1215, %v1292
        %v1299 = vadd.f32 %v1216, %v1272
        %v1300 = vadd.f32 %v1217, %v1295
        %s1301 = scalar_lea.vmem [#allocation7], 64
        %v1302 = vld [vmem:[%s1301] sm:$0xff]
        %v1303 = vld [vmem:[%s1301 + $0x8] sm:$0xff]
        %1304 = vrot.lane.b32.xlu0 %v1297, 17
        %v1305 = vpop.permute.xlu0 %1304
        %1306 = vrot.lane.b32.xlu0 %v1299, 17
        %v1307 = vpop.permute.xlu0 %1306
        %1308 = vrot.lane.b32.xlu0 %v1298, 17
        %v1309 = vpop.permute.xlu0 %1308
        %1310 = vrot.lane.b32.xlu0 %v1300, 17
        %v1311 = vpop.permute.xlu0 %1310
        %v1312 = vsel %vm598, %v1305, %v1309
        %v1313 = vsel %vm598, %v1307, %v1311
        %v1314 = vsel %vm598, %v1309, %v1305
        %v1315 = vsel %vm598, %v1311, %v1307
        %v1316 = vmul.f32 %v1314, %v605
        %v1317 = vmul.f32 %v1312, %v606
        %v1318 = vmul.f32 %v1315, %v605
        %v1319 = vmul.f32 %v1313, %v606
        %v1320 = vld [vmem:[#allocation7] sm:$0xff]
        %v1321 = vld [vmem:[#allocation7 + $0x8] sm:$0xff]
        %v1323 = vsel %vm615, %v1320, 0
        %v1326 = vsel %vm615, %v1321, 0
        %1328 = vmatpush.msra.mxu0 0.0
        %1329 = vmatpush.msra.mxu0 0.0
        %1330 = vmatpush.msra.mxu0 0.0
        %1331 = vmatpush.msra.mxu0 0.0
        %1332 = vmatpush.msra.mxu0 0.0
        %1333 = vmatpush.msra.mxu0 0.0
        %1334 = vmatpush.msra.mxu0 0.0
        %1335 = vmatpush.msra.mxu0 0.0
        %1336 = vmatpush.msra.mxu0 0.0
        %1337 = vmatpush.msra.mxu0 0.0
        %1338 = vmatpush.msra.mxu0 0.0
        %1339 = vmatpush.msra.mxu0 0.0
        %1340 = vmatpush.msra.mxu0 0.0
        %1341 = vmatpush.msra.mxu0 0.0
        %1342 = vmatpush.msra.mxu0 %v1318
        %1343 = vmatpush.msra.mxu0 %v1316
        %1344 = vmatmul.f32.gmra.mxu0 %v1323
        %v1345 = vpop.f32.mrf.mxu0
        %v1346 = vadd.f32 0.0, %v1345
        %1347 = vmatmul.f32.gmra.mxu0 %v1326
        %v1348 = vpop.f32.mrf.mxu0
        %v1349 = vadd.f32 0.0, %v1348
        %1350 = vdwg.mxu0
        %1351 = vmatpush.msra.mxu0 0.0
        %1352 = vmatpush.msra.mxu0 0.0
        %1353 = vmatpush.msra.mxu0 0.0
        %1354 = vmatpush.msra.mxu0 0.0
        %1355 = vmatpush.msra.mxu0 0.0
        %1356 = vmatpush.msra.mxu0 0.0
        %1357 = vmatpush.msra.mxu0 0.0
        %1358 = vmatpush.msra.mxu0 0.0
        %1359 = vmatpush.msra.mxu0 0.0
        %1360 = vmatpush.msra.mxu0 0.0
        %1361 = vmatpush.msra.mxu0 0.0
        %1362 = vmatpush.msra.mxu0 0.0
        %1363 = vmatpush.msra.mxu0 0.0
        %1364 = vmatpush.msra.mxu0 0.0
        %1365 = vmatpush.msra.mxu0 %v1319
        %1366 = vmatpush.msra.mxu0 %v1317
        %1367 = vmatmul.f32.gmra.mxu0 %v1323
        %v1368 = vpop.f32.mrf.mxu0
        %v1369 = vadd.f32 0.0, %v1368
        %1370 = vmatmul.f32.gmra.mxu0 %v1326
        %v1371 = vpop.f32.mrf.mxu0
        %v1372 = vadd.f32 0.0, %v1371
        %1373 = vdwg.mxu0
        %v1375 = vsel %vm615, %v1302, 0
        %v1378 = vsel %vm615, %v1303, 0
        %1380 = vmatpush.msra.mxu0 0.0
        %1381 = vmatpush.msra.mxu0 0.0
        %1382 = vmatpush.msra.mxu0 0.0
        %1383 = vmatpush.msra.mxu0 0.0
        %1384 = vmatpush.msra.mxu0 0.0
        %1385 = vmatpush.msra.mxu0 0.0
        %1386 = vmatpush.msra.mxu0 0.0
        %1387 = vmatpush.msra.mxu0 0.0
        %1388 = vmatpush.msra.mxu0 0.0
        %1389 = vmatpush.msra.mxu0 0.0
        %1390 = vmatpush.msra.mxu0 0.0
        %1391 = vmatpush.msra.mxu0 0.0
        %1392 = vmatpush.msra.mxu0 0.0
        %1393 = vmatpush.msra.mxu0 0.0
        %1394 = vmatpush.msra.mxu0 %v1299
        %1395 = vmatpush.msra.mxu0 %v1297
        %1396 = vmatmul.f32.gmra.mxu0 %v1375
        %v1397 = vpop.f32.mrf.mxu0
        %v1398 = vadd.f32 %v1346, %v1397
        %1399 = vmatmul.f32.gmra.mxu0 %v1378
        %v1400 = vpop.f32.mrf.mxu0
        %v1401 = vadd.f32 %v1349, %v1400
        %1402 = vdwg.mxu0
        %1403 = vmatpush.msra.mxu0 0.0
        %1404 = vmatpush.msra.mxu0 0.0
        %1405 = vmatpush.msra.mxu0 0.0
        %1406 = vmatpush.msra.mxu0 0.0
        %1407 = vmatpush.msra.mxu0 0.0
        %1408 = vmatpush.msra.mxu0 0.0
        %1409 = vmatpush.msra.mxu0 0.0
        %1410 = vmatpush.msra.mxu0 0.0
        %1411 = vmatpush.msra.mxu0 0.0
        %1412 = vmatpush.msra.mxu0 0.0
        %1413 = vmatpush.msra.mxu0 0.0
        %1414 = vmatpush.msra.mxu0 0.0
        %1415 = vmatpush.msra.mxu0 0.0
        %1416 = vmatpush.msra.mxu0 0.0
        %1417 = vmatpush.msra.mxu0 %v1300
        %1418 = vmatpush.msra.mxu0 %v1298
        %1419 = vmatmul.f32.gmra.mxu0 %v1375
        %v1420 = vpop.f32.mrf.mxu0
        %v1421 = vadd.f32 %v1369, %v1420
        %1422 = vmatmul.f32.gmra.mxu0 %v1378
        %v1423 = vpop.f32.mrf.mxu0
        %v1424 = vadd.f32 %v1372, %v1423
        %1425 = vdwg.mxu0
        %1426 = vrot.lane.b32.xlu0 %v1297, 16
        %v1427 = vpop.permute.xlu0 %1426
        %1428 = vrot.lane.b32.xlu0 %v1299, 16
        %v1429 = vpop.permute.xlu0 %1428
        %1430 = vrot.lane.b32.xlu0 %v1298, 16
        %v1431 = vpop.permute.xlu0 %1430
        %1432 = vrot.lane.b32.xlu0 %v1300, 16
        %v1433 = vpop.permute.xlu0 %1432
        %v1434 = vsel %vm728, %v1427, %v1431
        %v1435 = vsel %vm728, %v1429, %v1433
        %v1436 = vsel %vm728, %v1431, %v1427
        %v1437 = vsel %vm728, %v1433, %v1429
        %v1438 = vmul.f32 %v1436, %v736
        %v1439 = vmul.f32 %v1434, %v737
        %v1440 = vmul.f32 %v1437, %v736
        %v1441 = vmul.f32 %v1435, %v737
        %s1442 = scalar_lea.vmem [#allocation7], 16
        %v1443 = vld [vmem:[%s1442] sm:$0xff]
        %v1444 = vld [vmem:[%s1442 + $0x8] sm:$0xff]
        %v1446 = vsel %vm615, %v1443, 0
        %v1449 = vsel %vm615, %v1444, 0
        %1451 = vmatpush.msra.mxu0 0.0
        %1452 = vmatpush.msra.mxu0 0.0
        %1453 = vmatpush.msra.mxu0 0.0
        %1454 = vmatpush.msra.mxu0 0.0
        %1455 = vmatpush.msra.mxu0 0.0
        %1456 = vmatpush.msra.mxu0 0.0
        %1457 = vmatpush.msra.mxu0 0.0
        %1458 = vmatpush.msra.mxu0 0.0
        %1459 = vmatpush.msra.mxu0 0.0
        %1460 = vmatpush.msra.mxu0 0.0
        %1461 = vmatpush.msra.mxu0 0.0
        %1462 = vmatpush.msra.mxu0 0.0
        %1463 = vmatpush.msra.mxu0 0.0
        %1464 = vmatpush.msra.mxu0 0.0
        %1465 = vmatpush.msra.mxu0 %v1440
        %1466 = vmatpush.msra.mxu0 %v1438
        %1467 = vmatmul.f32.gmra.mxu0 %v1446
        %v1468 = vpop.f32.mrf.mxu0
        %v1469 = vadd.f32 0.0, %v1468
        %1470 = vmatmul.f32.gmra.mxu0 %v1449
        %v1471 = vpop.f32.mrf.mxu0
        %v1472 = vadd.f32 0.0, %v1471
        %1473 = vdwg.mxu0
        %1474 = vmatpush.msra.mxu0 0.0
        %1475 = vmatpush.msra.mxu0 0.0
        %1476 = vmatpush.msra.mxu0 0.0
        %1477 = vmatpush.msra.mxu0 0.0
        %1478 = vmatpush.msra.mxu0 0.0
        %1479 = vmatpush.msra.mxu0 0.0
        %1480 = vmatpush.msra.mxu0 0.0
        %1481 = vmatpush.msra.mxu0 0.0
        %1482 = vmatpush.msra.mxu0 0.0
        %1483 = vmatpush.msra.mxu0 0.0
        %1484 = vmatpush.msra.mxu0 0.0
        %1485 = vmatpush.msra.mxu0 0.0
        %1486 = vmatpush.msra.mxu0 0.0
        %1487 = vmatpush.msra.mxu0 0.0
        %1488 = vmatpush.msra.mxu0 %v1441
        %1489 = vmatpush.msra.mxu0 %v1439
        %1490 = vmatmul.f32.gmra.mxu0 %v1446
        %v1491 = vpop.f32.mrf.mxu0
        %v1492 = vadd.f32 0.0, %v1491
        %1493 = vmatmul.f32.gmra.mxu0 %v1449
        %v1494 = vpop.f32.mrf.mxu0
        %v1495 = vadd.f32 0.0, %v1494
        %1496 = vdwg.mxu0
        %v1497 = vadd.f32 %v1398, %v1469
        %v1498 = vadd.f32 %v1421, %v1492
        %v1499 = vadd.f32 %v1401, %v1472
        %v1500 = vadd.f32 %v1424, %v1495
        %1501 = vrot.lane.b32.xlu0 %v1297, 15
        %v1502 = vpop.permute.xlu0 %1501
        %1503 = vrot.lane.b32.xlu0 %v1299, 15
        %v1504 = vpop.permute.xlu0 %1503
        %1505 = vrot.lane.b32.xlu0 %v1298, 15
        %v1506 = vpop.permute.xlu0 %1505
        %1507 = vrot.lane.b32.xlu0 %v1300, 15
        %v1508 = vpop.permute.xlu0 %1507
        %v1509 = vsel %vm811, %v1502, %v1506
        %v1510 = vsel %vm811, %v1504, %v1508
        %v1511 = vsel %vm811, %v1506, %v1502
        %v1512 = vsel %vm811, %v1508, %v1504
        %v1513 = vmul.f32 %v1511, %v819
        %v1514 = vmul.f32 %v1509, %v820
        %v1515 = vmul.f32 %v1512, %v819
        %v1516 = vmul.f32 %v1510, %v820
        %s1517 = scalar_lea.vmem [#allocation7], 32
        %v1518 = vld [vmem:[%s1517] sm:$0xff]
        %v1519 = vld [vmem:[%s1517 + $0x8] sm:$0xff]
        %v1521 = vsel %vm615, %v1518, 0
        %v1524 = vsel %vm615, %v1519, 0
        %1526 = vmatpush.msra.mxu0 0.0
        %1527 = vmatpush.msra.mxu0 0.0
        %1528 = vmatpush.msra.mxu0 0.0
        %1529 = vmatpush.msra.mxu0 0.0
        %1530 = vmatpush.msra.mxu0 0.0
        %1531 = vmatpush.msra.mxu0 0.0
        %1532 = vmatpush.msra.mxu0 0.0
        %1533 = vmatpush.msra.mxu0 0.0
        %1534 = vmatpush.msra.mxu0 0.0
        %1535 = vmatpush.msra.mxu0 0.0
        %1536 = vmatpush.msra.mxu0 0.0
        %1537 = vmatpush.msra.mxu0 0.0
        %1538 = vmatpush.msra.mxu0 0.0
        %1539 = vmatpush.msra.mxu0 0.0
        %1540 = vmatpush.msra.mxu0 %v1515
        %1541 = vmatpush.msra.mxu0 %v1513
        %1542 = vmatmul.f32.gmra.mxu0 %v1521
        %v1543 = vpop.f32.mrf.mxu0
        %v1544 = vadd.f32 0.0, %v1543
        %1545 = vmatmul.f32.gmra.mxu0 %v1524
        %v1546 = vpop.f32.mrf.mxu0
        %v1547 = vadd.f32 0.0, %v1546
        %1548 = vdwg.mxu0
        %1549 = vmatpush.msra.mxu0 0.0
        %1550 = vmatpush.msra.mxu0 0.0
        %1551 = vmatpush.msra.mxu0 0.0
        %1552 = vmatpush.msra.mxu0 0.0
        %1553 = vmatpush.msra.mxu0 0.0
        %1554 = vmatpush.msra.mxu0 0.0
        %1555 = vmatpush.msra.mxu0 0.0
        %1556 = vmatpush.msra.mxu0 0.0
        %1557 = vmatpush.msra.mxu0 0.0
        %1558 = vmatpush.msra.mxu0 0.0
        %1559 = vmatpush.msra.mxu0 0.0
        %1560 = vmatpush.msra.mxu0 0.0
        %1561 = vmatpush.msra.mxu0 0.0
        %1562 = vmatpush.msra.mxu0 0.0
        %1563 = vmatpush.msra.mxu0 %v1516
        %1564 = vmatpush.msra.mxu0 %v1514
        %1565 = vmatmul.f32.gmra.mxu0 %v1521
        %v1566 = vpop.f32.mrf.mxu0
        %v1567 = vadd.f32 0.0, %v1566
        %1568 = vmatmul.f32.gmra.mxu0 %v1524
        %v1569 = vpop.f32.mrf.mxu0
        %v1570 = vadd.f32 0.0, %v1569
        %1571 = vdwg.mxu0
        %v1572 = vadd.f32 %v1497, %v1544
        %v1573 = vadd.f32 %v1498, %v1567
        %v1574 = vadd.f32 %v1499, %v1547
        %v1575 = vadd.f32 %v1500, %v1570
        %1576 = vrot.lane.b32.xlu0 %v1297, 1
        %v1577 = vpop.permute.xlu0 %1576
        %1578 = vrot.lane.b32.xlu0 %v1299, 1
        %v1579 = vpop.permute.xlu0 %1578
        %1580 = vrot.lane.b32.xlu0 %v1298, 1
        %v1581 = vpop.permute.xlu0 %1580
        %1582 = vrot.lane.b32.xlu0 %v1300, 1
        %v1583 = vpop.permute.xlu0 %1582
        %v1584 = vsel %vm894, %v1577, %v1581
        %v1585 = vsel %vm894, %v1579, %v1583
        %v1586 = vsel %vm894, %v1581, %v1577
        %v1587 = vsel %vm894, %v1583, %v1579
        %v1588 = vmul.f32 %v1586, %v902
        %v1589 = vmul.f32 %v1584, %v903
        %v1590 = vmul.f32 %v1587, %v902
        %v1591 = vmul.f32 %v1585, %v903
        %s1592 = scalar_lea.vmem [#allocation7], 48
        %v1593 = vld [vmem:[%s1592] sm:$0xff]
        %v1594 = vld [vmem:[%s1592 + $0x8] sm:$0xff]
        %v1596 = vsel %vm615, %v1593, 0
        %v1599 = vsel %vm615, %v1594, 0
        %1601 = vmatpush.msra.mxu0 0.0
        %1602 = vmatpush.msra.mxu0 0.0
        %1603 = vmatpush.msra.mxu0 0.0
        %1604 = vmatpush.msra.mxu0 0.0
        %1605 = vmatpush.msra.mxu0 0.0
        %1606 = vmatpush.msra.mxu0 0.0
        %1607 = vmatpush.msra.mxu0 0.0
        %1608 = vmatpush.msra.mxu0 0.0
        %1609 = vmatpush.msra.mxu0 0.0
        %1610 = vmatpush.msra.mxu0 0.0
        %1611 = vmatpush.msra.mxu0 0.0
        %1612 = vmatpush.msra.mxu0 0.0
        %1613 = vmatpush.msra.mxu0 0.0
        %1614 = vmatpush.msra.mxu0 0.0
        %1615 = vmatpush.msra.mxu0 %v1590
        %1616 = vmatpush.msra.mxu0 %v1588
        %1617 = vmatmul.f32.gmra.mxu0 %v1596
        %v1618 = vpop.f32.mrf.mxu0
        %v1619 = vadd.f32 0.0, %v1618
        %1620 = vmatmul.f32.gmra.mxu0 %v1599
        %v1621 = vpop.f32.mrf.mxu0
        %v1622 = vadd.f32 0.0, %v1621
        %1623 = vdwg.mxu0
        %1624 = vmatpush.msra.mxu0 0.0
        %1625 = vmatpush.msra.mxu0 0.0
        %1626 = vmatpush.msra.mxu0 0.0
        %1627 = vmatpush.msra.mxu0 0.0
        %1628 = vmatpush.msra.mxu0 0.0
        %1629 = vmatpush.msra.mxu0 0.0
        %1630 = vmatpush.msra.mxu0 0.0
        %1631 = vmatpush.msra.mxu0 0.0
        %1632 = vmatpush.msra.mxu0 0.0
        %1633 = vmatpush.msra.mxu0 0.0
        %1634 = vmatpush.msra.mxu0 0.0
        %1635 = vmatpush.msra.mxu0 0.0
        %1636 = vmatpush.msra.mxu0 0.0
        %1637 = vmatpush.msra.mxu0 0.0
        %1638 = vmatpush.msra.mxu0 %v1591
        %1639 = vmatpush.msra.mxu0 %v1589
        %1640 = vmatmul.f32.gmra.mxu0 %v1596
        %v1641 = vpop.f32.mrf.mxu0
        %v1642 = vadd.f32 0.0, %v1641
        %1643 = vmatmul.f32.gmra.mxu0 %v1599
        %v1644 = vpop.f32.mrf.mxu0
        %v1645 = vadd.f32 0.0, %v1644
        %1646 = vdwg.mxu0
        %v1647 = vadd.f32 %v1572, %v1619
        %v1648 = vadd.f32 %v1573, %v1642
        %v1649 = vadd.f32 %v1574, %v1622
        %v1650 = vadd.f32 %v1575, %v1645
        %1651 = vrot.lane.b32.xlu0 %v1297, 127
        %v1652 = vpop.permute.xlu0 %1651
        %1653 = vrot.lane.b32.xlu0 %v1299, 127
        %v1654 = vpop.permute.xlu0 %1653
        %1655 = vrot.lane.b32.xlu0 %v1298, 127
        %v1656 = vpop.permute.xlu0 %1655
        %1657 = vrot.lane.b32.xlu0 %v1300, 127
        %v1658 = vpop.permute.xlu0 %1657
        %v1659 = vsel %vm977, %v1652, %v1656
        %v1660 = vsel %vm977, %v1654, %v1658
        %v1661 = vsel %vm977, %v1656, %v1652
        %v1662 = vsel %vm977, %v1658, %v1654
        %v1663 = vmul.f32 %v1659, %v985
        %v1664 = vmul.f32 %v1661, %v986
        %v1665 = vmul.f32 %v1660, %v985
        %v1666 = vmul.f32 %v1662, %v986
        %s1667 = scalar_lea.vmem [#allocation7], 80
        %v1668 = vld [vmem:[%s1667] sm:$0xff]
        %v1669 = vld [vmem:[%s1667 + $0x8] sm:$0xff]
        %v1671 = vsel %vm615, %v1668, 0
        %v1674 = vsel %vm615, %v1669, 0
        %1676 = vmatpush.msra.mxu0 0.0
        %1677 = vmatpush.msra.mxu0 0.0
        %1678 = vmatpush.msra.mxu0 0.0
        %1679 = vmatpush.msra.mxu0 0.0
        %1680 = vmatpush.msra.mxu0 0.0
        %1681 = vmatpush.msra.mxu0 0.0
        %1682 = vmatpush.msra.mxu0 0.0
        %1683 = vmatpush.msra.mxu0 0.0
        %1684 = vmatpush.msra.mxu0 0.0
        %1685 = vmatpush.msra.mxu0 0.0
        %1686 = vmatpush.msra.mxu0 0.0
        %1687 = vmatpush.msra.mxu0 0.0
        %1688 = vmatpush.msra.mxu0 0.0
        %1689 = vmatpush.msra.mxu0 0.0
        %1690 = vmatpush.msra.mxu0 %v1665
        %1691 = vmatpush.msra.mxu0 %v1663
        %1692 = vmatmul.f32.gmra.mxu0 %v1671
        %v1693 = vpop.f32.mrf.mxu0
        %v1694 = vadd.f32 0.0, %v1693
        %1695 = vmatmul.f32.gmra.mxu0 %v1674
        %v1696 = vpop.f32.mrf.mxu0
        %v1697 = vadd.f32 0.0, %v1696
        %1698 = vdwg.mxu0
        %1699 = vmatpush.msra.mxu0 0.0
        %1700 = vmatpush.msra.mxu0 0.0
        %1701 = vmatpush.msra.mxu0 0.0
        %1702 = vmatpush.msra.mxu0 0.0
        %1703 = vmatpush.msra.mxu0 0.0
        %1704 = vmatpush.msra.mxu0 0.0
        %1705 = vmatpush.msra.mxu0 0.0
        %1706 = vmatpush.msra.mxu0 0.0
        %1707 = vmatpush.msra.mxu0 0.0
        %1708 = vmatpush.msra.mxu0 0.0
        %1709 = vmatpush.msra.mxu0 0.0
        %1710 = vmatpush.msra.mxu0 0.0
        %1711 = vmatpush.msra.mxu0 0.0
        %1712 = vmatpush.msra.mxu0 0.0
        %1713 = vmatpush.msra.mxu0 %v1666
        %1714 = vmatpush.msra.mxu0 %v1664
        %1715 = vmatmul.f32.gmra.mxu0 %v1671
        %v1716 = vpop.f32.mrf.mxu0
        %v1717 = vadd.f32 0.0, %v1716
        %1718 = vmatmul.f32.gmra.mxu0 %v1674
        %v1719 = vpop.f32.mrf.mxu0
        %v1720 = vadd.f32 0.0, %v1719
        %1721 = vdwg.mxu0
        %v1722 = vadd.f32 %v1647, %v1694
        %v1723 = vadd.f32 %v1648, %v1717
        %v1724 = vadd.f32 %v1649, %v1697
        %v1725 = vadd.f32 %v1650, %v1720
        %1726 = vrot.lane.b32.xlu0 %v1297, 113
        %v1727 = vpop.permute.xlu0 %1726
        %1728 = vrot.lane.b32.xlu0 %v1299, 113
        %v1729 = vpop.permute.xlu0 %1728
        %1730 = vrot.lane.b32.xlu0 %v1298, 113
        %v1731 = vpop.permute.xlu0 %1730
        %1732 = vrot.lane.b32.xlu0 %v1300, 113
        %v1733 = vpop.permute.xlu0 %1732
        %v1734 = vsel %vm1060, %v1727, %v1731
        %v1735 = vsel %vm1060, %v1729, %v1733
        %v1736 = vsel %vm1060, %v1731, %v1727
        %v1737 = vsel %vm1060, %v1733, %v1729
        %v1738 = vmul.f32 %v1734, %v1068
        %v1739 = vmul.f32 %v1736, %v1069
        %v1740 = vmul.f32 %v1735, %v1068
        %v1741 = vmul.f32 %v1737, %v1069
        %s1742 = scalar_lea.vmem [#allocation7], 96
        %v1743 = vld [vmem:[%s1742] sm:$0xff]
        %v1744 = vld [vmem:[%s1742 + $0x8] sm:$0xff]
        %v1746 = vsel %vm615, %v1743, 0
        %v1749 = vsel %vm615, %v1744, 0
        %1751 = vmatpush.msra.mxu0 0.0
        %1752 = vmatpush.msra.mxu0 0.0
        %1753 = vmatpush.msra.mxu0 0.0
        %1754 = vmatpush.msra.mxu0 0.0
        %1755 = vmatpush.msra.mxu0 0.0
        %1756 = vmatpush.msra.mxu0 0.0
        %1757 = vmatpush.msra.mxu0 0.0
        %1758 = vmatpush.msra.mxu0 0.0
        %1759 = vmatpush.msra.mxu0 0.0
        %1760 = vmatpush.msra.mxu0 0.0
        %1761 = vmatpush.msra.mxu0 0.0
        %1762 = vmatpush.msra.mxu0 0.0
        %1763 = vmatpush.msra.mxu0 0.0
        %1764 = vmatpush.msra.mxu0 0.0
        %1765 = vmatpush.msra.mxu0 %v1740
        %1766 = vmatpush.msra.mxu0 %v1738
        %1767 = vmatmul.f32.gmra.mxu0 %v1746
        %v1768 = vpop.f32.mrf.mxu0
        %v1769 = vadd.f32 0.0, %v1768
        %1770 = vmatmul.f32.gmra.mxu0 %v1749
        %v1771 = vpop.f32.mrf.mxu0
        %v1772 = vadd.f32 0.0, %v1771
        %1773 = vdwg.mxu0
        %1774 = vmatpush.msra.mxu0 0.0
        %1775 = vmatpush.msra.mxu0 0.0
        %1776 = vmatpush.msra.mxu0 0.0
        %1777 = vmatpush.msra.mxu0 0.0
        %1778 = vmatpush.msra.mxu0 0.0
        %1779 = vmatpush.msra.mxu0 0.0
        %1780 = vmatpush.msra.mxu0 0.0
        %1781 = vmatpush.msra.mxu0 0.0
        %1782 = vmatpush.msra.mxu0 0.0
        %1783 = vmatpush.msra.mxu0 0.0
        %1784 = vmatpush.msra.mxu0 0.0
        %1785 = vmatpush.msra.mxu0 0.0
        %1786 = vmatpush.msra.mxu0 0.0
        %1787 = vmatpush.msra.mxu0 0.0
        %1788 = vmatpush.msra.mxu0 %v1741
        %1789 = vmatpush.msra.mxu0 %v1739
        %1790 = vmatmul.f32.gmra.mxu0 %v1746
        %v1791 = vpop.f32.mrf.mxu0
        %v1792 = vadd.f32 0.0, %v1791
        %1793 = vmatmul.f32.gmra.mxu0 %v1749
        %v1794 = vpop.f32.mrf.mxu0
        %v1795 = vadd.f32 0.0, %v1794
        %1796 = vdwg.mxu0
        %v1797 = vadd.f32 %v1722, %v1769
        %v1798 = vadd.f32 %v1723, %v1792
        %v1799 = vadd.f32 %v1724, %v1772
        %v1800 = vadd.f32 %v1725, %v1795
        %1801 = vrot.lane.b32.xlu0 %v1297, 112
        %v1802 = vpop.permute.xlu0 %1801
        %1803 = vrot.lane.b32.xlu0 %v1299, 112
        %v1804 = vpop.permute.xlu0 %1803
        %1805 = vrot.lane.b32.xlu0 %v1298, 112
        %v1806 = vpop.permute.xlu0 %1805
        %1807 = vrot.lane.b32.xlu0 %v1300, 112
        %v1808 = vpop.permute.xlu0 %1807
        %v1809 = vsel %vm1143, %v1802, %v1806
        %v1810 = vsel %vm1143, %v1804, %v1808
        %v1811 = vsel %vm1143, %v1806, %v1802
        %v1812 = vsel %vm1143, %v1808, %v1804
        %v1813 = vmul.f32 %v1809, %v1151
        %v1814 = vmul.f32 %v1811, %v1152
        %v1815 = vmul.f32 %v1810, %v1151
        %v1816 = vmul.f32 %v1812, %v1152
        %s1817 = scalar_lea.vmem [#allocation7], 112
        %v1818 = vld [vmem:[%s1817] sm:$0xff]
        %v1819 = vld [vmem:[%s1817 + $0x8] sm:$0xff]
        %v1821 = vsel %vm615, %v1818, 0
        %v1824 = vsel %vm615, %v1819, 0
        %1826 = vmatpush.msra.mxu0 0.0
        %1827 = vmatpush.msra.mxu0 0.0
        %1828 = vmatpush.msra.mxu0 0.0
        %1829 = vmatpush.msra.mxu0 0.0
        %1830 = vmatpush.msra.mxu0 0.0
        %1831 = vmatpush.msra.mxu0 0.0
        %1832 = vmatpush.msra.mxu0 0.0
        %1833 = vmatpush.msra.mxu0 0.0
        %1834 = vmatpush.msra.mxu0 0.0
        %1835 = vmatpush.msra.mxu0 0.0
        %1836 = vmatpush.msra.mxu0 0.0
        %1837 = vmatpush.msra.mxu0 0.0
        %1838 = vmatpush.msra.mxu0 0.0
        %1839 = vmatpush.msra.mxu0 0.0
        %1840 = vmatpush.msra.mxu0 %v1815
        %1841 = vmatpush.msra.mxu0 %v1813
        %1842 = vmatmul.f32.gmra.mxu0 %v1821
        %v1843 = vpop.f32.mrf.mxu0
        %v1844 = vadd.f32 0.0, %v1843
        %1845 = vmatmul.f32.gmra.mxu0 %v1824
        %v1846 = vpop.f32.mrf.mxu0
        %v1847 = vadd.f32 0.0, %v1846
        %1848 = vdwg.mxu0
        %1849 = vmatpush.msra.mxu0 0.0
        %1850 = vmatpush.msra.mxu0 0.0
        %1851 = vmatpush.msra.mxu0 0.0
        %1852 = vmatpush.msra.mxu0 0.0
        %1853 = vmatpush.msra.mxu0 0.0
        %1854 = vmatpush.msra.mxu0 0.0
        %1855 = vmatpush.msra.mxu0 0.0
        %1856 = vmatpush.msra.mxu0 0.0
        %1857 = vmatpush.msra.mxu0 0.0
        %1858 = vmatpush.msra.mxu0 0.0
        %1859 = vmatpush.msra.mxu0 0.0
        %1860 = vmatpush.msra.mxu0 0.0
        %1861 = vmatpush.msra.mxu0 0.0
        %1862 = vmatpush.msra.mxu0 0.0
        %1863 = vmatpush.msra.mxu0 %v1816
        %1864 = vmatpush.msra.mxu0 %v1814
        %1865 = vmatmul.f32.gmra.mxu0 %v1821
        %v1866 = vpop.f32.mrf.mxu0
        %v1867 = vadd.f32 0.0, %v1866
        %1868 = vmatmul.f32.gmra.mxu0 %v1824
        %v1869 = vpop.f32.mrf.mxu0
        %v1870 = vadd.f32 0.0, %v1869
        %1871 = vdwg.mxu0
        %v1872 = vadd.f32 %v1797, %v1844
        %v1873 = vadd.f32 %v1798, %v1867
        %v1874 = vadd.f32 %v1799, %v1847
        %v1875 = vadd.f32 %v1800, %v1870
        %1876 = vrot.lane.b32.xlu0 %v1297, 111
        %v1877 = vpop.permute.xlu0 %1876
        %1878 = vrot.lane.b32.xlu0 %v1299, 111
        %v1879 = vpop.permute.xlu0 %1878
        %1880 = vrot.lane.b32.xlu0 %v1298, 111
        %v1881 = vpop.permute.xlu0 %1880
        %1882 = vrot.lane.b32.xlu0 %v1300, 111
        %v1883 = vpop.permute.xlu0 %1882
        %v1884 = vsel %vm1226, %v1877, %v1881
        %v1885 = vsel %vm1226, %v1879, %v1883
        %v1886 = vsel %vm1226, %v1881, %v1877
        %v1887 = vsel %vm1226, %v1883, %v1879
        %v1888 = vmul.f32 %v1884, %v1234
        %v1889 = vmul.f32 %v1886, %v1235
        %v1890 = vmul.f32 %v1885, %v1234
        %v1891 = vmul.f32 %v1887, %v1235
        %s1892 = scalar_lea.vmem [#allocation7], 128
        %v1893 = vld [vmem:[%s1892] sm:$0xff]
        %v1894 = vld [vmem:[%s1892 + $0x8] sm:$0xff]
        %v1896 = vsel %vm615, %v1893, 0
        %v1899 = vsel %vm615, %v1894, 0
        %1901 = vmatpush.msra.mxu0 0.0
        %1902 = vmatpush.msra.mxu0 0.0
        %1903 = vmatpush.msra.mxu0 0.0
        %1904 = vmatpush.msra.mxu0 0.0
        %1905 = vmatpush.msra.mxu0 0.0
        %1906 = vmatpush.msra.mxu0 0.0
        %1907 = vmatpush.msra.mxu0 0.0
        %1908 = vmatpush.msra.mxu0 0.0
        %1909 = vmatpush.msra.mxu0 0.0
        %1910 = vmatpush.msra.mxu0 0.0
        %1911 = vmatpush.msra.mxu0 0.0
        %1912 = vmatpush.msra.mxu0 0.0
        %1913 = vmatpush.msra.mxu0 0.0
        %1914 = vmatpush.msra.mxu0 0.0
        %1915 = vmatpush.msra.mxu0 %v1890
        %1916 = vmatpush.msra.mxu0 %v1888
        %1917 = vmatmul.f32.gmra.mxu0 %v1896
        %v1918 = vpop.f32.mrf.mxu0
        %v1919 = vadd.f32 0.0, %v1918
        %1920 = vmatmul.f32.gmra.mxu0 %v1899
        %v1921 = vpop.f32.mrf.mxu0
        %v1922 = vadd.f32 0.0, %v1921
        %1923 = vdwg.mxu0
        %1924 = vmatpush.msra.mxu0 0.0
        %1925 = vmatpush.msra.mxu0 0.0
        %1926 = vmatpush.msra.mxu0 0.0
        %1927 = vmatpush.msra.mxu0 0.0
        %1928 = vmatpush.msra.mxu0 0.0
        %1929 = vmatpush.msra.mxu0 0.0
        %1930 = vmatpush.msra.mxu0 0.0
        %1931 = vmatpush.msra.mxu0 0.0
        %1932 = vmatpush.msra.mxu0 0.0
        %1933 = vmatpush.msra.mxu0 0.0
        %1934 = vmatpush.msra.mxu0 0.0
        %1935 = vmatpush.msra.mxu0 0.0
        %1936 = vmatpush.msra.mxu0 0.0
        %1937 = vmatpush.msra.mxu0 0.0
        %1938 = vmatpush.msra.mxu0 %v1891
        %1939 = vmatpush.msra.mxu0 %v1889
        %1940 = vmatmul.f32.gmra.mxu0 %v1896
        %v1941 = vpop.f32.mrf.mxu0
        %v1942 = vadd.f32 0.0, %v1941
        %1943 = vmatmul.f32.gmra.mxu0 %v1899
        %v1944 = vpop.f32.mrf.mxu0
        %v1945 = vadd.f32 0.0, %v1944
        %1946 = vdwg.mxu0
        %v1947 = vadd.f32 %v1872, %v1919
        %v1948 = vadd.f32 %v1873, %v1942
        %v1949 = vadd.f32 %v1874, %v1922
        %v1950 = vadd.f32 %v1875, %v1945
        %v1951 = vld [vmem:[%s7] sm:$0xff]
        %v1952 = vld [vmem:[%s7 + $0x8] sm:$0xff]
        %v1953 = vld [vmem:[%s8] sm:$0xff]
        %v1954 = vld [vmem:[%s8 + $0x8] sm:$0xff]
        %v1955 = vadd.f32 %v1947, %v1948
        %1956 = vadd.xlane.f32.xlu0 %v1955
        %v1957 = vpop.xlane.xlu0 %1956
        %v1958 = vadd.f32 %v1949, %v1950
        %1959 = vadd.xlane.f32.xlu0 %v1958
        %v1960 = vpop.xlane.xlu0 %1959
        %v1961 = vmul.f32 %v1947, %v1947
        %v1962 = vmul.f32 %v1948, %v1948
        %v1963 = vmul.f32 %v1949, %v1949
        %v1964 = vmul.f32 %v1950, %v1950
        %v1965 = vadd.f32 %v1961, %v1962
        %1966 = vadd.xlane.f32.xlu0 %v1965
        %v1967 = vpop.xlane.xlu0 %1966
        %v1968 = vadd.f32 %v1963, %v1964
        %1969 = vadd.xlane.f32.xlu0 %v1968
        %v1970 = vpop.xlane.xlu0 %1969
        %v1971 = vld [vmem:[%s6] sm:$0xff]
        %v1972 = vld [vmem:[%s6 + $0x8] sm:$0xff]
        %v1974 = vsel %vm615, %v1971, 0
        %v1977 = vsel %vm615, %v1972, 0
        %1979 = vmatpush.msra.mxu0 0.0
        %1980 = vmatpush.msra.mxu0 0.0
        %1981 = vmatpush.msra.mxu0 0.0
        %1982 = vmatpush.msra.mxu0 0.0
        %1983 = vmatpush.msra.mxu0 0.0
        %1984 = vmatpush.msra.mxu0 0.0
        %1985 = vmatpush.msra.mxu0 0.0
        %1986 = vmatpush.msra.mxu0 0.0
        %1987 = vmatpush.msra.mxu0 0.0
        %1988 = vmatpush.msra.mxu0 0.0
        %1989 = vmatpush.msra.mxu0 0.0
        %1990 = vmatpush.msra.mxu0 0.0
        %1991 = vmatpush.msra.mxu0 0.0
        %1992 = vmatpush.msra.mxu0 0.0
        %1993 = vmatpush.msra.mxu0 %v1960
        %1994 = vmatpush.msra.mxu0 %v1957
        %1995 = vmatmul.f32.gmra.mxu0 %v1974
        %v1996 = vpop.f32.mrf.mxu0
        %v1997 = vadd.f32 0.0, %v1996
        %1998 = vmatmul.f32.gmra.mxu0 %v1977
        %v1999 = vpop.f32.mrf.mxu0
        %v2000 = vadd.f32 0.0, %v1999
        %2001 = vdwg.mxu0
        %2002 = vmatpush.msra.mxu0 0.0
        %2003 = vmatpush.msra.mxu0 0.0
        %2004 = vmatpush.msra.mxu0 0.0
        %2005 = vmatpush.msra.mxu0 0.0
        %2006 = vmatpush.msra.mxu0 0.0
        %2007 = vmatpush.msra.mxu0 0.0
        %2008 = vmatpush.msra.mxu0 0.0
        %2009 = vmatpush.msra.mxu0 0.0
        %2010 = vmatpush.msra.mxu0 0.0
        %2011 = vmatpush.msra.mxu0 0.0
        %2012 = vmatpush.msra.mxu0 0.0
        %2013 = vmatpush.msra.mxu0 0.0
        %2014 = vmatpush.msra.mxu0 0.0
        %2015 = vmatpush.msra.mxu0 0.0
        %2016 = vmatpush.msra.mxu0 %v1970
        %2017 = vmatpush.msra.mxu0 %v1967
        %2018 = vmatmul.f32.gmra.mxu0 %v1974
        %v2019 = vpop.f32.mrf.mxu0
        %v2020 = vadd.f32 0.0, %v2019
        %2021 = vmatmul.f32.gmra.mxu0 %v1977
        %v2022 = vpop.f32.mrf.mxu0
        %v2023 = vadd.f32 0.0, %v2022
        %2024 = vdwg.mxu0
        %v2025 = vmul.f32 %v1997, %v1997
        %v2026 = vmul.f32 %v2000, %v2000
        %v2027 = vsub.f32 %v2020, %v2025
        %v2028 = vsub.f32 %v2023, %v2026
        %2030 = vset.pattern.permute.xlu0 0
        %2031 = vperm.xlu0 %2030, %v1997
        %v2032 = vpop.permute.xlu0 %2031
        %2035 = vset.pattern.permute.xlu0 0
        %2036 = vperm.xlu0 %2035, %v2000
        %v2037 = vpop.permute.xlu0 %2036
        %v2039 = vsub.f32 %v1947, %v2032
        %v2040 = vsub.f32 %v1948, %v2032
        %v2041 = vsub.f32 %v1949, %v2037
        %v2042 = vsub.f32 %v1950, %v2037
        %v2043 = vadd.f32 %v2027, 1e-05
        %v2044 = vadd.f32 %v2028, 1e-05
        %v2045 = vrsqrt.pop %v2043
        %v2046 = vmul.f32 %v2045, %v2043
        %v2047 = vmul.f32 %v2046, %v2045
        %v2048 = vmul.f32 0.5, %v2047
        %v2049 = vsub.f32 1.5, %v2048
        %v2050 = vmul.f32 %v2045, %v2049
        %vm2051 = vweird.f32 %v2043
        %vm2052 = vweird.f32 %v2045
        %vm2053 = vmor %vm2051, %vm2052
        %v2054 = vsel %vm2053, %v2045, %v2050
        %v2055 = vrsqrt.pop %v2044
        %v2056 = vmul.f32 %v2055, %v2044
        %v2057 = vmul.f32 %v2056, %v2055
        %v2058 = vmul.f32 0.5, %v2057
        %v2059 = vsub.f32 1.5, %v2058
        %v2060 = vmul.f32 %v2055, %v2059
        %vm2061 = vweird.f32 %v2044
        %vm2062 = vweird.f32 %v2055
        %vm2063 = vmor %vm2061, %vm2062
        %v2064 = vsel %vm2063, %v2055, %v2060
        %v2065 = vmul.f32 %v2054, %v1951
        %v2066 = vmul.f32 %v2064, %v1952
        %2068 = vset.pattern.permute.xlu0 0
        %2069 = vperm.xlu0 %2068, %v2065
        %v2070 = vpop.permute.xlu0 %2069
        %2073 = vset.pattern.permute.xlu0 0
        %2074 = vperm.xlu0 %2073, %v2066
        %v2075 = vpop.permute.xlu0 %2074
        %v2077 = vmul.f32 %v2039, %v2070
        %v2078 = vmul.f32 %v2040, %v2070
        %v2079 = vmul.f32 %v2041, %v2075
        %v2080 = vmul.f32 %v2042, %v2075
        %2082 = vset.pattern.permute.xlu0 0
        %2083 = vperm.xlu0 %2082, %v1953
        %v2084 = vpop.permute.xlu0 %2083
        %2087 = vset.pattern.permute.xlu0 0
        %2088 = vperm.xlu0 %2087, %v1954
        %v2089 = vpop.permute.xlu0 %2088
        %v2091 = vadd.f32 %v2077, %v2084
        %v2092 = vadd.f32 %v2078, %v2084
        %v2093 = vadd.f32 %v2079, %v2089
        %v2094 = vadd.f32 %v2080, %v2089
        %v2095 = vmul.f32 %v2091, 0.5
        %v2096 = vmul.f32 %v2092, 0.5
        %v2097 = vmul.f32 %v2093, 0.5
        %v2098 = vmul.f32 %v2094, 0.5
        %v2099 = vmul.f32 %v2091, 0.044715
        %v2100 = vmul.f32 %v2092, 0.044715
        %v2101 = vmul.f32 %v2093, 0.044715
        %v2102 = vmul.f32 %v2094, 0.044715
        %v2103 = vmul.f32 %v2099, %v2091
        %v2104 = vmul.f32 %v2100, %v2092
        %v2105 = vmul.f32 %v2101, %v2093
        %v2106 = vmul.f32 %v2102, %v2094
        %v2107 = vmul.f32 %v2103, %v2091
        %v2108 = vmul.f32 %v2104, %v2092
        %v2109 = vmul.f32 %v2105, %v2093
        %v2110 = vmul.f32 %v2106, %v2094
        %v2111 = vadd.f32 %v2091, %v2107
        %v2112 = vadd.f32 %v2092, %v2108
        %v2113 = vadd.f32 %v2093, %v2109
        %v2114 = vadd.f32 %v2094, %v2110
        %v2115 = vmul.f32 %v2111, 0.7978846
        %v2116 = vmul.f32 %v2112, 0.7978846
        %v2117 = vmul.f32 %v2113, 0.7978846
        %v2118 = vmul.f32 %v2114, 0.7978846
        %v2119 = vtanh.pop %v2115
        %v2120 = vtanh.pop %v2116
        %v2121 = vtanh.pop %v2117
        %v2122 = vtanh.pop %v2118
        %v2123 = vadd.f32 %v2119, 1.0
        %v2124 = vadd.f32 %v2120, 1.0
        %v2125 = vadd.f32 %v2121, 1.0
        %v2126 = vadd.f32 %v2122, 1.0
        %v2127 = vmul.f32 %v2095, %v2123
        %v2128 = vmul.f32 %v2096, %v2124
        %v2129 = vmul.f32 %v2097, %v2125
        %v2130 = vmul.f32 %v2098, %v2126
        %s2131 = scalar_lea.vmem [#allocation8], 64
        %v2132 = vld [vmem:[%s2131] sm:$0xff]
        %v2133 = vld [vmem:[%s2131 + $0x8] sm:$0xff]
        %2134 = vrot.lane.b32.xlu0 %v2127, 17
        %v2135 = vpop.permute.xlu0 %2134
        %2136 = vrot.lane.b32.xlu0 %v2129, 17
        %v2137 = vpop.permute.xlu0 %2136
        %2138 = vrot.lane.b32.xlu0 %v2128, 17
        %v2139 = vpop.permute.xlu0 %2138
        %2140 = vrot.lane.b32.xlu0 %v2130, 17
        %v2141 = vpop.permute.xlu0 %2140
        %v2142 = vsel %vm598, %v2135, %v2139
        %v2143 = vsel %vm598, %v2137, %v2141
        %v2144 = vsel %vm598, %v2139, %v2135
        %v2145 = vsel %vm598, %v2141, %v2137
        %v2146 = vmul.f32 %v2144, %v605
        %v2147 = vmul.f32 %v2142, %v606
        %v2148 = vmul.f32 %v2145, %v605
        %v2149 = vmul.f32 %v2143, %v606
        %v2150 = vld [vmem:[#allocation8] sm:$0xff]
        %v2151 = vld [vmem:[#allocation8 + $0x8] sm:$0xff]
        %v2153 = vsel %vm615, %v2150, 0
        %v2156 = vsel %vm615, %v2151, 0
        %2158 = vmatpush.msra.mxu0 0.0
        %2159 = vmatpush.msra.mxu0 0.0
        %2160 = vmatpush.msra.mxu0 0.0
        %2161 = vmatpush.msra.mxu0 0.0
        %2162 = vmatpush.msra.mxu0 0.0
        %2163 = vmatpush.msra.mxu0 0.0
        %2164 = vmatpush.msra.mxu0 0.0
        %2165 = vmatpush.msra.mxu0 0.0
        %2166 = vmatpush.msra.mxu0 0.0
        %2167 = vmatpush.msra.mxu0 0.0
        %2168 = vmatpush.msra.mxu0 0.0
        %2169 = vmatpush.msra.mxu0 0.0
        %2170 = vmatpush.msra.mxu0 0.0
        %2171 = vmatpush.msra.mxu0 0.0
        %2172 = vmatpush.msra.mxu0 %v2148
        %2173 = vmatpush.msra.mxu0 %v2146
        %2174 = vmatmul.f32.gmra.mxu0 %v2153
        %v2175 = vpop.f32.mrf.mxu0
        %v2176 = vadd.f32 0.0, %v2175
        %2177 = vmatmul.f32.gmra.mxu0 %v2156
        %v2178 = vpop.f32.mrf.mxu0
        %v2179 = vadd.f32 0.0, %v2178
        %2180 = vdwg.mxu0
        %2181 = vmatpush.msra.mxu0 0.0
        %2182 = vmatpush.msra.mxu0 0.0
        %2183 = vmatpush.msra.mxu0 0.0
        %2184 = vmatpush.msra.mxu0 0.0
        %2185 = vmatpush.msra.mxu0 0.0
        %2186 = vmatpush.msra.mxu0 0.0
        %2187 = vmatpush.msra.mxu0 0.0
        %2188 = vmatpush.msra.mxu0 0.0
        %2189 = vmatpush.msra.mxu0 0.0
        %2190 = vmatpush.msra.mxu0 0.0
        %2191 = vmatpush.msra.mxu0 0.0
        %2192 = vmatpush.msra.mxu0 0.0
        %2193 = vmatpush.msra.mxu0 0.0
        %2194 = vmatpush.msra.mxu0 0.0
        %2195 = vmatpush.msra.mxu0 %v2149
        %2196 = vmatpush.msra.mxu0 %v2147
        %2197 = vmatmul.f32.gmra.mxu0 %v2153
        %v2198 = vpop.f32.mrf.mxu0
        %v2199 = vadd.f32 0.0, %v2198
        %2200 = vmatmul.f32.gmra.mxu0 %v2156
        %v2201 = vpop.f32.mrf.mxu0
        %v2202 = vadd.f32 0.0, %v2201
        %2203 = vdwg.mxu0
        %v2205 = vsel %vm615, %v2132, 0
        %v2208 = vsel %vm615, %v2133, 0
        %2210 = vmatpush.msra.mxu0 0.0
        %2211 = vmatpush.msra.mxu0 0.0
        %2212 = vmatpush.msra.mxu0 0.0
        %2213 = vmatpush.msra.mxu0 0.0
        %2214 = vmatpush.msra.mxu0 0.0
        %2215 = vmatpush.msra.mxu0 0.0
        %2216 = vmatpush.msra.mxu0 0.0
        %2217 = vmatpush.msra.mxu0 0.0
        %2218 = vmatpush.msra.mxu0 0.0
        %2219 = vmatpush.msra.mxu0 0.0
        %2220 = vmatpush.msra.mxu0 0.0
        %2221 = vmatpush.msra.mxu0 0.0
        %2222 = vmatpush.msra.mxu0 0.0
        %2223 = vmatpush.msra.mxu0 0.0
        %2224 = vmatpush.msra.mxu0 %v2129
        %2225 = vmatpush.msra.mxu0 %v2127
        %2226 = vmatmul.f32.gmra.mxu0 %v2205
        %v2227 = vpop.f32.mrf.mxu0
        %v2228 = vadd.f32 %v2176, %v2227
        %2229 = vmatmul.f32.gmra.mxu0 %v2208
        %v2230 = vpop.f32.mrf.mxu0
        %v2231 = vadd.f32 %v2179, %v2230
        %2232 = vdwg.mxu0
        %2233 = vmatpush.msra.mxu0 0.0
        %2234 = vmatpush.msra.mxu0 0.0
        %2235 = vmatpush.msra.mxu0 0.0
        %2236 = vmatpush.msra.mxu0 0.0
        %2237 = vmatpush.msra.mxu0 0.0
        %2238 = vmatpush.msra.mxu0 0.0
        %2239 = vmatpush.msra.mxu0 0.0
        %2240 = vmatpush.msra.mxu0 0.0
        %2241 = vmatpush.msra.mxu0 0.0
        %2242 = vmatpush.msra.mxu0 0.0
        %2243 = vmatpush.msra.mxu0 0.0
        %2244 = vmatpush.msra.mxu0 0.0
        %2245 = vmatpush.msra.mxu0 0.0
        %2246 = vmatpush.msra.mxu0 0.0
        %2247 = vmatpush.msra.mxu0 %v2130
        %2248 = vmatpush.msra.mxu0 %v2128
        %2249 = vmatmul.f32.gmra.mxu0 %v2205
        %v2250 = vpop.f32.mrf.mxu0
        %v2251 = vadd.f32 %v2199, %v2250
        %2252 = vmatmul.f32.gmra.mxu0 %v2208
        %v2253 = vpop.f32.mrf.mxu0
        %v2254 = vadd.f32 %v2202, %v2253
        %2255 = vdwg.mxu0
        %2256 = vrot.lane.b32.xlu0 %v2127, 16
        %v2257 = vpop.permute.xlu0 %2256
        %2258 = vrot.lane.b32.xlu0 %v2129, 16
        %v2259 = vpop.permute.xlu0 %2258
        %2260 = vrot.lane.b32.xlu0 %v2128, 16
        %v2261 = vpop.permute.xlu0 %2260
        %2262 = vrot.lane.b32.xlu0 %v2130, 16
        %v2263 = vpop.permute.xlu0 %2262
        %v2264 = vsel %vm728, %v2257, %v2261
        %v2265 = vsel %vm728, %v2259, %v2263
        %v2266 = vsel %vm728, %v2261, %v2257
        %v2267 = vsel %vm728, %v2263, %v2259
        %v2268 = vmul.f32 %v2266, %v736
        %v2269 = vmul.f32 %v2264, %v737
        %v2270 = vmul.f32 %v2267, %v736
        %v2271 = vmul.f32 %v2265, %v737
        %s2272 = scalar_lea.vmem [#allocation8], 16
        %v2273 = vld [vmem:[%s2272] sm:$0xff]
        %v2274 = vld [vmem:[%s2272 + $0x8] sm:$0xff]
        %v2276 = vsel %vm615, %v2273, 0
        %v2279 = vsel %vm615, %v2274, 0
        %2281 = vmatpush.msra.mxu0 0.0
        %2282 = vmatpush.msra.mxu0 0.0
        %2283 = vmatpush.msra.mxu0 0.0
        %2284 = vmatpush.msra.mxu0 0.0
        %2285 = vmatpush.msra.mxu0 0.0
        %2286 = vmatpush.msra.mxu0 0.0
        %2287 = vmatpush.msra.mxu0 0.0
        %2288 = vmatpush.msra.mxu0 0.0
        %2289 = vmatpush.msra.mxu0 0.0
        %2290 = vmatpush.msra.mxu0 0.0
        %2291 = vmatpush.msra.mxu0 0.0
        %2292 = vmatpush.msra.mxu0 0.0
        %2293 = vmatpush.msra.mxu0 0.0
        %2294 = vmatpush.msra.mxu0 0.0
        %2295 = vmatpush.msra.mxu0 %v2270
        %2296 = vmatpush.msra.mxu0 %v2268
        %2297 = vmatmul.f32.gmra.mxu0 %v2276
        %v2298 = vpop.f32.mrf.mxu0
        %v2299 = vadd.f32 0.0, %v2298
        %2300 = vmatmul.f32.gmra.mxu0 %v2279
        %v2301 = vpop.f32.mrf.mxu0
        %v2302 = vadd.f32 0.0, %v2301
        %2303 = vdwg.mxu0
        %2304 = vmatpush.msra.mxu0 0.0
        %2305 = vmatpush.msra.mxu0 0.0
        %2306 = vmatpush.msra.mxu0 0.0
        %2307 = vmatpush.msra.mxu0 0.0
        %2308 = vmatpush.msra.mxu0 0.0
        %2309 = vmatpush.msra.mxu0 0.0
        %2310 = vmatpush.msra.mxu0 0.0
        %2311 = vmatpush.msra.mxu0 0.0
        %2312 = vmatpush.msra.mxu0 0.0
        %2313 = vmatpush.msra.mxu0 0.0
        %2314 = vmatpush.msra.mxu0 0.0
        %2315 = vmatpush.msra.mxu0 0.0
        %2316 = vmatpush.msra.mxu0 0.0
        %2317 = vmatpush.msra.mxu0 0.0
        %2318 = vmatpush.msra.mxu0 %v2271
        %2319 = vmatpush.msra.mxu0 %v2269
        %2320 = vmatmul.f32.gmra.mxu0 %v2276
        %v2321 = vpop.f32.mrf.mxu0
        %v2322 = vadd.f32 0.0, %v2321
        %2323 = vmatmul.f32.gmra.mxu0 %v2279
        %v2324 = vpop.f32.mrf.mxu0
        %v2325 = vadd.f32 0.0, %v2324
        %2326 = vdwg.mxu0
        %v2327 = vadd.f32 %v2228, %v2299
        %v2328 = vadd.f32 %v2251, %v2322
        %v2329 = vadd.f32 %v2231, %v2302
        %v2330 = vadd.f32 %v2254, %v2325
        %2331 = vrot.lane.b32.xlu0 %v2127, 15
        %v2332 = vpop.permute.xlu0 %2331
        %2333 = vrot.lane.b32.xlu0 %v2129, 15
        %v2334 = vpop.permute.xlu0 %2333
        %2335 = vrot.lane.b32.xlu0 %v2128, 15
        %v2336 = vpop.permute.xlu0 %2335
        %2337 = vrot.lane.b32.xlu0 %v2130, 15
        %v2338 = vpop.permute.xlu0 %2337
        %v2339 = vsel %vm811, %v2332, %v2336
        %v2340 = vsel %vm811, %v2334, %v2338
        %v2341 = vsel %vm811, %v2336, %v2332
        %v2342 = vsel %vm811, %v2338, %v2334
        %v2343 = vmul.f32 %v2341, %v819
        %v2344 = vmul.f32 %v2339, %v820
        %v2345 = vmul.f32 %v2342, %v819
        %v2346 = vmul.f32 %v2340, %v820
        %s2347 = scalar_lea.vmem [#allocation8], 32
        %v2348 = vld [vmem:[%s2347] sm:$0xff]
        %v2349 = vld [vmem:[%s2347 + $0x8] sm:$0xff]
        %v2351 = vsel %vm615, %v2348, 0
        %v2354 = vsel %vm615, %v2349, 0
        %2356 = vmatpush.msra.mxu0 0.0
        %2357 = vmatpush.msra.mxu0 0.0
        %2358 = vmatpush.msra.mxu0 0.0
        %2359 = vmatpush.msra.mxu0 0.0
        %2360 = vmatpush.msra.mxu0 0.0
        %2361 = vmatpush.msra.mxu0 0.0
        %2362 = vmatpush.msra.mxu0 0.0
        %2363 = vmatpush.msra.mxu0 0.0
        %2364 = vmatpush.msra.mxu0 0.0
        %2365 = vmatpush.msra.mxu0 0.0
        %2366 = vmatpush.msra.mxu0 0.0
        %2367 = vmatpush.msra.mxu0 0.0
        %2368 = vmatpush.msra.mxu0 0.0
        %2369 = vmatpush.msra.mxu0 0.0
        %2370 = vmatpush.msra.mxu0 %v2345
        %2371 = vmatpush.msra.mxu0 %v2343
        %2372 = vmatmul.f32.gmra.mxu0 %v2351
        %v2373 = vpop.f32.mrf.mxu0
        %v2374 = vadd.f32 0.0, %v2373
        %2375 = vmatmul.f32.gmra.mxu0 %v2354
        %v2376 = vpop.f32.mrf.mxu0
        %v2377 = vadd.f32 0.0, %v2376
        %2378 = vdwg.mxu0
        %2379 = vmatpush.msra.mxu0 0.0
        %2380 = vmatpush.msra.mxu0 0.0
        %2381 = vmatpush.msra.mxu0 0.0
        %2382 = vmatpush.msra.mxu0 0.0
        %2383 = vmatpush.msra.mxu0 0.0
        %2384 = vmatpush.msra.mxu0 0.0
        %2385 = vmatpush.msra.mxu0 0.0
        %2386 = vmatpush.msra.mxu0 0.0
        %2387 = vmatpush.msra.mxu0 0.0
        %2388 = vmatpush.msra.mxu0 0.0
        %2389 = vmatpush.msra.mxu0 0.0
        %2390 = vmatpush.msra.mxu0 0.0
        %2391 = vmatpush.msra.mxu0 0.0
        %2392 = vmatpush.msra.mxu0 0.0
        %2393 = vmatpush.msra.mxu0 %v2346
        %2394 = vmatpush.msra.mxu0 %v2344
        %2395 = vmatmul.f32.gmra.mxu0 %v2351
        %v2396 = vpop.f32.mrf.mxu0
        %v2397 = vadd.f32 0.0, %v2396
        %2398 = vmatmul.f32.gmra.mxu0 %v2354
        %v2399 = vpop.f32.mrf.mxu0
        %v2400 = vadd.f32 0.0, %v2399
        %2401 = vdwg.mxu0
        %v2402 = vadd.f32 %v2327, %v2374
        %v2403 = vadd.f32 %v2328, %v2397
        %v2404 = vadd.f32 %v2329, %v2377
        %v2405 = vadd.f32 %v2330, %v2400
        %2406 = vrot.lane.b32.xlu0 %v2127, 1
        %v2407 = vpop.permute.xlu0 %2406
        %2408 = vrot.lane.b32.xlu0 %v2129, 1
        %v2409 = vpop.permute.xlu0 %2408
        %2410 = vrot.lane.b32.xlu0 %v2128, 1
        %v2411 = vpop.permute.xlu0 %2410
        %2412 = vrot.lane.b32.xlu0 %v2130, 1
        %v2413 = vpop.permute.xlu0 %2412
        %v2414 = vsel %vm894, %v2407, %v2411
        %v2415 = vsel %vm894, %v2409, %v2413
        %v2416 = vsel %vm894, %v2411, %v2407
        %v2417 = vsel %vm894, %v2413, %v2409
        %v2418 = vmul.f32 %v2416, %v902
        %v2419 = vmul.f32 %v2414, %v903
        %v2420 = vmul.f32 %v2417, %v902
        %v2421 = vmul.f32 %v2415, %v903
        %s2422 = scalar_lea.vmem [#allocation8], 48
        %v2423 = vld [vmem:[%s2422] sm:$0xff]
        %v2424 = vld [vmem:[%s2422 + $0x8] sm:$0xff]
        %v2426 = vsel %vm615, %v2423, 0
        %v2429 = vsel %vm615, %v2424, 0
        %2431 = vmatpush.msra.mxu0 0.0
        %2432 = vmatpush.msra.mxu0 0.0
        %2433 = vmatpush.msra.mxu0 0.0
        %2434 = vmatpush.msra.mxu0 0.0
        %2435 = vmatpush.msra.mxu0 0.0
        %2436 = vmatpush.msra.mxu0 0.0
        %2437 = vmatpush.msra.mxu0 0.0
        %2438 = vmatpush.msra.mxu0 0.0
        %2439 = vmatpush.msra.mxu0 0.0
        %2440 = vmatpush.msra.mxu0 0.0
        %2441 = vmatpush.msra.mxu0 0.0
        %2442 = vmatpush.msra.mxu0 0.0
        %2443 = vmatpush.msra.mxu0 0.0
        %2444 = vmatpush.msra.mxu0 0.0
        %2445 = vmatpush.msra.mxu0 %v2420
        %2446 = vmatpush.msra.mxu0 %v2418
        %2447 = vmatmul.f32.gmra.mxu0 %v2426
        %v2448 = vpop.f32.mrf.mxu0
        %v2449 = vadd.f32 0.0, %v2448
        %2450 = vmatmul.f32.gmra.mxu0 %v2429
        %v2451 = vpop.f32.mrf.mxu0
        %v2452 = vadd.f32 0.0, %v2451
        %2453 = vdwg.mxu0
        %2454 = vmatpush.msra.mxu0 0.0
        %2455 = vmatpush.msra.mxu0 0.0
        %2456 = vmatpush.msra.mxu0 0.0
        %2457 = vmatpush.msra.mxu0 0.0
        %2458 = vmatpush.msra.mxu0 0.0
        %2459 = vmatpush.msra.mxu0 0.0
        %2460 = vmatpush.msra.mxu0 0.0
        %2461 = vmatpush.msra.mxu0 0.0
        %2462 = vmatpush.msra.mxu0 0.0
        %2463 = vmatpush.msra.mxu0 0.0
        %2464 = vmatpush.msra.mxu0 0.0
        %2465 = vmatpush.msra.mxu0 0.0
        %2466 = vmatpush.msra.mxu0 0.0
        %2467 = vmatpush.msra.mxu0 0.0
        %2468 = vmatpush.msra.mxu0 %v2421
        %2469 = vmatpush.msra.mxu0 %v2419
        %2470 = vmatmul.f32.gmra.mxu0 %v2426
        %v2471 = vpop.f32.mrf.mxu0
        %v2472 = vadd.f32 0.0, %v2471
        %2473 = vmatmul.f32.gmra.mxu0 %v2429
        %v2474 = vpop.f32.mrf.mxu0
        %v2475 = vadd.f32 0.0, %v2474
        %2476 = vdwg.mxu0
        %v2477 = vadd.f32 %v2402, %v2449
        %v2478 = vadd.f32 %v2403, %v2472
        %v2479 = vadd.f32 %v2404, %v2452
        %v2480 = vadd.f32 %v2405, %v2475
        %2481 = vrot.lane.b32.xlu0 %v2127, 127
        %v2482 = vpop.permute.xlu0 %2481
        %2483 = vrot.lane.b32.xlu0 %v2129, 127
        %v2484 = vpop.permute.xlu0 %2483
        %2485 = vrot.lane.b32.xlu0 %v2128, 127
        %v2486 = vpop.permute.xlu0 %2485
        %2487 = vrot.lane.b32.xlu0 %v2130, 127
        %v2488 = vpop.permute.xlu0 %2487
        %v2489 = vsel %vm977, %v2482, %v2486
        %v2490 = vsel %vm977, %v2484, %v2488
        %v2491 = vsel %vm977, %v2486, %v2482
        %v2492 = vsel %vm977, %v2488, %v2484
        %v2493 = vmul.f32 %v2489, %v985
        %v2494 = vmul.f32 %v2491, %v986
        %v2495 = vmul.f32 %v2490, %v985
        %v2496 = vmul.f32 %v2492, %v986
        %s2497 = scalar_lea.vmem [#allocation8], 80
        %v2498 = vld [vmem:[%s2497] sm:$0xff]
        %v2499 = vld [vmem:[%s2497 + $0x8] sm:$0xff]
        %v2501 = vsel %vm615, %v2498, 0
        %v2504 = vsel %vm615, %v2499, 0
        %2506 = vmatpush.msra.mxu0 0.0
        %2507 = vmatpush.msra.mxu0 0.0
        %2508 = vmatpush.msra.mxu0 0.0
        %2509 = vmatpush.msra.mxu0 0.0
        %2510 = vmatpush.msra.mxu0 0.0
        %2511 = vmatpush.msra.mxu0 0.0
        %2512 = vmatpush.msra.mxu0 0.0
        %2513 = vmatpush.msra.mxu0 0.0
        %2514 = vmatpush.msra.mxu0 0.0
        %2515 = vmatpush.msra.mxu0 0.0
        %2516 = vmatpush.msra.mxu0 0.0
        %2517 = vmatpush.msra.mxu0 0.0
        %2518 = vmatpush.msra.mxu0 0.0
        %2519 = vmatpush.msra.mxu0 0.0
        %2520 = vmatpush.msra.mxu0 %v2495
        %2521 = vmatpush.msra.mxu0 %v2493
        %2522 = vmatmul.f32.gmra.mxu0 %v2501
        %v2523 = vpop.f32.mrf.mxu0
        %v2524 = vadd.f32 0.0, %v2523
        %2525 = vmatmul.f32.gmra.mxu0 %v2504
        %v2526 = vpop.f32.mrf.mxu0
        %v2527 = vadd.f32 0.0, %v2526
        %2528 = vdwg.mxu0
        %2529 = vmatpush.msra.mxu0 0.0
        %2530 = vmatpush.msra.mxu0 0.0
        %2531 = vmatpush.msra.mxu0 0.0
        %2532 = vmatpush.msra.mxu0 0.0
        %2533 = vmatpush.msra.mxu0 0.0
        %2534 = vmatpush.msra.mxu0 0.0
        %2535 = vmatpush.msra.mxu0 0.0
        %2536 = vmatpush.msra.mxu0 0.0
        %2537 = vmatpush.msra.mxu0 0.0
        %2538 = vmatpush.msra.mxu0 0.0
        %2539 = vmatpush.msra.mxu0 0.0
        %2540 = vmatpush.msra.mxu0 0.0
        %2541 = vmatpush.msra.mxu0 0.0
        %2542 = vmatpush.msra.mxu0 0.0
        %2543 = vmatpush.msra.mxu0 %v2496
        %2544 = vmatpush.msra.mxu0 %v2494
        %2545 = vmatmul.f32.gmra.mxu0 %v2501
        %v2546 = vpop.f32.mrf.mxu0
        %v2547 = vadd.f32 0.0, %v2546
        %2548 = vmatmul.f32.gmra.mxu0 %v2504
        %v2549 = vpop.f32.mrf.mxu0
        %v2550 = vadd.f32 0.0, %v2549
        %2551 = vdwg.mxu0
        %v2552 = vadd.f32 %v2477, %v2524
        %v2553 = vadd.f32 %v2478, %v2547
        %v2554 = vadd.f32 %v2479, %v2527
        %v2555 = vadd.f32 %v2480, %v2550
        %2556 = vrot.lane.b32.xlu0 %v2127, 113
        %v2557 = vpop.permute.xlu0 %2556
        %2558 = vrot.lane.b32.xlu0 %v2129, 113
        %v2559 = vpop.permute.xlu0 %2558
        %2560 = vrot.lane.b32.xlu0 %v2128, 113
        %v2561 = vpop.permute.xlu0 %2560
        %2562 = vrot.lane.b32.xlu0 %v2130, 113
        %v2563 = vpop.permute.xlu0 %2562
        %v2564 = vsel %vm1060, %v2557, %v2561
        %v2565 = vsel %vm1060, %v2559, %v2563
        %v2566 = vsel %vm1060, %v2561, %v2557
        %v2567 = vsel %vm1060, %v2563, %v2559
        %v2568 = vmul.f32 %v2564, %v1068
        %v2569 = vmul.f32 %v2566, %v1069
        %v2570 = vmul.f32 %v2565, %v1068
        %v2571 = vmul.f32 %v2567, %v1069
        %s2572 = scalar_lea.vmem [#allocation8], 96
        %v2573 = vld [vmem:[%s2572] sm:$0xff]
        %v2574 = vld [vmem:[%s2572 + $0x8] sm:$0xff]
        %v2576 = vsel %vm615, %v2573, 0
        %v2579 = vsel %vm615, %v2574, 0
        %2581 = vmatpush.msra.mxu0 0.0
        %2582 = vmatpush.msra.mxu0 0.0
        %2583 = vmatpush.msra.mxu0 0.0
        %2584 = vmatpush.msra.mxu0 0.0
        %2585 = vmatpush.msra.mxu0 0.0
        %2586 = vmatpush.msra.mxu0 0.0
        %2587 = vmatpush.msra.mxu0 0.0
        %2588 = vmatpush.msra.mxu0 0.0
        %2589 = vmatpush.msra.mxu0 0.0
        %2590 = vmatpush.msra.mxu0 0.0
        %2591 = vmatpush.msra.mxu0 0.0
        %2592 = vmatpush.msra.mxu0 0.0
        %2593 = vmatpush.msra.mxu0 0.0
        %2594 = vmatpush.msra.mxu0 0.0
        %2595 = vmatpush.msra.mxu0 %v2570
        %2596 = vmatpush.msra.mxu0 %v2568
        %2597 = vmatmul.f32.gmra.mxu0 %v2576
        %v2598 = vpop.f32.mrf.mxu0
        %v2599 = vadd.f32 0.0, %v2598
        %2600 = vmatmul.f32.gmra.mxu0 %v2579
        %v2601 = vpop.f32.mrf.mxu0
        %v2602 = vadd.f32 0.0, %v2601
        %2603 = vdwg.mxu0
        %2604 = vmatpush.msra.mxu0 0.0
        %2605 = vmatpush.msra.mxu0 0.0
        %2606 = vmatpush.msra.mxu0 0.0
        %2607 = vmatpush.msra.mxu0 0.0
        %2608 = vmatpush.msra.mxu0 0.0
        %2609 = vmatpush.msra.mxu0 0.0
        %2610 = vmatpush.msra.mxu0 0.0
        %2611 = vmatpush.msra.mxu0 0.0
        %2612 = vmatpush.msra.mxu0 0.0
        %2613 = vmatpush.msra.mxu0 0.0
        %2614 = vmatpush.msra.mxu0 0.0
        %2615 = vmatpush.msra.mxu0 0.0
        %2616 = vmatpush.msra.mxu0 0.0
        %2617 = vmatpush.msra.mxu0 0.0
        %2618 = vmatpush.msra.mxu0 %v2571
        %2619 = vmatpush.msra.mxu0 %v2569
        %2620 = vmatmul.f32.gmra.mxu0 %v2576
        %v2621 = vpop.f32.mrf.mxu0
        %v2622 = vadd.f32 0.0, %v2621
        %2623 = vmatmul.f32.gmra.mxu0 %v2579
        %v2624 = vpop.f32.mrf.mxu0
        %v2625 = vadd.f32 0.0, %v2624
        %2626 = vdwg.mxu0
        %v2627 = vadd.f32 %v2552, %v2599
        %v2628 = vadd.f32 %v2553, %v2622
        %v2629 = vadd.f32 %v2554, %v2602
        %v2630 = vadd.f32 %v2555, %v2625
        %2631 = vrot.lane.b32.xlu0 %v2127, 112
        %v2632 = vpop.permute.xlu0 %2631
        %2633 = vrot.lane.b32.xlu0 %v2129, 112
        %v2634 = vpop.permute.xlu0 %2633
        %2635 = vrot.lane.b32.xlu0 %v2128, 112
        %v2636 = vpop.permute.xlu0 %2635
        %2637 = vrot.lane.b32.xlu0 %v2130, 112
        %v2638 = vpop.permute.xlu0 %2637
        %v2639 = vsel %vm1143, %v2632, %v2636
        %v2640 = vsel %vm1143, %v2634, %v2638
        %v2641 = vsel %vm1143, %v2636, %v2632
        %v2642 = vsel %vm1143, %v2638, %v2634
        %v2643 = vmul.f32 %v2639, %v1151
        %v2644 = vmul.f32 %v2641, %v1152
        %v2645 = vmul.f32 %v2640, %v1151
        %v2646 = vmul.f32 %v2642, %v1152
        %s2647 = scalar_lea.vmem [#allocation8], 112
        %v2648 = vld [vmem:[%s2647] sm:$0xff]
        %v2649 = vld [vmem:[%s2647 + $0x8] sm:$0xff]
        %v2651 = vsel %vm615, %v2648, 0
        %v2654 = vsel %vm615, %v2649, 0
        %2656 = vmatpush.msra.mxu0 0.0
        %2657 = vmatpush.msra.mxu0 0.0
        %2658 = vmatpush.msra.mxu0 0.0
        %2659 = vmatpush.msra.mxu0 0.0
        %2660 = vmatpush.msra.mxu0 0.0
        %2661 = vmatpush.msra.mxu0 0.0
        %2662 = vmatpush.msra.mxu0 0.0
        %2663 = vmatpush.msra.mxu0 0.0
        %2664 = vmatpush.msra.mxu0 0.0
        %2665 = vmatpush.msra.mxu0 0.0
        %2666 = vmatpush.msra.mxu0 0.0
        %2667 = vmatpush.msra.mxu0 0.0
        %2668 = vmatpush.msra.mxu0 0.0
        %2669 = vmatpush.msra.mxu0 0.0
        %2670 = vmatpush.msra.mxu0 %v2645
        %2671 = vmatpush.msra.mxu0 %v2643
        %2672 = vmatmul.f32.gmra.mxu0 %v2651
        %v2673 = vpop.f32.mrf.mxu0
        %v2674 = vadd.f32 0.0, %v2673
        %2675 = vmatmul.f32.gmra.mxu0 %v2654
        %v2676 = vpop.f32.mrf.mxu0
        %v2677 = vadd.f32 0.0, %v2676
        %2678 = vdwg.mxu0
        %2679 = vmatpush.msra.mxu0 0.0
        %2680 = vmatpush.msra.mxu0 0.0
        %2681 = vmatpush.msra.mxu0 0.0
        %2682 = vmatpush.msra.mxu0 0.0
        %2683 = vmatpush.msra.mxu0 0.0
        %2684 = vmatpush.msra.mxu0 0.0
        %2685 = vmatpush.msra.mxu0 0.0
        %2686 = vmatpush.msra.mxu0 0.0
        %2687 = vmatpush.msra.mxu0 0.0
        %2688 = vmatpush.msra.mxu0 0.0
        %2689 = vmatpush.msra.mxu0 0.0
        %2690 = vmatpush.msra.mxu0 0.0
        %2691 = vmatpush.msra.mxu0 0.0
        %2692 = vmatpush.msra.mxu0 0.0
        %2693 = vmatpush.msra.mxu0 %v2646
        %2694 = vmatpush.msra.mxu0 %v2644
        %2695 = vmatmul.f32.gmra.mxu0 %v2651
        %v2696 = vpop.f32.mrf.mxu0
        %v2697 = vadd.f32 0.0, %v2696
        %2698 = vmatmul.f32.gmra.mxu0 %v2654
        %v2699 = vpop.f32.mrf.mxu0
        %v2700 = vadd.f32 0.0, %v2699
        %2701 = vdwg.mxu0
        %v2702 = vadd.f32 %v2627, %v2674
        %v2703 = vadd.f32 %v2628, %v2697
        %v2704 = vadd.f32 %v2629, %v2677
        %v2705 = vadd.f32 %v2630, %v2700
        %2706 = vrot.lane.b32.xlu0 %v2127, 111
        %v2707 = vpop.permute.xlu0 %2706
        %2708 = vrot.lane.b32.xlu0 %v2129, 111
        %v2709 = vpop.permute.xlu0 %2708
        %2710 = vrot.lane.b32.xlu0 %v2128, 111
        %v2711 = vpop.permute.xlu0 %2710
        %2712 = vrot.lane.b32.xlu0 %v2130, 111
        %v2713 = vpop.permute.xlu0 %2712
        %v2714 = vsel %vm1226, %v2707, %v2711
        %v2715 = vsel %vm1226, %v2709, %v2713
        %v2716 = vsel %vm1226, %v2711, %v2707
        %v2717 = vsel %vm1226, %v2713, %v2709
        %v2718 = vmul.f32 %v2714, %v1234
        %v2719 = vmul.f32 %v2716, %v1235
        %v2720 = vmul.f32 %v2715, %v1234
        %v2721 = vmul.f32 %v2717, %v1235
        %s2722 = scalar_lea.vmem [#allocation8], 128
        %v2723 = vld [vmem:[%s2722] sm:$0xff]
        %v2724 = vld [vmem:[%s2722 + $0x8] sm:$0xff]
        %v2726 = vsel %vm615, %v2723, 0
        %v2729 = vsel %vm615, %v2724, 0
        %2731 = vmatpush.msra.mxu0 0.0
        %2732 = vmatpush.msra.mxu0 0.0
        %2733 = vmatpush.msra.mxu0 0.0
        %2734 = vmatpush.msra.mxu0 0.0
        %2735 = vmatpush.msra.mxu0 0.0
        %2736 = vmatpush.msra.mxu0 0.0
        %2737 = vmatpush.msra.mxu0 0.0
        %2738 = vmatpush.msra.mxu0 0.0
        %2739 = vmatpush.msra.mxu0 0.0
        %2740 = vmatpush.msra.mxu0 0.0
        %2741 = vmatpush.msra.mxu0 0.0
        %2742 = vmatpush.msra.mxu0 0.0
        %2743 = vmatpush.msra.mxu0 0.0
        %2744 = vmatpush.msra.mxu0 0.0
        %2745 = vmatpush.msra.mxu0 %v2720
        %2746 = vmatpush.msra.mxu0 %v2718
        %2747 = vmatmul.f32.gmra.mxu0 %v2726
        %v2748 = vpop.f32.mrf.mxu0
        %v2749 = vadd.f32 0.0, %v2748
        %2750 = vmatmul.f32.gmra.mxu0 %v2729
        %v2751 = vpop.f32.mrf.mxu0
        %v2752 = vadd.f32 0.0, %v2751
        %2753 = vdwg.mxu0
        %2754 = vmatpush.msra.mxu0 0.0
        %2755 = vmatpush.msra.mxu0 0.0
        %2756 = vmatpush.msra.mxu0 0.0
        %2757 = vmatpush.msra.mxu0 0.0
        %2758 = vmatpush.msra.mxu0 0.0
        %2759 = vmatpush.msra.mxu0 0.0
        %2760 = vmatpush.msra.mxu0 0.0
        %2761 = vmatpush.msra.mxu0 0.0
        %2762 = vmatpush.msra.mxu0 0.0
        %2763 = vmatpush.msra.mxu0 0.0
        %2764 = vmatpush.msra.mxu0 0.0
        %2765 = vmatpush.msra.mxu0 0.0
        %2766 = vmatpush.msra.mxu0 0.0
        %2767 = vmatpush.msra.mxu0 0.0
        %2768 = vmatpush.msra.mxu0 %v2721
        %2769 = vmatpush.msra.mxu0 %v2719
        %2770 = vmatmul.f32.gmra.mxu0 %v2726
        %v2771 = vpop.f32.mrf.mxu0
        %v2772 = vadd.f32 0.0, %v2771
        %2773 = vmatmul.f32.gmra.mxu0 %v2729
        %v2774 = vpop.f32.mrf.mxu0
        %v2775 = vadd.f32 0.0, %v2774
        %2776 = vdwg.mxu0
        %v2777 = vadd.f32 %v2702, %v2749
        %v2778 = vadd.f32 %v2703, %v2772
        %v2779 = vadd.f32 %v2704, %v2752
        %v2780 = vadd.f32 %v2705, %v2775
        %s2781 = scalar_lea.vmem [#allocation10], 64
        %v2782 = vld [vmem:[%s2781] sm:$0xff]
        %v2783 = vld [vmem:[%s2781 + $0x8] sm:$0xff]
        %2784 = vrot.lane.b32.xlu0 %v2777, 17
        %v2785 = vpop.permute.xlu0 %2784
        %2786 = vrot.lane.b32.xlu0 %v2779, 17
        %v2787 = vpop.permute.xlu0 %2786
        %2788 = vrot.lane.b32.xlu0 %v2778, 17
        %v2789 = vpop.permute.xlu0 %2788
        %2790 = vrot.lane.b32.xlu0 %v2780, 17
        %v2791 = vpop.permute.xlu0 %2790
        %v2792 = vsel %vm598, %v2785, %v2789
        %v2793 = vsel %vm598, %v2787, %v2791
        %v2794 = vsel %vm598, %v2789, %v2785
        %v2795 = vsel %vm598, %v2791, %v2787
        %v2796 = vmul.f32 %v2794, %v605
        %v2797 = vmul.f32 %v2792, %v606
        %v2798 = vmul.f32 %v2795, %v605
        %v2799 = vmul.f32 %v2793, %v606
        %v2800 = vld [vmem:[#allocation10] sm:$0xff]
        %v2801 = vld [vmem:[#allocation10 + $0x8] sm:$0xff]
        %v2803 = vsel %vm615, %v2800, 0
        %v2806 = vsel %vm615, %v2801, 0
        %2808 = vmatpush.msra.mxu0 0.0
        %2809 = vmatpush.msra.mxu0 0.0
        %2810 = vmatpush.msra.mxu0 0.0
        %2811 = vmatpush.msra.mxu0 0.0
        %2812 = vmatpush.msra.mxu0 0.0
        %2813 = vmatpush.msra.mxu0 0.0
        %2814 = vmatpush.msra.mxu0 0.0
        %2815 = vmatpush.msra.mxu0 0.0
        %2816 = vmatpush.msra.mxu0 0.0
        %2817 = vmatpush.msra.mxu0 0.0
        %2818 = vmatpush.msra.mxu0 0.0
        %2819 = vmatpush.msra.mxu0 0.0
        %2820 = vmatpush.msra.mxu0 0.0
        %2821 = vmatpush.msra.mxu0 0.0
        %2822 = vmatpush.msra.mxu0 %v2798
        %2823 = vmatpush.msra.mxu0 %v2796
        %2824 = vmatmul.f32.gmra.mxu0 %v2803
        %v2825 = vpop.f32.mrf.mxu0
        %v2826 = vadd.f32 0.0, %v2825
        %2827 = vmatmul.f32.gmra.mxu0 %v2806
        %v2828 = vpop.f32.mrf.mxu0
        %v2829 = vadd.f32 0.0, %v2828
        %2830 = vdwg.mxu0
        %2831 = vmatpush.msra.mxu0 0.0
        %2832 = vmatpush.msra.mxu0 0.0
        %2833 = vmatpush.msra.mxu0 0.0
        %2834 = vmatpush.msra.mxu0 0.0
        %2835 = vmatpush.msra.mxu0 0.0
        %2836 = vmatpush.msra.mxu0 0.0
        %2837 = vmatpush.msra.mxu0 0.0
        %2838 = vmatpush.msra.mxu0 0.0
        %2839 = vmatpush.msra.mxu0 0.0
        %2840 = vmatpush.msra.mxu0 0.0
        %2841 = vmatpush.msra.mxu0 0.0
        %2842 = vmatpush.msra.mxu0 0.0
        %2843 = vmatpush.msra.mxu0 0.0
        %2844 = vmatpush.msra.mxu0 0.0
        %2845 = vmatpush.msra.mxu0 %v2799
        %2846 = vmatpush.msra.mxu0 %v2797
        %2847 = vmatmul.f32.gmra.mxu0 %v2803
        %v2848 = vpop.f32.mrf.mxu0
        %v2849 = vadd.f32 0.0, %v2848
        %2850 = vmatmul.f32.gmra.mxu0 %v2806
        %v2851 = vpop.f32.mrf.mxu0
        %v2852 = vadd.f32 0.0, %v2851
        %2853 = vdwg.mxu0
        %v2855 = vsel %vm615, %v2782, 0
        %v2858 = vsel %vm615, %v2783, 0
        %2860 = vmatpush.msra.mxu0 0.0
        %2861 = vmatpush.msra.mxu0 0.0
        %2862 = vmatpush.msra.mxu0 0.0
        %2863 = vmatpush.msra.mxu0 0.0
        %2864 = vmatpush.msra.mxu0 0.0
        %2865 = vmatpush.msra.mxu0 0.0
        %2866 = vmatpush.msra.mxu0 0.0
        %2867 = vmatpush.msra.mxu0 0.0
        %2868 = vmatpush.msra.mxu0 0.0
        %2869 = vmatpush.msra.mxu0 0.0
        %2870 = vmatpush.msra.mxu0 0.0
        %2871 = vmatpush.msra.mxu0 0.0
        %2872 = vmatpush.msra.mxu0 0.0
        %2873 = vmatpush.msra.mxu0 0.0
        %2874 = vmatpush.msra.mxu0 %v2779
        %2875 = vmatpush.msra.mxu0 %v2777
        %2876 = vmatmul.f32.gmra.mxu0 %v2855
        %v2877 = vpop.f32.mrf.mxu0
        %v2878 = vadd.f32 %v2826, %v2877
        %2879 = vmatmul.f32.gmra.mxu0 %v2858
        %v2880 = vpop.f32.mrf.mxu0
        %v2881 = vadd.f32 %v2829, %v2880
        %2882 = vdwg.mxu0
        %2883 = vmatpush.msra.mxu0 0.0
        %2884 = vmatpush.msra.mxu0 0.0
        %2885 = vmatpush.msra.mxu0 0.0
        %2886 = vmatpush.msra.mxu0 0.0
        %2887 = vmatpush.msra.mxu0 0.0
        %2888 = vmatpush.msra.mxu0 0.0
        %2889 = vmatpush.msra.mxu0 0.0
        %2890 = vmatpush.msra.mxu0 0.0
        %2891 = vmatpush.msra.mxu0 0.0
        %2892 = vmatpush.msra.mxu0 0.0
        %2893 = vmatpush.msra.mxu0 0.0
        %2894 = vmatpush.msra.mxu0 0.0
        %2895 = vmatpush.msra.mxu0 0.0
        %2896 = vmatpush.msra.mxu0 0.0
        %2897 = vmatpush.msra.mxu0 %v2780
        %2898 = vmatpush.msra.mxu0 %v2778
        %2899 = vmatmul.f32.gmra.mxu0 %v2855
        %v2900 = vpop.f32.mrf.mxu0
        %v2901 = vadd.f32 %v2849, %v2900
        %2902 = vmatmul.f32.gmra.mxu0 %v2858
        %v2903 = vpop.f32.mrf.mxu0
        %v2904 = vadd.f32 %v2852, %v2903
        %2905 = vdwg.mxu0
        %2906 = vrot.lane.b32.xlu0 %v2777, 16
        %v2907 = vpop.permute.xlu0 %2906
        %2908 = vrot.lane.b32.xlu0 %v2779, 16
        %v2909 = vpop.permute.xlu0 %2908
        %2910 = vrot.lane.b32.xlu0 %v2778, 16
        %v2911 = vpop.permute.xlu0 %2910
        %2912 = vrot.lane.b32.xlu0 %v2780, 16
        %v2913 = vpop.permute.xlu0 %2912
        %v2914 = vsel %vm728, %v2907, %v2911
        %v2915 = vsel %vm728, %v2909, %v2913
        %v2916 = vsel %vm728, %v2911, %v2907
        %v2917 = vsel %vm728, %v2913, %v2909
        %v2918 = vmul.f32 %v2916, %v736
        %v2919 = vmul.f32 %v2914, %v737
        %v2920 = vmul.f32 %v2917, %v736
        %v2921 = vmul.f32 %v2915, %v737
        %s2922 = scalar_lea.vmem [#allocation10], 16
        %v2923 = vld [vmem:[%s2922] sm:$0xff]
        %v2924 = vld [vmem:[%s2922 + $0x8] sm:$0xff]
        %v2926 = vsel %vm615, %v2923, 0
        %v2929 = vsel %vm615, %v2924, 0
        %2931 = vmatpush.msra.mxu0 0.0
        %2932 = vmatpush.msra.mxu0 0.0
        %2933 = vmatpush.msra.mxu0 0.0
        %2934 = vmatpush.msra.mxu0 0.0
        %2935 = vmatpush.msra.mxu0 0.0
        %2936 = vmatpush.msra.mxu0 0.0
        %2937 = vmatpush.msra.mxu0 0.0
        %2938 = vmatpush.msra.mxu0 0.0
        %2939 = vmatpush.msra.mxu0 0.0
        %2940 = vmatpush.msra.mxu0 0.0
        %2941 = vmatpush.msra.mxu0 0.0
        %2942 = vmatpush.msra.mxu0 0.0
        %2943 = vmatpush.msra.mxu0 0.0
        %2944 = vmatpush.msra.mxu0 0.0
        %2945 = vmatpush.msra.mxu0 %v2920
        %2946 = vmatpush.msra.mxu0 %v2918
        %2947 = vmatmul.f32.gmra.mxu0 %v2926
        %v2948 = vpop.f32.mrf.mxu0
        %v2949 = vadd.f32 0.0, %v2948
        %2950 = vmatmul.f32.gmra.mxu0 %v2929
        %v2951 = vpop.f32.mrf.mxu0
        %v2952 = vadd.f32 0.0, %v2951
        %2953 = vdwg.mxu0
        %2954 = vmatpush.msra.mxu0 0.0
        %2955 = vmatpush.msra.mxu0 0.0
        %2956 = vmatpush.msra.mxu0 0.0
        %2957 = vmatpush.msra.mxu0 0.0
        %2958 = vmatpush.msra.mxu0 0.0
        %2959 = vmatpush.msra.mxu0 0.0
        %2960 = vmatpush.msra.mxu0 0.0
        %2961 = vmatpush.msra.mxu0 0.0
        %2962 = vmatpush.msra.mxu0 0.0
        %2963 = vmatpush.msra.mxu0 0.0
        %2964 = vmatpush.msra.mxu0 0.0
        %2965 = vmatpush.msra.mxu0 0.0
        %2966 = vmatpush.msra.mxu0 0.0
        %2967 = vmatpush.msra.mxu0 0.0
        %2968 = vmatpush.msra.mxu0 %v2921
        %2969 = vmatpush.msra.mxu0 %v2919
        %2970 = vmatmul.f32.gmra.mxu0 %v2926
        %v2971 = vpop.f32.mrf.mxu0
        %v2972 = vadd.f32 0.0, %v2971
        %2973 = vmatmul.f32.gmra.mxu0 %v2929
        %v2974 = vpop.f32.mrf.mxu0
        %v2975 = vadd.f32 0.0, %v2974
        %2976 = vdwg.mxu0
        %v2977 = vadd.f32 %v2878, %v2949
        %v2978 = vadd.f32 %v2901, %v2972
        %v2979 = vadd.f32 %v2881, %v2952
        %v2980 = vadd.f32 %v2904, %v2975
        %2981 = vrot.lane.b32.xlu0 %v2777, 15
        %v2982 = vpop.permute.xlu0 %2981
        %2983 = vrot.lane.b32.xlu0 %v2779, 15
        %v2984 = vpop.permute.xlu0 %2983
        %2985 = vrot.lane.b32.xlu0 %v2778, 15
        %v2986 = vpop.permute.xlu0 %2985
        %2987 = vrot.lane.b32.xlu0 %v2780, 15
        %v2988 = vpop.permute.xlu0 %2987
        %v2989 = vsel %vm811, %v2982, %v2986
        %v2990 = vsel %vm811, %v2984, %v2988
        %v2991 = vsel %vm811, %v2986, %v2982
        %v2992 = vsel %vm811, %v2988, %v2984
        %v2993 = vmul.f32 %v2991, %v819
        %v2994 = vmul.f32 %v2989, %v820
        %v2995 = vmul.f32 %v2992, %v819
        %v2996 = vmul.f32 %v2990, %v820
        %s2997 = scalar_lea.vmem [#allocation10], 32
        %v2998 = vld [vmem:[%s2997] sm:$0xff]
        %v2999 = vld [vmem:[%s2997 + $0x8] sm:$0xff]
        %v3001 = vsel %vm615, %v2998, 0
        %v3004 = vsel %vm615, %v2999, 0
        %3006 = vmatpush.msra.mxu0 0.0
        %3007 = vmatpush.msra.mxu0 0.0
        %3008 = vmatpush.msra.mxu0 0.0
        %3009 = vmatpush.msra.mxu0 0.0
        %3010 = vmatpush.msra.mxu0 0.0
        %3011 = vmatpush.msra.mxu0 0.0
        %3012 = vmatpush.msra.mxu0 0.0
        %3013 = vmatpush.msra.mxu0 0.0
        %3014 = vmatpush.msra.mxu0 0.0
        %3015 = vmatpush.msra.mxu0 0.0
        %3016 = vmatpush.msra.mxu0 0.0
        %3017 = vmatpush.msra.mxu0 0.0
        %3018 = vmatpush.msra.mxu0 0.0
        %3019 = vmatpush.msra.mxu0 0.0
        %3020 = vmatpush.msra.mxu0 %v2995
        %3021 = vmatpush.msra.mxu0 %v2993
        %3022 = vmatmul.f32.gmra.mxu0 %v3001
        %v3023 = vpop.f32.mrf.mxu0
        %v3024 = vadd.f32 0.0, %v3023
        %3025 = vmatmul.f32.gmra.mxu0 %v3004
        %v3026 = vpop.f32.mrf.mxu0
        %v3027 = vadd.f32 0.0, %v3026
        %3028 = vdwg.mxu0
        %3029 = vmatpush.msra.mxu0 0.0
        %3030 = vmatpush.msra.mxu0 0.0
        %3031 = vmatpush.msra.mxu0 0.0
        %3032 = vmatpush.msra.mxu0 0.0
        %3033 = vmatpush.msra.mxu0 0.0
        %3034 = vmatpush.msra.mxu0 0.0
        %3035 = vmatpush.msra.mxu0 0.0
        %3036 = vmatpush.msra.mxu0 0.0
        %3037 = vmatpush.msra.mxu0 0.0
        %3038 = vmatpush.msra.mxu0 0.0
        %3039 = vmatpush.msra.mxu0 0.0
        %3040 = vmatpush.msra.mxu0 0.0
        %3041 = vmatpush.msra.mxu0 0.0
        %3042 = vmatpush.msra.mxu0 0.0
        %3043 = vmatpush.msra.mxu0 %v2996
        %3044 = vmatpush.msra.mxu0 %v2994
        %3045 = vmatmul.f32.gmra.mxu0 %v3001
        %v3046 = vpop.f32.mrf.mxu0
        %v3047 = vadd.f32 0.0, %v3046
        %3048 = vmatmul.f32.gmra.mxu0 %v3004
        %v3049 = vpop.f32.mrf.mxu0
        %v3050 = vadd.f32 0.0, %v3049
        %3051 = vdwg.mxu0
        %v3052 = vadd.f32 %v2977, %v3024
        %v3053 = vadd.f32 %v2978, %v3047
        %v3054 = vadd.f32 %v2979, %v3027
        %v3055 = vadd.f32 %v2980, %v3050
        %3056 = vrot.lane.b32.xlu0 %v2777, 1
        %v3057 = vpop.permute.xlu0 %3056
        %3058 = vrot.lane.b32.xlu0 %v2779, 1
        %v3059 = vpop.permute.xlu0 %3058
        %3060 = vrot.lane.b32.xlu0 %v2778, 1
        %v3061 = vpop.permute.xlu0 %3060
        %3062 = vrot.lane.b32.xlu0 %v2780, 1
        %v3063 = vpop.permute.xlu0 %3062
        %v3064 = vsel %vm894, %v3057, %v3061
        %v3065 = vsel %vm894, %v3059, %v3063
        %v3066 = vsel %vm894, %v3061, %v3057
        %v3067 = vsel %vm894, %v3063, %v3059
        %v3068 = vmul.f32 %v3066, %v902
        %v3069 = vmul.f32 %v3064, %v903
        %v3070 = vmul.f32 %v3067, %v902
        %v3071 = vmul.f32 %v3065, %v903
        %s3072 = scalar_lea.vmem [#allocation10], 48
        %v3073 = vld [vmem:[%s3072] sm:$0xff]
        %v3074 = vld [vmem:[%s3072 + $0x8] sm:$0xff]
        %v3076 = vsel %vm615, %v3073, 0
        %v3079 = vsel %vm615, %v3074, 0
        %3081 = vmatpush.msra.mxu0 0.0
        %3082 = vmatpush.msra.mxu0 0.0
        %3083 = vmatpush.msra.mxu0 0.0
        %3084 = vmatpush.msra.mxu0 0.0
        %3085 = vmatpush.msra.mxu0 0.0
        %3086 = vmatpush.msra.mxu0 0.0
        %3087 = vmatpush.msra.mxu0 0.0
        %3088 = vmatpush.msra.mxu0 0.0
        %3089 = vmatpush.msra.mxu0 0.0
        %3090 = vmatpush.msra.mxu0 0.0
        %3091 = vmatpush.msra.mxu0 0.0
        %3092 = vmatpush.msra.mxu0 0.0
        %3093 = vmatpush.msra.mxu0 0.0
        %3094 = vmatpush.msra.mxu0 0.0
        %3095 = vmatpush.msra.mxu0 %v3070
        %3096 = vmatpush.msra.mxu0 %v3068
        %3097 = vmatmul.f32.gmra.mxu0 %v3076
        %v3098 = vpop.f32.mrf.mxu0
        %v3099 = vadd.f32 0.0, %v3098
        %3100 = vmatmul.f32.gmra.mxu0 %v3079
        %v3101 = vpop.f32.mrf.mxu0
        %v3102 = vadd.f32 0.0, %v3101
        %3103 = vdwg.mxu0
        %3104 = vmatpush.msra.mxu0 0.0
        %3105 = vmatpush.msra.mxu0 0.0
        %3106 = vmatpush.msra.mxu0 0.0
        %3107 = vmatpush.msra.mxu0 0.0
        %3108 = vmatpush.msra.mxu0 0.0
        %3109 = vmatpush.msra.mxu0 0.0
        %3110 = vmatpush.msra.mxu0 0.0
        %3111 = vmatpush.msra.mxu0 0.0
        %3112 = vmatpush.msra.mxu0 0.0
        %3113 = vmatpush.msra.mxu0 0.0
        %3114 = vmatpush.msra.mxu0 0.0
        %3115 = vmatpush.msra.mxu0 0.0
        %3116 = vmatpush.msra.mxu0 0.0
        %3117 = vmatpush.msra.mxu0 0.0
        %3118 = vmatpush.msra.mxu0 %v3071
        %3119 = vmatpush.msra.mxu0 %v3069
        %3120 = vmatmul.f32.gmra.mxu0 %v3076
        %v3121 = vpop.f32.mrf.mxu0
        %v3122 = vadd.f32 0.0, %v3121
        %3123 = vmatmul.f32.gmra.mxu0 %v3079
        %v3124 = vpop.f32.mrf.mxu0
        %v3125 = vadd.f32 0.0, %v3124
        %3126 = vdwg.mxu0
        %v3127 = vadd.f32 %v3052, %v3099
        %v3128 = vadd.f32 %v3053, %v3122
        %v3129 = vadd.f32 %v3054, %v3102
        %v3130 = vadd.f32 %v3055, %v3125
        %3131 = vrot.lane.b32.xlu0 %v2777, 127
        %v3132 = vpop.permute.xlu0 %3131
        %3133 = vrot.lane.b32.xlu0 %v2779, 127
        %v3134 = vpop.permute.xlu0 %3133
        %3135 = vrot.lane.b32.xlu0 %v2778, 127
        %v3136 = vpop.permute.xlu0 %3135
        %3137 = vrot.lane.b32.xlu0 %v2780, 127
        %v3138 = vpop.permute.xlu0 %3137
        %v3139 = vsel %vm977, %v3132, %v3136
        %v3140 = vsel %vm977, %v3134, %v3138
        %v3141 = vsel %vm977, %v3136, %v3132
        %v3142 = vsel %vm977, %v3138, %v3134
        %v3143 = vmul.f32 %v3139, %v985
        %v3144 = vmul.f32 %v3141, %v986
        %v3145 = vmul.f32 %v3140, %v985
        %v3146 = vmul.f32 %v3142, %v986
        %s3147 = scalar_lea.vmem [#allocation10], 80
        %v3148 = vld [vmem:[%s3147] sm:$0xff]
        %v3149 = vld [vmem:[%s3147 + $0x8] sm:$0xff]
        %v3151 = vsel %vm615, %v3148, 0
        %v3154 = vsel %vm615, %v3149, 0
        %3156 = vmatpush.msra.mxu0 0.0
        %3157 = vmatpush.msra.mxu0 0.0
        %3158 = vmatpush.msra.mxu0 0.0
        %3159 = vmatpush.msra.mxu0 0.0
        %3160 = vmatpush.msra.mxu0 0.0
        %3161 = vmatpush.msra.mxu0 0.0
        %3162 = vmatpush.msra.mxu0 0.0
        %3163 = vmatpush.msra.mxu0 0.0
        %3164 = vmatpush.msra.mxu0 0.0
        %3165 = vmatpush.msra.mxu0 0.0
        %3166 = vmatpush.msra.mxu0 0.0
        %3167 = vmatpush.msra.mxu0 0.0
        %3168 = vmatpush.msra.mxu0 0.0
        %3169 = vmatpush.msra.mxu0 0.0
        %3170 = vmatpush.msra.mxu0 %v3145
        %3171 = vmatpush.msra.mxu0 %v3143
        %3172 = vmatmul.f32.gmra.mxu0 %v3151
        %v3173 = vpop.f32.mrf.mxu0
        %v3174 = vadd.f32 0.0, %v3173
        %3175 = vmatmul.f32.gmra.mxu0 %v3154
        %v3176 = vpop.f32.mrf.mxu0
        %v3177 = vadd.f32 0.0, %v3176
        %3178 = vdwg.mxu0
        %3179 = vmatpush.msra.mxu0 0.0
        %3180 = vmatpush.msra.mxu0 0.0
        %3181 = vmatpush.msra.mxu0 0.0
        %3182 = vmatpush.msra.mxu0 0.0
        %3183 = vmatpush.msra.mxu0 0.0
        %3184 = vmatpush.msra.mxu0 0.0
        %3185 = vmatpush.msra.mxu0 0.0
        %3186 = vmatpush.msra.mxu0 0.0
        %3187 = vmatpush.msra.mxu0 0.0
        %3188 = vmatpush.msra.mxu0 0.0
        %3189 = vmatpush.msra.mxu0 0.0
        %3190 = vmatpush.msra.mxu0 0.0
        %3191 = vmatpush.msra.mxu0 0.0
        %3192 = vmatpush.msra.mxu0 0.0
        %3193 = vmatpush.msra.mxu0 %v3146
        %3194 = vmatpush.msra.mxu0 %v3144
        %3195 = vmatmul.f32.gmra.mxu0 %v3151
        %v3196 = vpop.f32.mrf.mxu0
        %v3197 = vadd.f32 0.0, %v3196
        %3198 = vmatmul.f32.gmra.mxu0 %v3154
        %v3199 = vpop.f32.mrf.mxu0
        %v3200 = vadd.f32 0.0, %v3199
        %3201 = vdwg.mxu0
        %v3202 = vadd.f32 %v3127, %v3174
        %v3203 = vadd.f32 %v3128, %v3197
        %v3204 = vadd.f32 %v3129, %v3177
        %v3205 = vadd.f32 %v3130, %v3200
        %3206 = vrot.lane.b32.xlu0 %v2777, 113
        %v3207 = vpop.permute.xlu0 %3206
        %3208 = vrot.lane.b32.xlu0 %v2779, 113
        %v3209 = vpop.permute.xlu0 %3208
        %3210 = vrot.lane.b32.xlu0 %v2778, 113
        %v3211 = vpop.permute.xlu0 %3210
        %3212 = vrot.lane.b32.xlu0 %v2780, 113
        %v3213 = vpop.permute.xlu0 %3212
        %v3214 = vsel %vm1060, %v3207, %v3211
        %v3215 = vsel %vm1060, %v3209, %v3213
        %v3216 = vsel %vm1060, %v3211, %v3207
        %v3217 = vsel %vm1060, %v3213, %v3209
        %v3218 = vmul.f32 %v3214, %v1068
        %v3219 = vmul.f32 %v3216, %v1069
        %v3220 = vmul.f32 %v3215, %v1068
        %v3221 = vmul.f32 %v3217, %v1069
        %s3222 = scalar_lea.vmem [#allocation10], 96
        %v3223 = vld [vmem:[%s3222] sm:$0xff]
        %v3224 = vld [vmem:[%s3222 + $0x8] sm:$0xff]
        %v3226 = vsel %vm615, %v3223, 0
        %v3229 = vsel %vm615, %v3224, 0
        %3231 = vmatpush.msra.mxu0 0.0
        %3232 = vmatpush.msra.mxu0 0.0
        %3233 = vmatpush.msra.mxu0 0.0
        %3234 = vmatpush.msra.mxu0 0.0
        %3235 = vmatpush.msra.mxu0 0.0
        %3236 = vmatpush.msra.mxu0 0.0
        %3237 = vmatpush.msra.mxu0 0.0
        %3238 = vmatpush.msra.mxu0 0.0
        %3239 = vmatpush.msra.mxu0 0.0
        %3240 = vmatpush.msra.mxu0 0.0
        %3241 = vmatpush.msra.mxu0 0.0
        %3242 = vmatpush.msra.mxu0 0.0
        %3243 = vmatpush.msra.mxu0 0.0
        %3244 = vmatpush.msra.mxu0 0.0
        %3245 = vmatpush.msra.mxu0 %v3220
        %3246 = vmatpush.msra.mxu0 %v3218
        %3247 = vmatmul.f32.gmra.mxu0 %v3226
        %v3248 = vpop.f32.mrf.mxu0
        %v3249 = vadd.f32 0.0, %v3248
        %3250 = vmatmul.f32.gmra.mxu0 %v3229
        %v3251 = vpop.f32.mrf.mxu0
        %v3252 = vadd.f32 0.0, %v3251
        %3253 = vdwg.mxu0
        %3254 = vmatpush.msra.mxu0 0.0
        %3255 = vmatpush.msra.mxu0 0.0
        %3256 = vmatpush.msra.mxu0 0.0
        %3257 = vmatpush.msra.mxu0 0.0
        %3258 = vmatpush.msra.mxu0 0.0
        %3259 = vmatpush.msra.mxu0 0.0
        %3260 = vmatpush.msra.mxu0 0.0
        %3261 = vmatpush.msra.mxu0 0.0
        %3262 = vmatpush.msra.mxu0 0.0
        %3263 = vmatpush.msra.mxu0 0.0
        %3264 = vmatpush.msra.mxu0 0.0
        %3265 = vmatpush.msra.mxu0 0.0
        %3266 = vmatpush.msra.mxu0 0.0
        %3267 = vmatpush.msra.mxu0 0.0
        %3268 = vmatpush.msra.mxu0 %v3221
        %3269 = vmatpush.msra.mxu0 %v3219
        %3270 = vmatmul.f32.gmra.mxu0 %v3226
        %v3271 = vpop.f32.mrf.mxu0
        %v3272 = vadd.f32 0.0, %v3271
        %3273 = vmatmul.f32.gmra.mxu0 %v3229
        %v3274 = vpop.f32.mrf.mxu0
        %v3275 = vadd.f32 0.0, %v3274
        %3276 = vdwg.mxu0
        %v3277 = vadd.f32 %v3202, %v3249
        %v3278 = vadd.f32 %v3203, %v3272
        %v3279 = vadd.f32 %v3204, %v3252
        %v3280 = vadd.f32 %v3205, %v3275
        %3281 = vrot.lane.b32.xlu0 %v2777, 112
        %v3282 = vpop.permute.xlu0 %3281
        %3283 = vrot.lane.b32.xlu0 %v2779, 112
        %v3284 = vpop.permute.xlu0 %3283
        %3285 = vrot.lane.b32.xlu0 %v2778, 112
        %v3286 = vpop.permute.xlu0 %3285
        %3287 = vrot.lane.b32.xlu0 %v2780, 112
        %v3288 = vpop.permute.xlu0 %3287
        %v3289 = vsel %vm1143, %v3282, %v3286
        %v3290 = vsel %vm1143, %v3284, %v3288
        %v3291 = vsel %vm1143, %v3286, %v3282
        %v3292 = vsel %vm1143, %v3288, %v3284
        %v3293 = vmul.f32 %v3289, %v1151
        %v3294 = vmul.f32 %v3291, %v1152
        %v3295 = vmul.f32 %v3290, %v1151
        %v3296 = vmul.f32 %v3292, %v1152
        %s3297 = scalar_lea.vmem [#allocation10], 112
        %v3298 = vld [vmem:[%s3297] sm:$0xff]
        %v3299 = vld [vmem:[%s3297 + $0x8] sm:$0xff]
        %v3301 = vsel %vm615, %v3298, 0
        %v3304 = vsel %vm615, %v3299, 0
        %3306 = vmatpush.msra.mxu0 0.0
        %3307 = vmatpush.msra.mxu0 0.0
        %3308 = vmatpush.msra.mxu0 0.0
        %3309 = vmatpush.msra.mxu0 0.0
        %3310 = vmatpush.msra.mxu0 0.0
        %3311 = vmatpush.msra.mxu0 0.0
        %3312 = vmatpush.msra.mxu0 0.0
        %3313 = vmatpush.msra.mxu0 0.0
        %3314 = vmatpush.msra.mxu0 0.0
        %3315 = vmatpush.msra.mxu0 0.0
        %3316 = vmatpush.msra.mxu0 0.0
        %3317 = vmatpush.msra.mxu0 0.0
        %3318 = vmatpush.msra.mxu0 0.0
        %3319 = vmatpush.msra.mxu0 0.0
        %3320 = vmatpush.msra.mxu0 %v3295
        %3321 = vmatpush.msra.mxu0 %v3293
        %3322 = vmatmul.f32.gmra.mxu0 %v3301
        %v3323 = vpop.f32.mrf.mxu0
        %v3324 = vadd.f32 0.0, %v3323
        %3325 = vmatmul.f32.gmra.mxu0 %v3304
        %v3326 = vpop.f32.mrf.mxu0
        %v3327 = vadd.f32 0.0, %v3326
        %3328 = vdwg.mxu0
        %3329 = vmatpush.msra.mxu0 0.0
        %3330 = vmatpush.msra.mxu0 0.0
        %3331 = vmatpush.msra.mxu0 0.0
        %3332 = vmatpush.msra.mxu0 0.0
        %3333 = vmatpush.msra.mxu0 0.0
        %3334 = vmatpush.msra.mxu0 0.0
        %3335 = vmatpush.msra.mxu0 0.0
        %3336 = vmatpush.msra.mxu0 0.0
        %3337 = vmatpush.msra.mxu0 0.0
        %3338 = vmatpush.msra.mxu0 0.0
        %3339 = vmatpush.msra.mxu0 0.0
        %3340 = vmatpush.msra.mxu0 0.0
        %3341 = vmatpush.msra.mxu0 0.0
        %3342 = vmatpush.msra.mxu0 0.0
        %3343 = vmatpush.msra.mxu0 %v3296
        %3344 = vmatpush.msra.mxu0 %v3294
        %3345 = vmatmul.f32.gmra.mxu0 %v3301
        %v3346 = vpop.f32.mrf.mxu0
        %v3347 = vadd.f32 0.0, %v3346
        %3348 = vmatmul.f32.gmra.mxu0 %v3304
        %v3349 = vpop.f32.mrf.mxu0
        %v3350 = vadd.f32 0.0, %v3349
        %3351 = vdwg.mxu0
        %v3352 = vadd.f32 %v3277, %v3324
        %v3353 = vadd.f32 %v3278, %v3347
        %v3354 = vadd.f32 %v3279, %v3327
        %v3355 = vadd.f32 %v3280, %v3350
        %3356 = vrot.lane.b32.xlu0 %v2777, 111
        %v3357 = vpop.permute.xlu0 %3356
        %3358 = vrot.lane.b32.xlu0 %v2779, 111
        %v3359 = vpop.permute.xlu0 %3358
        %3360 = vrot.lane.b32.xlu0 %v2778, 111
        %v3361 = vpop.permute.xlu0 %3360
        %3362 = vrot.lane.b32.xlu0 %v2780, 111
        %v3363 = vpop.permute.xlu0 %3362
        %v3364 = vsel %vm1226, %v3357, %v3361
        %v3365 = vsel %vm1226, %v3359, %v3363
        %v3366 = vsel %vm1226, %v3361, %v3357
        %v3367 = vsel %vm1226, %v3363, %v3359
        %v3368 = vmul.f32 %v3364, %v1234
        %v3369 = vmul.f32 %v3366, %v1235
        %v3370 = vmul.f32 %v3365, %v1234
        %v3371 = vmul.f32 %v3367, %v1235
        %s3372 = scalar_lea.vmem [#allocation10], 128
        %v3373 = vld [vmem:[%s3372] sm:$0xff]
        %v3374 = vld [vmem:[%s3372 + $0x8] sm:$0xff]
        %v3376 = vsel %vm615, %v3373, 0
        %v3379 = vsel %vm615, %v3374, 0
        %3381 = vmatpush.msra.mxu0 0.0
        %3382 = vmatpush.msra.mxu0 0.0
        %3383 = vmatpush.msra.mxu0 0.0
        %3384 = vmatpush.msra.mxu0 0.0
        %3385 = vmatpush.msra.mxu0 0.0
        %3386 = vmatpush.msra.mxu0 0.0
        %3387 = vmatpush.msra.mxu0 0.0
        %3388 = vmatpush.msra.mxu0 0.0
        %3389 = vmatpush.msra.mxu0 0.0
        %3390 = vmatpush.msra.mxu0 0.0
        %3391 = vmatpush.msra.mxu0 0.0
        %3392 = vmatpush.msra.mxu0 0.0
        %3393 = vmatpush.msra.mxu0 0.0
        %3394 = vmatpush.msra.mxu0 0.0
        %3395 = vmatpush.msra.mxu0 %v3370
        %3396 = vmatpush.msra.mxu0 %v3368
        %3397 = vmatmul.f32.gmra.mxu0 %v3376
        %v3398 = vpop.f32.mrf.mxu0
        %v3399 = vadd.f32 0.0, %v3398
        %3400 = vmatmul.f32.gmra.mxu0 %v3379
        %v3401 = vpop.f32.mrf.mxu0
        %v3402 = vadd.f32 0.0, %v3401
        %3403 = vdwg.mxu0
        %3404 = vmatpush.msra.mxu0 0.0
        %3405 = vmatpush.msra.mxu0 0.0
        %3406 = vmatpush.msra.mxu0 0.0
        %3407 = vmatpush.msra.mxu0 0.0
        %3408 = vmatpush.msra.mxu0 0.0
        %3409 = vmatpush.msra.mxu0 0.0
        %3410 = vmatpush.msra.mxu0 0.0
        %3411 = vmatpush.msra.mxu0 0.0
        %3412 = vmatpush.msra.mxu0 0.0
        %3413 = vmatpush.msra.mxu0 0.0
        %3414 = vmatpush.msra.mxu0 0.0
        %3415 = vmatpush.msra.mxu0 0.0
        %3416 = vmatpush.msra.mxu0 0.0
        %3417 = vmatpush.msra.mxu0 0.0
        %3418 = vmatpush.msra.mxu0 %v3371
        %3419 = vmatpush.msra.mxu0 %v3369
        %3420 = vmatmul.f32.gmra.mxu0 %v3376
        %v3421 = vpop.f32.mrf.mxu0
        %v3422 = vadd.f32 0.0, %v3421
        %3423 = vmatmul.f32.gmra.mxu0 %v3379
        %v3424 = vpop.f32.mrf.mxu0
        %v3425 = vadd.f32 0.0, %v3424
        %3426 = vdwg.mxu0
        %v3427 = vadd.f32 %v3352, %v3399
        %v3428 = vadd.f32 %v3353, %v3422
        %v3429 = vadd.f32 %v3354, %v3402
        %v3430 = vadd.f32 %v3355, %v3425
        %v3431 = vld [vmem:[%s9] sm:$0xff]
        %v3432 = vld [vmem:[%s9 + $0x8] sm:$0xff]
        %v3433 = vld [vmem:[%s10] sm:$0xff]
        %v3434 = vld [vmem:[%s10 + $0x8] sm:$0xff]
        %v3435 = vadd.f32 %v3427, %v3428
        %3436 = vadd.xlane.f32.xlu0 %v3435
        %v3437 = vpop.xlane.xlu0 %3436
        %v3438 = vadd.f32 %v3429, %v3430
        %3439 = vadd.xlane.f32.xlu0 %v3438
        %v3440 = vpop.xlane.xlu0 %3439
        %v3441 = vmul.f32 %v3427, %v3427
        %v3442 = vmul.f32 %v3428, %v3428
        %v3443 = vmul.f32 %v3429, %v3429
        %v3444 = vmul.f32 %v3430, %v3430
        %v3445 = vadd.f32 %v3441, %v3442
        %3446 = vadd.xlane.f32.xlu0 %v3445
        %v3447 = vpop.xlane.xlu0 %3446
        %v3448 = vadd.f32 %v3443, %v3444
        %3449 = vadd.xlane.f32.xlu0 %v3448
        %v3450 = vpop.xlane.xlu0 %3449
        %3451 = vmatpush.msra.mxu0 0.0
        %3452 = vmatpush.msra.mxu0 0.0
        %3453 = vmatpush.msra.mxu0 0.0
        %3454 = vmatpush.msra.mxu0 0.0
        %3455 = vmatpush.msra.mxu0 0.0
        %3456 = vmatpush.msra.mxu0 0.0
        %3457 = vmatpush.msra.mxu0 0.0
        %3458 = vmatpush.msra.mxu0 0.0
        %3459 = vmatpush.msra.mxu0 0.0
        %3460 = vmatpush.msra.mxu0 0.0
        %3461 = vmatpush.msra.mxu0 0.0
        %3462 = vmatpush.msra.mxu0 0.0
        %3463 = vmatpush.msra.mxu0 0.0
        %3464 = vmatpush.msra.mxu0 0.0
        %3465 = vmatpush.msra.mxu0 %v3440
        %3466 = vmatpush.msra.mxu0 %v3437
        %3467 = vmatmul.f32.gmra.mxu0 %v1974
        %v3468 = vpop.f32.mrf.mxu0
        %v3469 = vadd.f32 0.0, %v3468
        %3470 = vmatmul.f32.gmra.mxu0 %v1977
        %v3471 = vpop.f32.mrf.mxu0
        %v3472 = vadd.f32 0.0, %v3471
        %3473 = vdwg.mxu0
        %3474 = vmatpush.msra.mxu0 0.0
        %3475 = vmatpush.msra.mxu0 0.0
        %3476 = vmatpush.msra.mxu0 0.0
        %3477 = vmatpush.msra.mxu0 0.0
        %3478 = vmatpush.msra.mxu0 0.0
        %3479 = vmatpush.msra.mxu0 0.0
        %3480 = vmatpush.msra.mxu0 0.0
        %3481 = vmatpush.msra.mxu0 0.0
        %3482 = vmatpush.msra.mxu0 0.0
        %3483 = vmatpush.msra.mxu0 0.0
        %3484 = vmatpush.msra.mxu0 0.0
        %3485 = vmatpush.msra.mxu0 0.0
        %3486 = vmatpush.msra.mxu0 0.0
        %3487 = vmatpush.msra.mxu0 0.0
        %3488 = vmatpush.msra.mxu0 %v3450
        %3489 = vmatpush.msra.mxu0 %v3447
        %3490 = vmatmul.f32.gmra.mxu0 %v1974
        %v3491 = vpop.f32.mrf.mxu0
        %v3492 = vadd.f32 0.0, %v3491
        %3493 = vmatmul.f32.gmra.mxu0 %v1977
        %v3494 = vpop.f32.mrf.mxu0
        %v3495 = vadd.f32 0.0, %v3494
        %3496 = vdwg.mxu0
        %v3497 = vmul.f32 %v3469, %v3469
        %v3498 = vmul.f32 %v3472, %v3472
        %v3499 = vsub.f32 %v3492, %v3497
        %v3500 = vsub.f32 %v3495, %v3498
        %3502 = vset.pattern.permute.xlu0 0
        %3503 = vperm.xlu0 %3502, %v3469
        %v3504 = vpop.permute.xlu0 %3503
        %3507 = vset.pattern.permute.xlu0 0
        %3508 = vperm.xlu0 %3507, %v3472
        %v3509 = vpop.permute.xlu0 %3508
        %v3511 = vsub.f32 %v3427, %v3504
        %v3512 = vsub.f32 %v3428, %v3504
        %v3513 = vsub.f32 %v3429, %v3509
        %v3514 = vsub.f32 %v3430, %v3509
        %v3515 = vadd.f32 %v3499, 1e-05
        %v3516 = vadd.f32 %v3500, 1e-05
        %v3517 = vrsqrt.pop %v3515
        %v3518 = vmul.f32 %v3517, %v3515
        %v3519 = vmul.f32 %v3518, %v3517
        %v3520 = vmul.f32 0.5, %v3519
        %v3521 = vsub.f32 1.5, %v3520
        %v3522 = vmul.f32 %v3517, %v3521
        %vm3523 = vweird.f32 %v3515
        %vm3524 = vweird.f32 %v3517
        %vm3525 = vmor %vm3523, %vm3524
        %v3526 = vsel %vm3525, %v3517, %v3522
        %v3527 = vrsqrt.pop %v3516
        %v3528 = vmul.f32 %v3527, %v3516
        %v3529 = vmul.f32 %v3528, %v3527
        %v3530 = vmul.f32 0.5, %v3529
        %v3531 = vsub.f32 1.5, %v3530
        %v3532 = vmul.f32 %v3527, %v3531
        %vm3533 = vweird.f32 %v3516
        %vm3534 = vweird.f32 %v3527
        %vm3535 = vmor %vm3533, %vm3534
        %v3536 = vsel %vm3535, %v3527, %v3532
        %v3537 = vmul.f32 %v3526, %v3431
        %v3538 = vmul.f32 %v3536, %v3432
        %3540 = vset.pattern.permute.xlu0 0
        %3541 = vperm.xlu0 %3540, %v3537
        %v3542 = vpop.permute.xlu0 %3541
        %3545 = vset.pattern.permute.xlu0 0
        %3546 = vperm.xlu0 %3545, %v3538
        %v3547 = vpop.permute.xlu0 %3546
        %v3549 = vmul.f32 %v3511, %v3542
        %v3550 = vmul.f32 %v3512, %v3542
        %v3551 = vmul.f32 %v3513, %v3547
        %v3552 = vmul.f32 %v3514, %v3547
        %3554 = vset.pattern.permute.xlu0 0
        %3555 = vperm.xlu0 %3554, %v3433
        %v3556 = vpop.permute.xlu0 %3555
        %3559 = vset.pattern.permute.xlu0 0
        %3560 = vperm.xlu0 %3559, %v3434
        %v3561 = vpop.permute.xlu0 %3560
        %v3563 = vadd.f32 %v3549, %v3556
        %v3564 = vadd.f32 %v3550, %v3556
        %v3565 = vadd.f32 %v3551, %v3561
        %v3566 = vadd.f32 %v3552, %v3561
        %v3567 = vadd.f32 %v3563, %v3564
        %3568 = vadd.xlane.f32.xlu0 %v3567
        %v3569 = vpop.xlane.xlu0 %3568
        %v3570 = vadd.f32 %v3565, %v3566
        %3571 = vadd.xlane.f32.xlu0 %v3570
        %v3572 = vpop.xlane.xlu0 %3571
        %v3573 = vmul.f32 %v3569, 0.00390625
        %v3574 = vmul.f32 %v3572, 0.00390625
        %v3575 = vld [vmem:[%s11] sm:$0xf]
        %v3576 = vld [vmem:[%s12] sm:$0xf]
        %v3578 = vsel %vm615, %v3575, 0
        %3580 = vmatpush.msra.mxu0 0.0
        %3581 = vmatpush.msra.mxu0 0.0
        %3582 = vmatpush.msra.mxu0 0.0
        %3583 = vmatpush.msra.mxu0 0.0
        %3584 = vmatpush.msra.mxu0 0.0
        %3585 = vmatpush.msra.mxu0 0.0
        %3586 = vmatpush.msra.mxu0 0.0
        %3587 = vmatpush.msra.mxu0 0.0
        %3588 = vmatpush.msra.mxu0 0.0
        %3589 = vmatpush.msra.mxu0 0.0
        %3590 = vmatpush.msra.mxu0 0.0
        %3591 = vmatpush.msra.mxu0 0.0
        %3592 = vmatpush.msra.mxu0 0.0
        %3593 = vmatpush.msra.mxu0 0.0
        %3594 = vmatpush.msra.mxu0 %v3574
        %3595 = vmatpush.msra.mxu0 %v3573
        %3596 = vmatmul.f32.gmra.mxu0 %v3578
        %v3597 = vpop.f32.mrf.mxu0
        %v3598 = vadd.f32 %v3576, %v3597
        %3599 = vdwg.mxu0
        %v3600 = vmul.f32 %v3598, 0.5
        %v3601 = vmul.f32 %v3598, 0.044715
        %v3602 = vmul.f32 %v3601, %v3598
        %v3603 = vmul.f32 %v3602, %v3598
        %v3604 = vadd.f32 %v3598, %v3603
        %v3605 = vmul.f32 %v3604, 0.7978846
        %v3606 = vtanh.pop %v3605
        %v3607 = vadd.f32 %v3606, 1.0
        %v3608 = vmul.f32 %v3600, %v3607
        %v3609 = vld [vmem:[%s13] sm:$0xff]
        %v3610 = vld [vmem:[%s13 + $0x8] sm:$0xff]
        %v3611 = vld [vmem:[%s14] sm:$0xff]
        %v3612 = vld [vmem:[%s14 + $0x8] sm:$0xff]
        %vm3613 = vcmask 31744
        %v3615 = vsel %vm3613, %v3609, 0
        %v3618 = vsel %vm3613, %v3610, 0
        %vm3620 = vcmask 1043456
        %v3622 = vsel %vm3620, %v3608, 0
        %3624 = vmatpush.msra.mxu0 0.0
        %3625 = vmatpush.msra.mxu0 0.0
        %3626 = vmatpush.msra.mxu0 0.0
        %3627 = vmatpush.msra.mxu0 0.0
        %3628 = vmatpush.msra.mxu0 0.0
        %3629 = vmatpush.msra.mxu0 0.0
        %3630 = vmatpush.msra.mxu0 0.0
        %3631 = vmatpush.msra.mxu0 0.0
        %3632 = vmatpush.msra.mxu0 0.0
        %3633 = vmatpush.msra.mxu0 0.0
        %3634 = vmatpush.msra.mxu0 0.0
        %3635 = vmatpush.msra.mxu0 0.0
        %3636 = vmatpush.msra.mxu0 0.0
        %3637 = vmatpush.msra.mxu0 0.0
        %3638 = vmatpush.msra.mxu0 0.0
        %3639 = vmatpush.msra.mxu0 %v3622
        %3640 = vmatmul.f32.gmra.mxu0 %v3615
        %v3641 = vpop.f32.mrf.mxu0
        %v3642 = vadd.f32 %v3611, %v3641
        %3643 = vmatmul.f32.gmra.mxu0 %v3618
        %v3644 = vpop.f32.mrf.mxu0
        %v3645 = vadd.f32 %v3612, %v3644
        %3646 = vdwg.mxu0
        %v3647 = vsub.f32 0.0, %v3642
        %v3648 = vsub.f32 0.0, %v3645
        %v3649 = vmul.f32 %v3647, 1.442695
        %v3650 = vpow.pop %v3649
        %v3651 = vmul.f32 %v3648, 1.442695
        %v3652 = vpow.pop %v3651
        %v3653 = vadd.f32 %v3650, 1.0
        %v3654 = vadd.f32 %v3652, 1.0
        %v3655 = vrcp.pop %v3653
        %v3656 = vmul.f32 %v3653, %v3655
        %v3657 = vsub.f32 1.0, %v3656
        %v3658 = vmul.f32 %v3655, %v3657
        %v3659 = vadd.f32 %v3655, %v3658
        %vm3660 = vweird.f32 %v3653
        %vm3661 = vweird.f32 %v3655
        %vm3662 = vmor %vm3660, %vm3661
        %v3663 = vsel %vm3662, %v3655, %v3659
        %v3664 = vand.u32 2147483647, %v3653
        %vm3665 = vcmp.eq.f32.partialorder %v3664, 8.507059e+37
        %v3666 = vand.u32 %v3653, 2147483648
        %v3667 = vor.u32 1.1754944e-38, %v3666
        %v3668 = vsel %vm3665, %v3667, %v3663
        %v3669 = vmul.f32 1.0, %v3668
        %v3670 = vrcp.pop %v3654
        %v3671 = vmul.f32 %v3654, %v3670
        %v3672 = vsub.f32 1.0, %v3671
        %v3673 = vmul.f32 %v3670, %v3672
        %v3674 = vadd.f32 %v3670, %v3673
        %vm3675 = vweird.f32 %v3654
        %vm3676 = vweird.f32 %v3670
        %vm3677 = vmor %vm3675, %vm3676
        %v3678 = vsel %vm3677, %v3670, %v3674
        %v3679 = vand.u32 2147483647, %v3654
        %vm3680 = vcmp.eq.f32.partialorder %v3679, 8.507059e+37
        %v3681 = vand.u32 %v3654, 2147483648
        %v3682 = vor.u32 1.1754944e-38, %v3681
        %v3683 = vsel %vm3680, %v3682, %v3678
        %v3684 = vmul.f32 1.0, %v3683
        %3686 = vset.pattern.permute.xlu0 0
        %3687 = vperm.xlu0 %3686, %v3669
        %v3688 = vpop.permute.xlu0 %3687
        %3691 = vset.pattern.permute.xlu0 0
        %3692 = vperm.xlu0 %3691, %v3684
        %v3693 = vpop.permute.xlu0 %3692
        %v3695 = vmul.f32 %v3563, %v3688
        %v3696 = vmul.f32 %v3564, %v3688
        %v3697 = vmul.f32 %v3565, %v3693
        %v3698 = vmul.f32 %v3566, %v3693
        %v3699 = vadd.f32 %v3695, %v581
        %v3700 = vadd.f32 %v3696, %v582
        %v3701 = vadd.f32 %v3697, %v583
        %v3702 = vadd.f32 %v3698, %v584
        %3703 = vst [vmem:[%s580] sm:$0xff] %v3699
        %3704 = vst [vmem:[%s580 + $0x8] sm:$0xff] %v3700
        %3705 = vst [vmem:[%s580 + $0x10] sm:$0xff] %v3701
        %3706 = vst [vmem:[%s580 + $0x18] sm:$0xff] %v3702
        %s3707 = sand.u32 %s362, 1
        %s3708 = scalar_lea.sflag [#allocation4], %s3707
        %s3709 = sand.u32 %s362, 1
        %s3710 = smul.addr %s3709, 32
        %s3711 = scalar_lea.vmem [#allocation11], %s3710
        // Predicated region
        $region101: #{tpu_custom_call.1} parent=79 // pred_check
          %p3712 = pneg %p372
        $region102: #{tpu_custom_call.1} parent=79 // pred_check_branch
          %3714 = sbr.rel (%p3712) target = $region104
        $region103: #{tpu_custom_call.1} parent=79 // pred_region
          %3716 = vsyncadd %s3708, 0
          %s3717 = smul.addr %s34, 4
          %s3718 = smul.addr %s3717, 8
          %s3719 = scalar_lea.hbm %s15, %s3718
          %s3720 = sshll.u32 %s3711, 4
          %s3721 = int_to_ptr.vmem [resolvable:$true] %s3720
          %s3722 = sshll.u32 %s3719, 4
          %s3723 = int_to_ptr.hbm [resolvable:$true] %s3722
          %3728 = dma.vmem_to_hbm [thread:$0]  %s3721, 512, %s3723, %s3708, 256, 256, 16
        $region104: #{tpu_custom_call.1} parent=79 // pred_fallthru
          _
      $region80: #{tpu_custom_call.1} parent=5 // pred_fallthru
        _
      %p3729 = scmp.le.s32.totalorder 2, %s29
      // Predicated region
      $region105: #{tpu_custom_call.1} parent=5 // pred_check
        %p3730 = pneg %p3729
      $region106: #{tpu_custom_call.1} parent=5 // pred_check_branch
        %3732 = sbr.rel (%p3730) target = $region108
      $region107: #{tpu_custom_call.1} parent=5 // pred_region
        %s3733 = ssub.s32 %s29, 2
        // Predicated region
        $region109: #{tpu_custom_call.1} parent=107 // pred_check
          %p3734 = pneg %p378
        $region110: #{tpu_custom_call.1} parent=107 // pred_check_branch
          %3736 = sbr.rel (%p3734) target = $region112
        $region111: #{tpu_custom_call.1} parent=107 // pred_region
          %s3737 = sand.u32 %s363, 1
          %s3738 = scalar_lea.sflag [#allocation4], %s3737
          %s3739 = sand.u32 %s363, 1
          %s3740 = smul.addr %s3739, 32
          %s3741 = scalar_lea.vmem [#allocation11], %s3740
          %3743 = dma.done %s3738, 512
        $region112: #{tpu_custom_call.1} parent=107 // pred_fallthru
          _
      $region108: #{tpu_custom_call.1} parent=5 // pred_fallthru
        _
    $region6: #{tpu_custom_call.1} parent=1 // loop_footer
      %s33 = sadd.s32 1, %s29
    $region7: #{tpu_custom_call.1} parent=1 // loop_footer_branch
      %28 = sbr.rel target = $region3
    $region8: #{tpu_custom_call.1} parent=1 // loop_exit
      _
    %3744 = vsyncpa [#allocation3], 1
    %s3745 = scalar_lea.sflag [#allocation3], 1
    %3746 = vsyncpa %s3745, 1
    %3747 = vsyncpa [#allocation6], 1
    %3748 = vsyncpa [#allocation9], 1
    %3749 = vsyncpa [#allocation4], 1
    %s3750 = scalar_lea.sflag [#allocation4], 1
    %3751 = vsyncpa %s3750, 1

</llo_original>
